<compile_context>
chip_gen: v6e
topology: v6e:2x2x1
jax: 0.10.0
libtpu: 0.0.40
codegen_flags: <defaults>
</compile_context>

<pallas_src>
import jax
import jax.numpy as jnp
from jax.experimental import pallas as pl
from jax.experimental.pallas import tpu as pltpu


# ----------------------------- Pallas kernel --------------------------------

def _resample_weights(scale, offset, size, mode, out_axis):
    """(size, size) separable resampling weight matrix, built in-kernel.

    Output-pixel index runs along `out_axis`, input-pixel index along the other
    axis.  Coordinates are centered normalized [-1, 1] with half-pixel centers;
    samples outside the source image get zero weight (zero padding).
    """
    o_idx = jax.lax.broadcasted_iota(jnp.int32, (size, size), out_axis).astype(jnp.float32)
    i_idx = jax.lax.broadcasted_iota(jnp.int32, (size, size), 1 - out_axis).astype(jnp.float32)
    dst = 2.0 * (o_idx + 0.5) / size - 1.0            # dst normalized coord
    src = scale * dst + offset                        # src normalized coord
    src_px = (src + 1.0) * (0.5 * size) - 0.5         # src pixel coord
    if mode == 'bilinear':
        return jnp.maximum(0.0, 1.0 - jnp.abs(src_px - i_idx))
    elif mode == 'nearest':
        nearest = jnp.floor(src_px + 0.5)             # robust (no exact-eq on rounded floats)
        return (jnp.abs(nearest - i_idx) < 0.5).astype(jnp.float32)
    else:
        raise ValueError(f'unsupported interp mode {mode}')


def _make_warp_kernel(TN, TC, H, W, mode, compute_dtype, fuse_channels):
    def kernel(coef_ref, img_ref, out_ref):
        # coef_ref: (N*4,) f32 in SMEM -- per-image [sy, ty, sx, tx], flattened
        # img_ref : (TN, TC, H, W) native dtype
        # out_ref : (TN, TC, H, W)
        nblk = pl.program_id(0)
        for t in range(TN):                                   # static unroll over images
            base = (nblk * TN + t) * 4
            sy = coef_ref[base]
            ty = coef_ref[base + 1]
            sx = coef_ref[base + 2]
            tx = coef_ref[base + 3]

            # In-kernel weight generation (VPU) -- zero HBM traffic for weights.
            wy = _resample_weights(sy, ty, H, mode, out_axis=0).astype(compute_dtype)   # (H_out, H_in)
            wxt = _resample_weights(sx, tx, W, mode, out_axis=1).astype(compute_dtype)  # (W_in, W_out)

            if fuse_channels:
                # Reshape on the NATIVE-dtype tile (free view when H % sublane_pack == 0),
                # THEN cast to the compute dtype (review: reshape-before-cast).
                x2 = img_ref[t].reshape(TC * H, W).astype(compute_dtype)
                colr = jnp.dot(x2, wxt, preferred_element_type=jnp.float32)             # (TC*H, W) f32
                for c in range(TC):                           # unrolled; weights stay in vregs
                    colr_c = colr[c * H:(c + 1) * H].astype(compute_dtype)              # tile-aligned slice
                    out_c = jnp.dot(wy, colr_c, preferred_element_type=jnp.float32)     # (H, W)
                    out_ref[t, c] = out_c.astype(out_ref.dtype)
            else:
                for c in range(TC):
                    x_c = img_ref[t, c].astype(compute_dtype)                           # (H, W)
                    colr = jnp.dot(x_c, wxt, preferred_element_type=jnp.float32
                                   ).astype(compute_dtype)
                    out_c = jnp.dot(wy, colr, preferred_element_type=jnp.float32)
                    out_ref[t, c] = out_c.astype(out_ref.dtype)

    return kernel


def _vmem_budget_bytes():
    """Generation-aware VMEM budget (half the physical capacity, <= 100 MiB)."""
    try:
        cap = int(pltpu.get_tpu_info().vmem_capacity_bytes)
    except Exception:
        cap = 64 << 20        # conservative fallback == v7x physical VMEM
    return int(min(cap // 2, 100 << 20))


def warp_images(img, coefs, mode):
    """img: (N, C, H, W) any float dtype; coefs: (N, 4) f32 = [sy, ty, sx, tx] per image."""
    N, C, H, W = img.shape
    # bf16 operands for bilinear (negligible precision loss, 2x MXU throughput / half the
    # VMEM bytes); keep f32 for 'nearest' so values (e.g. depth) pass through exactly.
    compute_dtype = jnp.bfloat16 if mode == 'bilinear' else jnp.float32
    in_bytes = jnp.dtype(img.dtype).itemsize
    cdt_bytes = jnp.dtype(compute_dtype).itemsize
    budget = _vmem_budget_bytes()

    per_chan = H * W * in_bytes
    per_img = C * per_chan

    def est(tn, tc):
        # double-buffered in+out blocks + in-kernel intermediates (compute copy, f32
        # column-resample result, weight generation temporaries) + slack.
        blk = tn * tc * per_chan
        interm = tc * H * W * (4 + cdt_bytes) + 2 * (H * H + W * W) * (4 + cdt_bytes)
        return 4 * blk + 2 * interm + (2 << 20)

    # Multi-image blocks (~1 MB target) to amortize grid overhead / hit the HBM roofline.
    tn = max(1, min(N, (1 << 20) // max(per_img, 1)))
    while tn > 1 and est(tn, C) > budget:
        tn -= 1
    while N % tn:
        tn -= 1
    tc = C
    if est(tn, tc) > budget:
        # Large images (v7x 64 MiB): split channels into the grid instead.
        tn = 1
        while tc > 1 and est(1, tc) > budget:
            tc -= 1
        while C % tc:
            tc -= 1

    vmem_limit = int(min(max(est(tn, tc), 16 << 20), budget))

    # Channel fusion of the column resample is a free view only when H is a multiple of
    # the native dtype's sublane pack (f32: 8, bf16: 16, int8/fp8: 32).
    sub_pack = {4: 8, 2: 16, 1: 32}.get(in_bytes, 8)
    fuse_channels = (tc > 1) and (H % sub_pack == 0)

    coefs_flat = coefs.reshape(-1).astype(jnp.float32)        # (N*4,) 1-D SMEM table

    kernel = _make_warp_kernel(tn, tc, H, W, mode, compute_dtype, fuse_channels)
    return pl.pallas_call(
        kernel,
        out_shape=jax.ShapeDtypeStruct((N, C, H, W), img.dtype),
        grid=(N // tn, C // tc),
        in_specs=[
            # small per-image scalar table, whole array resident in SMEM
            pl.BlockSpec(memory_space=pltpu.MemorySpace.SMEM),
            # TN images x TC channels per grid step
            pl.BlockSpec((tn, tc, H, W), lambda n, c: (n, c, 0, 0)),
        ],
        out_specs=pl.BlockSpec((tn, tc, H, W), lambda n, c: (n, c, 0, 0)),
        compiler_params=pltpu.CompilerParams(
            dimension_semantics=("parallel", "parallel"),     # shards across TCs on v7x
            vmem_limit_bytes=vmem_limit),
    )(coefs_flat, img)


# ------------------------------ forward pass ---------------------------------

def random_crop_flip(sample, rng_key, crop_scale_range=None, flip_probability=0.0,
                     keys=('image', 'depth'), interp_modes=('bilinear', 'nearest'),
                     share_crop_across_frames=False):
    assert len(keys) == len(interp_modes)
    camera = sample['camera']          # (B, M, 3, 3) intrinsics
    to_world = sample['to_world']      # (B, M, 4, 4)
    B, M = camera.shape[:2]
    k_flip, k_hw, k_center = jax.random.split(rng_key, 3)

    eye3 = jnp.tile(jnp.eye(3, dtype=jnp.float32)[None, None], (B, M, 1, 1))
    new_camera = camera

    if flip_probability > 0:
        flip = 2.0 * (jax.random.uniform(k_flip, (B,)) > flip_probability
                      ).astype(jnp.float32) - 1.0
        flip3 = eye3.at[:, :, 0, 0].set(flip[:, None])
        new_camera = jnp.einsum('bmij,bmjk->bmik', flip3, new_camera)
        new_camera = jnp.einsum('bmij,bmjk->bmik', new_camera, flip3)
        to_world = to_world.at[:, :, 0, :].multiply(flip[:, None, None])
        to_world = to_world.at[:, :, :, 0].multiply(flip[:, None, None])
    else:
        flip3 = eye3

    if crop_scale_range is not None:
        n = B if share_crop_across_frames else B * M
        lo, hi = crop_scale_range
        new_half_width = (hi - lo) * jax.random.uniform(k_hw, (n,)) + lo
        new_center = (1.0 - new_half_width[:, None]) * jax.random.uniform(k_center, (n, 2))
        crop = jnp.zeros((n, 3, 3), dtype=jnp.float32)
        crop = crop.at[:, 0, 0].set(1.0 / new_half_width)
        crop = crop.at[:, 1, 1].set(1.0 / new_half_width)
        crop = crop.at[:, 2, 2].set(1.0)
        crop = crop.at[:, :2, 2].set(new_center)
        if share_crop_across_frames:
            crop_matrix = jnp.broadcast_to(crop[:, None], (B, M, 3, 3))
        else:
            crop_matrix = crop.reshape(B, M, 3, 3)
        new_camera = jnp.einsum('bmij,bmjk->bmik', crop_matrix, new_camera)
    else:
        crop_matrix = eye3

    # Combined image-space transform: crop @ flip (axis-aligned: diag + translation).
    combined = jnp.einsum('bmij,bmjk->bmik', crop_matrix, flip3).reshape(B * M, 3, 3)

    # dst -> src mapping = analytic inverse of the axis-aligned transform.
    a00, a02 = combined[:, 0, 0], combined[:, 0, 2]
    a11, a12 = combined[:, 1, 1], combined[:, 1, 2]
    sx, tx = 1.0 / a00, -a02 / a00
    sy, ty = 1.0 / a11, -a12 / a11
    coefs = jnp.stack([sy, ty, sx, tx], axis=-1).astype(jnp.float32)   # (B*M, 4)

    out = dict(sample)
    for k, mode in zip(keys, interp_modes):
        img = sample[k]                               # (B, M, C, H, W), native dtype
        C, H, W = img.shape[2:]
        warped = warp_images(img.reshape(B * M, C, H, W), coefs, mode)
        out[k] = warped.reshape(B, M, C, H, W)

    out['to_world'] = to_world
    out['camera'] = new_camera
    return out


# ----------------------------------- main -------------------------------------

if __name__ == "__main__":
    key = jax.random.PRNGKey(0)
    k_w, k_i, k_d, k_t = jax.random.split(key, 4)

    B, M, H, W = 2, 4, 16, 16
    camera = jnp.tile(jnp.eye(3, dtype=jnp.float32)[None, None], (B, M, 1, 1))
    camera = camera.at[:, :, 0, 0].set(1.2).at[:, :, 1, 1].set(1.2)
    camera = camera.at[:, :, 0, 2].set(0.5).at[:, :, 1, 2].set(0.5)
    to_world = jax.random.normal(k_w, (B, M, 4, 4), dtype=jnp.float32)
    image = jax.random.normal(k_i, (B, M, 3, H, W), dtype=jnp.float32)
    depth = jax.random.uniform(k_d, (B, M, 1, H, W), dtype=jnp.float32)

    sample = {'camera': camera, 'to_world': to_world, 'image': image, 'depth': depth}

    # Sanity: no crop, no flip -> warp must reproduce the input
    # (bf16 rounding only on the bilinear path, exact on the nearest/f32 path).
    ident = random_crop_flip(sample, k_t, crop_scale_range=None, flip_probability=0.0)
    assert bool(jnp.allclose(ident['image'], image, rtol=2e-2, atol=2e-2))
    assert bool(jnp.allclose(ident['depth'], depth, rtol=1e-5, atol=1e-6))

    out = random_crop_flip(sample, k_t,
                           crop_scale_range=(0.5, 1.0),
                           flip_probability=0.5,
                           keys=('image', 'depth'),
                           interp_modes=('bilinear', 'nearest'),
                           share_crop_across_frames=False)

    jax.block_until_ready((out['image'], out['depth'], out['camera'], out['to_world']))
    assert out['image'].shape == (B, M, 3, H, W)
    assert out['depth'].shape == (B, M, 1, H, W)
    assert out['camera'].shape == (B, M, 3, 3)
    assert out['to_world'].shape == (B, M, 4, 4)
    assert bool(jnp.all(jnp.isfinite(out['image'])))
    assert bool(jnp.all(jnp.isfinite(out['depth'])))
    print("KERNEL_OK")
</pallas_src>

<mosaic_0001>
module attributes {stable_mosaic.version = 11 : i64} {
  func.func @kernel(%arg0: i32, %arg1: i32, %arg2: memref<32xf32, #tpu.memory_space<smem>>, %arg3: memref<8x3x16x16xf32, #tpu.memory_space<vmem>>, %arg4: memref<8x3x16x16xf32, #tpu.memory_space<vmem>>) attributes {dimension_semantics = [#tpu.dimension_semantics<parallel>, #tpu.dimension_semantics<parallel>], iteration_bounds = array<i64: 1, 1>, scalar_prefetch = 0 : i64, scratch_operands = 0 : i64, tpu.core_type = #tpu.core_type<tc>, window_params = [{transform_indices = @transform_0, window_bounds = array<i64: 32>}, {transform_indices = @transform_1, window_bounds = array<i64: 8, 3, 16, 16>}, {transform_indices = @transform_2, window_bounds = array<i64: 8, 3, 16, 16>}]} {
    %c8_i32 = arith.constant 8 : i32
    %0 = arith.muli %arg0, %c8_i32 : i32
    %c0_i32 = arith.constant 0 : i32
    %1 = arith.addi %0, %c0_i32 : i32
    %c4_i32 = arith.constant 4 : i32
    %2 = arith.muli %1, %c4_i32 : i32
    %3 = arith.index_cast %2 : i32 to index
    %4 = memref.load %arg2[%3] : memref<32xf32, #tpu.memory_space<smem>>
    %c1_i32 = arith.constant 1 : i32
    %5 = arith.addi %2, %c1_i32 : i32
    %6 = arith.index_cast %5 : i32 to index
    %7 = memref.load %arg2[%6] : memref<32xf32, #tpu.memory_space<smem>>
    %c2_i32 = arith.constant 2 : i32
    %8 = arith.addi %2, %c2_i32 : i32
    %9 = arith.index_cast %8 : i32 to index
    %10 = memref.load %arg2[%9] : memref<32xf32, #tpu.memory_space<smem>>
    %c3_i32 = arith.constant 3 : i32
    %11 = arith.addi %2, %c3_i32 : i32
    %12 = arith.index_cast %11 : i32 to index
    %13 = memref.load %arg2[%12] : memref<32xf32, #tpu.memory_space<smem>>
    %14 = tpu.iota {dimensions = array<i32: 0>} : vector<16x16xi32>
    %15 = arith.sitofp %14 : vector<16x16xi32> to vector<16x16xf32>
    %16 = tpu.iota {dimensions = array<i32: 1>} : vector<16x16xi32>
    %17 = arith.sitofp %16 : vector<16x16xi32> to vector<16x16xf32>
    %cst = arith.constant 5.000000e-01 : f32
    %18 = vector.broadcast %cst : f32 to vector<16x16xf32>
    %19 = arith.addf %15, %18 : vector<16x16xf32>
    %cst_0 = arith.constant 2.000000e+00 : f32
    %20 = vector.broadcast %cst_0 : f32 to vector<16x16xf32>
    %21 = arith.mulf %20, %19 : vector<16x16xf32>
    %cst_1 = arith.constant 1.600000e+01 : f32
    %22 = vector.broadcast %cst_1 : f32 to vector<16x16xf32>
    %23 = arith.divf %21, %22 : vector<16x16xf32>
    %cst_2 = arith.constant 1.000000e+00 : f32
    %24 = vector.broadcast %cst_2 : f32 to vector<16x16xf32>
    %25 = arith.subf %23, %24 : vector<16x16xf32>
    %26 = vector.broadcast %4 : f32 to vector<16x16xf32>
    %27 = arith.mulf %26, %25 : vector<16x16xf32>
    %28 = vector.broadcast %7 : f32 to vector<16x16xf32>
    %29 = arith.addf %27, %28 : vector<16x16xf32>
    %cst_3 = arith.constant 1.000000e+00 : f32
    %30 = vector.broadcast %cst_3 : f32 to vector<16x16xf32>
    %31 = arith.addf %29, %30 : vector<16x16xf32>
    %cst_4 = arith.constant 8.000000e+00 : f32
    %32 = vector.broadcast %cst_4 : f32 to vector<16x16xf32>
    %33 = arith.mulf %31, %32 : vector<16x16xf32>
    %cst_5 = arith.constant 5.000000e-01 : f32
    %34 = vector.broadcast %cst_5 : f32 to vector<16x16xf32>
    %35 = arith.subf %33, %34 : vector<16x16xf32>
    %36 = arith.subf %35, %17 : vector<16x16xf32>
    %37 = math.absf %36 : vector<16x16xf32>
    %cst_6 = arith.constant 1.000000e+00 : f32
    %38 = vector.broadcast %cst_6 : f32 to vector<16x16xf32>
    %39 = arith.subf %38, %37 : vector<16x16xf32>
    %cst_7 = arith.constant 0.000000e+00 : f32
    %40 = vector.broadcast %cst_7 : f32 to vector<16x16xf32>
    %41 = arith.maximumf %40, %39 : vector<16x16xf32>
    %42 = arith.truncf %41 : vector<16x16xf32> to vector<16x16xbf16>
    %43 = tpu.iota {dimensions = array<i32: 1>} : vector<16x16xi32>
    %44 = arith.sitofp %43 : vector<16x16xi32> to vector<16x16xf32>
    %45 = tpu.iota {dimensions = array<i32: 0>} : vector<16x16xi32>
    %46 = arith.sitofp %45 : vector<16x16xi32> to vector<16x16xf32>
    %cst_8 = arith.constant 5.000000e-01 : f32
    %47 = vector.broadcast %cst_8 : f32 to vector<16x16xf32>
    %48 = arith.addf %44, %47 : vector<16x16xf32>
    %cst_9 = arith.constant 2.000000e+00 : f32
    %49 = vector.broadcast %cst_9 : f32 to vector<16x16xf32>
    %50 = arith.mulf %49, %48 : vector<16x16xf32>
    %cst_10 = arith.constant 1.600000e+01 : f32
    %51 = vector.broadcast %cst_10 : f32 to vector<16x16xf32>
    %52 = arith.divf %50, %51 : vector<16x16xf32>
    %cst_11 = arith.constant 1.000000e+00 : f32
    %53 = vector.broadcast %cst_11 : f32 to vector<16x16xf32>
    %54 = arith.subf %52, %53 : vector<16x16xf32>
    %55 = vector.broadcast %10 : f32 to vector<16x16xf32>
    %56 = arith.mulf %55, %54 : vector<16x16xf32>
    %57 = vector.broadcast %13 : f32 to vector<16x16xf32>
    %58 = arith.addf %56, %57 : vector<16x16xf32>
    %cst_12 = arith.constant 1.000000e+00 : f32
    %59 = vector.broadcast %cst_12 : f32 to vector<16x16xf32>
    %60 = arith.addf %58, %59 : vector<16x16xf32>
    %cst_13 = arith.constant 8.000000e+00 : f32
    %61 = vector.broadcast %cst_13 : f32 to vector<16x16xf32>
    %62 = arith.mulf %60, %61 : vector<16x16xf32>
    %cst_14 = arith.constant 5.000000e-01 : f32
    %63 = vector.broadcast %cst_14 : f32 to vector<16x16xf32>
    %64 = arith.subf %62, %63 : vector<16x16xf32>
    %65 = arith.subf %64, %46 : vector<16x16xf32>
    %66 = math.absf %65 : vector<16x16xf32>
    %cst_15 = arith.constant 1.000000e+00 : f32
    %67 = vector.broadcast %cst_15 : f32 to vector<16x16xf32>
    %68 = arith.subf %67, %66 : vector<16x16xf32>
    %cst_16 = arith.constant 0.000000e+00 : f32
    %69 = vector.broadcast %cst_16 : f32 to vector<16x16xf32>
    %70 = arith.maximumf %69, %68 : vector<16x16xf32>
    %71 = arith.truncf %70 : vector<16x16xf32> to vector<16x16xbf16>
    %c0 = arith.constant 0 : index
    %c0_17 = arith.constant 0 : index
    %c0_18 = arith.constant 0 : index
    %c0_19 = arith.constant 0 : index
    %72 = vector.load %arg3[%c0, %c0_17, %c0_18, %c0_19] : memref<8x3x16x16xf32, #tpu.memory_space<vmem>>, vector<1x3x16x16xf32>
    %73 = vector.shape_cast %72 : vector<1x3x16x16xf32> to vector<3x16x16xf32>
    %74 = vector.shape_cast %73 : vector<3x16x16xf32> to vector<48x16xf32>
    %75 = arith.truncf %74 : vector<48x16xf32> to vector<48x16xbf16>
    %cst_20 = arith.constant dense<0.000000e+00> : vector<48x16xf32>
    %76 = tpu.matmul %75, %71, %cst_20 {dimension_numbers = #tpu.dot_dimension_numbers<[1], [0], [0], [1], [0, 0, 1, 1], [], []>} : vector<48x16xbf16>, vector<16x16xbf16>, vector<48x16xf32> -> vector<48x16xf32>
    %77 = vector.extract_strided_slice %76 {offsets = [0, 0], sizes = [16, 16], strides = [1, 1]} : vector<48x16xf32> to vector<16x16xf32>
    %78 = arith.truncf %77 : vector<16x16xf32> to vector<16x16xbf16>
    %cst_21 = arith.constant dense<0.000000e+00> : vector<16x16xf32>
    %79 = tpu.matmul %42, %78, %cst_21 {dimension_numbers = #tpu.dot_dimension_numbers<[1], [0], [0], [1], [0, 0, 1, 1], [], []>} : vector<16x16xbf16>, vector<16x16xbf16>, vector<16x16xf32> -> vector<16x16xf32>
    %c0_22 = arith.constant 0 : index
    %c0_23 = arith.constant 0 : index
    %c0_24 = arith.constant 0 : index
    %c0_25 = arith.constant 0 : index
    %80 = vector.load %arg4[%c0_22, %c0_23, %c0_24, %c0_25] : memref<8x3x16x16xf32, #tpu.memory_space<vmem>>, vector<1x1x16x16xf32>
    %81 = vector.shape_cast %80 : vector<1x1x16x16xf32> to vector<16x16xf32>
    %82 = vector.shape_cast %79 : vector<16x16xf32> to vector<1x1x16x16xf32>
    tpu.vector_store %arg4[%c0_22, %c0_23, %c0_24, %c0_25], %82 {strides = array<i32>} : memref<8x3x16x16xf32, #tpu.memory_space<vmem>>, vector<1x1x16x16xf32>,
    %83 = vector.extract_strided_slice %76 {offsets = [16, 0], sizes = [16, 16], strides = [1, 1]} : vector<48x16xf32> to vector<16x16xf32>
    %84 = arith.truncf %83 : vector<16x16xf32> to vector<16x16xbf16>
    %cst_26 = arith.constant dense<0.000000e+00> : vector<16x16xf32>
    %85 = tpu.matmul %42, %84, %cst_26 {dimension_numbers = #tpu.dot_dimension_numbers<[1], [0], [0], [1], [0, 0, 1, 1], [], []>} : vector<16x16xbf16>, vector<16x16xbf16>, vector<16x16xf32> -> vector<16x16xf32>
    %c0_27 = arith.constant 0 : index
    %c1 = arith.constant 1 : index
    %c0_28 = arith.constant 0 : index
    %c0_29 = arith.constant 0 : index
    %86 = vector.load %arg4[%c0_27, %c1, %c0_28, %c0_29] : memref<8x3x16x16xf32, #tpu.memory_space<vmem>>, vector<1x1x16x16xf32>
    %87 = vector.shape_cast %86 : vector<1x1x16x16xf32> to vector<16x16xf32>
    %88 = vector.shape_cast %85 : vector<16x16xf32> to vector<1x1x16x16xf32>
    tpu.vector_store %arg4[%c0_27, %c1, %c0_28, %c0_29], %88 {strides = array<i32>} : memref<8x3x16x16xf32, #tpu.memory_space<vmem>>, vector<1x1x16x16xf32>,
    %89 = vector.extract_strided_slice %76 {offsets = [32, 0], sizes = [16, 16], strides = [1, 1]} : vector<48x16xf32> to vector<16x16xf32>
    %90 = arith.truncf %89 : vector<16x16xf32> to vector<16x16xbf16>
    %cst_30 = arith.constant dense<0.000000e+00> : vector<16x16xf32>
    %91 = tpu.matmul %42, %90, %cst_30 {dimension_numbers = #tpu.dot_dimension_numbers<[1], [0], [0], [1], [0, 0, 1, 1], [], []>} : vector<16x16xbf16>, vector<16x16xbf16>, vector<16x16xf32> -> vector<16x16xf32>
    %c0_31 = arith.constant 0 : index
    %c2 = arith.constant 2 : index
    %c0_32 = arith.constant 0 : index
    %c0_33 = arith.constant 0 : index
    %92 = vector.load %arg4[%c0_31, %c2, %c0_32, %c0_33] : memref<8x3x16x16xf32, #tpu.memory_space<vmem>>, vector<1x1x16x16xf32>
    %93 = vector.shape_cast %92 : vector<1x1x16x16xf32> to vector<16x16xf32>
    %94 = vector.shape_cast %91 : vector<16x16xf32> to vector<1x1x16x16xf32>
    tpu.vector_store %arg4[%c0_31, %c2, %c0_32, %c0_33], %94 {strides = array<i32>} : memref<8x3x16x16xf32, #tpu.memory_space<vmem>>, vector<1x1x16x16xf32>,
    %c8_i32_34 = arith.constant 8 : i32
    %95 = arith.muli %arg0, %c8_i32_34 : i32
    %c1_i32_35 = arith.constant 1 : i32
    %96 = arith.addi %95, %c1_i32_35 : i32
    %c4_i32_36 = arith.constant 4 : i32
    %97 = arith.muli %96, %c4_i32_36 : i32
    %98 = arith.index_cast %97 : i32 to index
    %99 = memref.load %arg2[%98] : memref<32xf32, #tpu.memory_space<smem>>
    %c1_i32_37 = arith.constant 1 : i32
    %100 = arith.addi %97, %c1_i32_37 : i32
    %101 = arith.index_cast %100 : i32 to index
    %102 = memref.load %arg2[%101] : memref<32xf32, #tpu.memory_space<smem>>
    %c2_i32_38 = arith.constant 2 : i32
    %103 = arith.addi %97, %c2_i32_38 : i32
    %104 = arith.index_cast %103 : i32 to index
    %105 = memref.load %arg2[%104] : memref<32xf32, #tpu.memory_space<smem>>
    %c3_i32_39 = arith.constant 3 : i32
    %106 = arith.addi %97, %c3_i32_39 : i32
    %107 = arith.index_cast %106 : i32 to index
    %108 = memref.load %arg2[%107] : memref<32xf32, #tpu.memory_space<smem>>
    %109 = tpu.iota {dimensions = array<i32: 0>} : vector<16x16xi32>
    %110 = arith.sitofp %109 : vector<16x16xi32> to vector<16x16xf32>
    %111 = tpu.iota {dimensions = array<i32: 1>} : vector<16x16xi32>
    %112 = arith.sitofp %111 : vector<16x16xi32> to vector<16x16xf32>
    %cst_40 = arith.constant 5.000000e-01 : f32
    %113 = vector.broadcast %cst_40 : f32 to vector<16x16xf32>
    %114 = arith.addf %110, %113 : vector<16x16xf32>
    %cst_41 = arith.constant 2.000000e+00 : f32
    %115 = vector.broadcast %cst_41 : f32 to vector<16x16xf32>
    %116 = arith.mulf %115, %114 : vector<16x16xf32>
    %cst_42 = arith.constant 1.600000e+01 : f32
    %117 = vector.broadcast %cst_42 : f32 to vector<16x16xf32>
    %118 = arith.divf %116, %117 : vector<16x16xf32>
    %cst_43 = arith.constant 1.000000e+00 : f32
    %119 = vector.broadcast %cst_43 : f32 to vector<16x16xf32>
    %120 = arith.subf %118, %119 : vector<16x16xf32>
    %121 = vector.broadcast %99 : f32 to vector<16x16xf32>
    %122 = arith.mulf %121, %120 : vector<16x16xf32>
    %123 = vector.broadcast %102 : f32 to vector<16x16xf32>
    %124 = arith.addf %122, %123 : vector<16x16xf32>
    %cst_44 = arith.constant 1.000000e+00 : f32
    %125 = vector.broadcast %cst_44 : f32 to vector<16x16xf32>
    %126 = arith.addf %124, %125 : vector<16x16xf32>
    %cst_45 = arith.constant 8.000000e+00 : f32
    %127 = vector.broadcast %cst_45 : f32 to vector<16x16xf32>
    %128 = arith.mulf %126, %127 : vector<16x16xf32>
    %cst_46 = arith.constant 5.000000e-01 : f32
    %129 = vector.broadcast %cst_46 : f32 to vector<16x16xf32>
    %130 = arith.subf %128, %129 : vector<16x16xf32>
    %131 = arith.subf %130, %112 : vector<16x16xf32>
    %132 = math.absf %131 : vector<16x16xf32>
    %cst_47 = arith.constant 1.000000e+00 : f32
    %133 = vector.broadcast %cst_47 : f32 to vector<16x16xf32>
    %134 = arith.subf %133, %132 : vector<16x16xf32>
    %cst_48 = arith.constant 0.000000e+00 : f32
    %135 = vector.broadcast %cst_48 : f32 to vector<16x16xf32>
    %136 = arith.maximumf %135, %134 : vector<16x16xf32>
    %137 = arith.truncf %136 : vector<16x16xf32> to vector<16x16xbf16>
    %138 = tpu.iota {dimensions = array<i32: 1>} : vector<16x16xi32>
    %139 = arith.sitofp %138 : vector<16x16xi32> to vector<16x16xf32>
    %140 = tpu.iota {dimensions = array<i32: 0>} : vector<16x16xi32>
    %141 = arith.sitofp %140 : vector<16x16xi32> to vector<16x16xf32>
    %cst_49 = arith.constant 5.000000e-01 : f32
    %142 = vector.broadcast %cst_49 : f32 to vector<16x16xf32>
    %143 = arith.addf %139, %142 : vector<16x16xf32>
    %cst_50 = arith.constant 2.000000e+00 : f32
    %144 = vector.broadcast %cst_50 : f32 to vector<16x16xf32>
    %145 = arith.mulf %144, %143 : vector<16x16xf32>
    %cst_51 = arith.constant 1.600000e+01 : f32
    %146 = vector.broadcast %cst_51 : f32 to vector<16x16xf32>
    %147 = arith.divf %145, %146 : vector<16x16xf32>
    %cst_52 = arith.constant 1.000000e+00 : f32
    %148 = vector.broadcast %cst_52 : f32 to vector<16x16xf32>
    %149 = arith.subf %147, %148 : vector<16x16xf32>
    %150 = vector.broadcast %105 : f32 to vector<16x16xf32>
    %151 = arith.mulf %150, %149 : vector<16x16xf32>
    %152 = vector.broadcast %108 : f32 to vector<16x16xf32>
    %153 = arith.addf %151, %152 : vector<16x16xf32>
    %cst_53 = arith.constant 1.000000e+00 : f32
    %154 = vector.broadcast %cst_53 : f32 to vector<16x16xf32>
    %155 = arith.addf %153, %154 : vector<16x16xf32>
    %cst_54 = arith.constant 8.000000e+00 : f32
    %156 = vector.broadcast %cst_54 : f32 to vector<16x16xf32>
    %157 = arith.mulf %155, %156 : vector<16x16xf32>
    %cst_55 = arith.constant 5.000000e-01 : f32
    %158 = vector.broadcast %cst_55 : f32 to vector<16x16xf32>
    %159 = arith.subf %157, %158 : vector<16x16xf32>
    %160 = arith.subf %159, %141 : vector<16x16xf32>
    %161 = math.absf %160 : vector<16x16xf32>
    %cst_56 = arith.constant 1.000000e+00 : f32
    %162 = vector.broadcast %cst_56 : f32 to vector<16x16xf32>
    %163 = arith.subf %162, %161 : vector<16x16xf32>
    %cst_57 = arith.constant 0.000000e+00 : f32
    %164 = vector.broadcast %cst_57 : f32 to vector<16x16xf32>
    %165 = arith.maximumf %164, %163 : vector<16x16xf32>
    %166 = arith.truncf %165 : vector<16x16xf32> to vector<16x16xbf16>
    %c1_58 = arith.constant 1 : index
    %c0_59 = arith.constant 0 : index
    %c0_60 = arith.constant 0 : index
    %c0_61 = arith.constant 0 : index
    %167 = vector.load %arg3[%c1_58, %c0_59, %c0_60, %c0_61] : memref<8x3x16x16xf32, #tpu.memory_space<vmem>>, vector<1x3x16x16xf32>
    %168 = vector.shape_cast %167 : vector<1x3x16x16xf32> to vector<3x16x16xf32>
    %169 = vector.shape_cast %168 : vector<3x16x16xf32> to vector<48x16xf32>
    %170 = arith.truncf %169 : vector<48x16xf32> to vector<48x16xbf16>
    %cst_62 = arith.constant dense<0.000000e+00> : vector<48x16xf32>
    %171 = tpu.matmul %170, %166, %cst_62 {dimension_numbers = #tpu.dot_dimension_numbers<[1], [0], [0], [1], [0, 0, 1, 1], [], []>} : vector<48x16xbf16>, vector<16x16xbf16>, vector<48x16xf32> -> vector<48x16xf32>
    %172 = vector.extract_strided_slice %171 {offsets = [0, 0], sizes = [16, 16], strides = [1, 1]} : vector<48x16xf32> to vector<16x16xf32>
    %173 = arith.truncf %172 : vector<16x16xf32> to vector<16x16xbf16>
    %cst_63 = arith.constant dense<0.000000e+00> : vector<16x16xf32>
    %174 = tpu.matmul %137, %173, %cst_63 {dimension_numbers = #tpu.dot_dimension_numbers<[1], [0], [0], [1], [0, 0, 1, 1], [], []>} : vector<16x16xbf16>, vector<16x16xbf16>, vector<16x16xf32> -> vector<16x16xf32>
    %c1_64 = arith.constant 1 : index
    %c0_65 = arith.constant 0 : index
    %c0_66 = arith.constant 0 : index
    %c0_67 = arith.constant 0 : index
    %175 = vector.load %arg4[%c1_64, %c0_65, %c0_66, %c0_67] : memref<8x3x16x16xf32, #tpu.memory_space<vmem>>, vector<1x1x16x16xf32>
    %176 = vector.shape_cast %175 : vector<1x1x16x16xf32> to vector<16x16xf32>
    %177 = vector.shape_cast %174 : vector<16x16xf32> to vector<1x1x16x16xf32>
    tpu.vector_store %arg4[%c1_64, %c0_65, %c0_66, %c0_67], %177 {strides = array<i32>} : memref<8x3x16x16xf32, #tpu.memory_space<vmem>>, vector<1x1x16x16xf32>,
    %178 = vector.extract_strided_slice %171 {offsets = [16, 0], sizes = [16, 16], strides = [1, 1]} : vector<48x16xf32> to vector<16x16xf32>
    %179 = arith.truncf %178 : vector<16x16xf32> to vector<16x16xbf16>
    %cst_68 = arith.constant dense<0.000000e+00> : vector<16x16xf32>
    %180 = tpu.matmul %137, %179, %cst_68 {dimension_numbers = #tpu.dot_dimension_numbers<[1], [0], [0], [1], [0, 0, 1, 1], [], []>} : vector<16x16xbf16>, vector<16x16xbf16>, vector<16x16xf32> -> vector<16x16xf32>
    %c1_69 = arith.constant 1 : index
    %c1_70 = arith.constant 1 : index
    %c0_71 = arith.constant 0 : index
    %c0_72 = arith.constant 0 : index
    %181 = vector.load %arg4[%c1_69, %c1_70, %c0_71, %c0_72] : memref<8x3x16x16xf32, #tpu.memory_space<vmem>>, vector<1x1x16x16xf32>
    %182 = vector.shape_cast %181 : vector<1x1x16x16xf32> to vector<16x16xf32>
    %183 = vector.shape_cast %180 : vector<16x16xf32> to vector<1x1x16x16xf32>
    tpu.vector_store %arg4[%c1_69, %c1_70, %c0_71, %c0_72], %183 {strides = array<i32>} : memref<8x3x16x16xf32, #tpu.memory_space<vmem>>, vector<1x1x16x16xf32>,
    %184 = vector.extract_strided_slice %171 {offsets = [32, 0], sizes = [16, 16], strides = [1, 1]} : vector<48x16xf32> to vector<16x16xf32>
    %185 = arith.truncf %184 : vector<16x16xf32> to vector<16x16xbf16>
    %cst_73 = arith.constant dense<0.000000e+00> : vector<16x16xf32>
    %186 = tpu.matmul %137, %185, %cst_73 {dimension_numbers = #tpu.dot_dimension_numbers<[1], [0], [0], [1], [0, 0, 1, 1], [], []>} : vector<16x16xbf16>, vector<16x16xbf16>, vector<16x16xf32> -> vector<16x16xf32>
    %c1_74 = arith.constant 1 : index
    %c2_75 = arith.constant 2 : index
    %c0_76 = arith.constant 0 : index
    %c0_77 = arith.constant 0 : index
    %187 = vector.load %arg4[%c1_74, %c2_75, %c0_76, %c0_77] : memref<8x3x16x16xf32, #tpu.memory_space<vmem>>, vector<1x1x16x16xf32>
    %188 = vector.shape_cast %187 : vector<1x1x16x16xf32> to vector<16x16xf32>
    %189 = vector.shape_cast %186 : vector<16x16xf32> to vector<1x1x16x16xf32>
    tpu.vector_store %arg4[%c1_74, %c2_75, %c0_76, %c0_77], %189 {strides = array<i32>} : memref<8x3x16x16xf32, #tpu.memory_space<vmem>>, vector<1x1x16x16xf32>,
    %c8_i32_78 = arith.constant 8 : i32
    %190 = arith.muli %arg0, %c8_i32_78 : i32
    %c2_i32_79 = arith.constant 2 : i32
    %191 = arith.addi %190, %c2_i32_79 : i32
    %c4_i32_80 = arith.constant 4 : i32
    %192 = arith.muli %191, %c4_i32_80 : i32
    %193 = arith.index_cast %192 : i32 to index
    %194 = memref.load %arg2[%193] : memref<32xf32, #tpu.memory_space<smem>>
    %c1_i32_81 = arith.constant 1 : i32
    %195 = arith.addi %192, %c1_i32_81 : i32
    %196 = arith.index_cast %195 : i32 to index
    %197 = memref.load %arg2[%196] : memref<32xf32, #tpu.memory_space<smem>>
    %c2_i32_82 = arith.constant 2 : i32
    %198 = arith.addi %192, %c2_i32_82 : i32
    %199 = arith.index_cast %198 : i32 to index
    %200 = memref.load %arg2[%199] : memref<32xf32, #tpu.memory_space<smem>>
    %c3_i32_83 = arith.constant 3 : i32
    %201 = arith.addi %192, %c3_i32_83 : i32
    %202 = arith.index_cast %201 : i32 to index
    %203 = memref.load %arg2[%202] : memref<32xf32, #tpu.memory_space<smem>>
    %204 = tpu.iota {dimensions = array<i32: 0>} : vector<16x16xi32>
    %205 = arith.sitofp %204 : vector<16x16xi32> to vector<16x16xf32>
    %206 = tpu.iota {dimensions = array<i32: 1>} : vector<16x16xi32>
    %207 = arith.sitofp %206 : vector<16x16xi32> to vector<16x16xf32>
    %cst_84 = arith.constant 5.000000e-01 : f32
    %208 = vector.broadcast %cst_84 : f32 to vector<16x16xf32>
    %209 = arith.addf %205, %208 : vector<16x16xf32>
    %cst_85 = arith.constant 2.000000e+00 : f32
    %210 = vector.broadcast %cst_85 : f32 to vector<16x16xf32>
    %211 = arith.mulf %210, %209 : vector<16x16xf32>
    %cst_86 = arith.constant 1.600000e+01 : f32
    %212 = vector.broadcast %cst_86 : f32 to vector<16x16xf32>
    %213 = arith.divf %211, %212 : vector<16x16xf32>
    %cst_87 = arith.constant 1.000000e+00 : f32
    %214 = vector.broadcast %cst_87 : f32 to vector<16x16xf32>
    %215 = arith.subf %213, %214 : vector<16x16xf32>
    %216 = vector.broadcast %194 : f32 to vector<16x16xf32>
    %217 = arith.mulf %216, %215 : vector<16x16xf32>
    %218 = vector.broadcast %197 : f32 to vector<16x16xf32>
    %219 = arith.addf %217, %218 : vector<16x16xf32>
    %cst_88 = arith.constant 1.000000e+00 : f32
    %220 = vector.broadcast %cst_88 : f32 to vector<16x16xf32>
    %221 = arith.addf %219, %220 : vector<16x16xf32>
    %cst_89 = arith.constant 8.000000e+00 : f32
    %222 = vector.broadcast %cst_89 : f32 to vector<16x16xf32>
    %223 = arith.mulf %221, %222 : vector<16x16xf32>
    %cst_90 = arith.constant 5.000000e-01 : f32
    %224 = vector.broadcast %cst_90 : f32 to vector<16x16xf32>
    %225 = arith.subf %223, %224 : vector<16x16xf32>
    %226 = arith.subf %225, %207 : vector<16x16xf32>
    %227 = math.absf %226 : vector<16x16xf32>
    %cst_91 = arith.constant 1.000000e+00 : f32
    %228 = vector.broadcast %cst_91 : f32 to vector<16x16xf32>
    %229 = arith.subf %228, %227 : vector<16x16xf32>
    %cst_92 = arith.constant 0.000000e+00 : f32
    %230 = vector.broadcast %cst_92 : f32 to vector<16x16xf32>
    %231 = arith.maximumf %230, %229 : vector<16x16xf32>
    %232 = arith.truncf %231 : vector<16x16xf32> to vector<16x16xbf16>
    %233 = tpu.iota {dimensions = array<i32: 1>} : vector<16x16xi32>
    %234 = arith.sitofp %233 : vector<16x16xi32> to vector<16x16xf32>
    %235 = tpu.iota {dimensions = array<i32: 0>} : vector<16x16xi32>
    %236 = arith.sitofp %235 : vector<16x16xi32> to vector<16x16xf32>
    %cst_93 = arith.constant 5.000000e-01 : f32
    %237 = vector.broadcast %cst_93 : f32 to vector<16x16xf32>
    %238 = arith.addf %234, %237 : vector<16x16xf32>
    %cst_94 = arith.constant 2.000000e+00 : f32
    %239 = vector.broadcast %cst_94 : f32 to vector<16x16xf32>
    %240 = arith.mulf %239, %238 : vector<16x16xf32>
    %cst_95 = arith.constant 1.600000e+01 : f32
    %241 = vector.broadcast %cst_95 : f32 to vector<16x16xf32>
    %242 = arith.divf %240, %241 : vector<16x16xf32>
    %cst_96 = arith.constant 1.000000e+00 : f32
    %243 = vector.broadcast %cst_96 : f32 to vector<16x16xf32>
    %244 = arith.subf %242, %243 : vector<16x16xf32>
    %245 = vector.broadcast %200 : f32 to vector<16x16xf32>
    %246 = arith.mulf %245, %244 : vector<16x16xf32>
    %247 = vector.broadcast %203 : f32 to vector<16x16xf32>
    %248 = arith.addf %246, %247 : vector<16x16xf32>
    %cst_97 = arith.constant 1.000000e+00 : f32
    %249 = vector.broadcast %cst_97 : f32 to vector<16x16xf32>
    %250 = arith.addf %248, %249 : vector<16x16xf32>
    %cst_98 = arith.constant 8.000000e+00 : f32
    %251 = vector.broadcast %cst_98 : f32 to vector<16x16xf32>
    %252 = arith.mulf %250, %251 : vector<16x16xf32>
    %cst_99 = arith.constant 5.000000e-01 : f32
    %253 = vector.broadcast %cst_99 : f32 to vector<16x16xf32>
    %254 = arith.subf %252, %253 : vector<16x16xf32>
    %255 = arith.subf %254, %236 : vector<16x16xf32>
    %256 = math.absf %255 : vector<16x16xf32>
    %cst_100 = arith.constant 1.000000e+00 : f32
    %257 = vector.broadcast %cst_100 : f32 to vector<16x16xf32>
    %258 = arith.subf %257, %256 : vector<16x16xf32>
    %cst_101 = arith.constant 0.000000e+00 : f32
    %259 = vector.broadcast %cst_101 : f32 to vector<16x16xf32>
    %260 = arith.maximumf %259, %258 : vector<16x16xf32>
    %261 = arith.truncf %260 : vector<16x16xf32> to vector<16x16xbf16>
    %c2_102 = arith.constant 2 : index
    %c0_103 = arith.constant 0 : index
    %c0_104 = arith.constant 0 : index
    %c0_105 = arith.constant 0 : index
    %262 = vector.load %arg3[%c2_102, %c0_103, %c0_104, %c0_105] : memref<8x3x16x16xf32, #tpu.memory_space<vmem>>, vector<1x3x16x16xf32>
    %263 = vector.shape_cast %262 : vector<1x3x16x16xf32> to vector<3x16x16xf32>
    %264 = vector.shape_cast %263 : vector<3x16x16xf32> to vector<48x16xf32>
    %265 = arith.truncf %264 : vector<48x16xf32> to vector<48x16xbf16>
    %cst_106 = arith.constant dense<0.000000e+00> : vector<48x16xf32>
    %266 = tpu.matmul %265, %261, %cst_106 {dimension_numbers = #tpu.dot_dimension_numbers<[1], [0], [0], [1], [0, 0, 1, 1], [], []>} : vector<48x16xbf16>, vector<16x16xbf16>, vector<48x16xf32> -> vector<48x16xf32>
    %267 = vector.extract_strided_slice %266 {offsets = [0, 0], sizes = [16, 16], strides = [1, 1]} : vector<48x16xf32> to vector<16x16xf32>
    %268 = arith.truncf %267 : vector<16x16xf32> to vector<16x16xbf16>
    %cst_107 = arith.constant dense<0.000000e+00> : vector<16x16xf32>
    %269 = tpu.matmul %232, %268, %cst_107 {dimension_numbers = #tpu.dot_dimension_numbers<[1], [0], [0], [1], [0, 0, 1, 1], [], []>} : vector<16x16xbf16>, vector<16x16xbf16>, vector<16x16xf32> -> vector<16x16xf32>
    %c2_108 = arith.constant 2 : index
    %c0_109 = arith.constant 0 : index
    %c0_110 = arith.constant 0 : index
    %c0_111 = arith.constant 0 : index
    %270 = vector.load %arg4[%c2_108, %c0_109, %c0_110, %c0_111] : memref<8x3x16x16xf32, #tpu.memory_space<vmem>>, vector<1x1x16x16xf32>
    %271 = vector.shape_cast %270 : vector<1x1x16x16xf32> to vector<16x16xf32>
    %272 = vector.shape_cast %269 : vector<16x16xf32> to vector<1x1x16x16xf32>
    tpu.vector_store %arg4[%c2_108, %c0_109, %c0_110, %c0_111], %272 {strides = array<i32>} : memref<8x3x16x16xf32, #tpu.memory_space<vmem>>, vector<1x1x16x16xf32>,
    %273 = vector.extract_strided_slice %266 {offsets = [16, 0], sizes = [16, 16], strides = [1, 1]} : vector<48x16xf32> to vector<16x16xf32>
    %274 = arith.truncf %273 : vector<16x16xf32> to vector<16x16xbf16>
    %cst_112 = arith.constant dense<0.000000e+00> : vector<16x16xf32>
    %275 = tpu.matmul %232, %274, %cst_112 {dimension_numbers = #tpu.dot_dimension_numbers<[1], [0], [0], [1], [0, 0, 1, 1], [], []>} : vector<16x16xbf16>, vector<16x16xbf16>, vector<16x16xf32> -> vector<16x16xf32>
    %c2_113 = arith.constant 2 : index
    %c1_114 = arith.constant 1 : index
    %c0_115 = arith.constant 0 : index
    %c0_116 = arith.constant 0 : index
    %276 = vector.load %arg4[%c2_113, %c1_114, %c0_115, %c0_116] : memref<8x3x16x16xf32, #tpu.memory_space<vmem>>, vector<1x1x16x16xf32>
    %277 = vector.shape_cast %276 : vector<1x1x16x16xf32> to vector<16x16xf32>
    %278 = vector.shape_cast %275 : vector<16x16xf32> to vector<1x1x16x16xf32>
    tpu.vector_store %arg4[%c2_113, %c1_114, %c0_115, %c0_116], %278 {strides = array<i32>} : memref<8x3x16x16xf32, #tpu.memory_space<vmem>>, vector<1x1x16x16xf32>,
    %279 = vector.extract_strided_slice %266 {offsets = [32, 0], sizes = [16, 16], strides = [1, 1]} : vector<48x16xf32> to vector<16x16xf32>
    %280 = arith.truncf %279 : vector<16x16xf32> to vector<16x16xbf16>
    %cst_117 = arith.constant dense<0.000000e+00> : vector<16x16xf32>
    %281 = tpu.matmul %232, %280, %cst_117 {dimension_numbers = #tpu.dot_dimension_numbers<[1], [0], [0], [1], [0, 0, 1, 1], [], []>} : vector<16x16xbf16>, vector<16x16xbf16>, vector<16x16xf32> -> vector<16x16xf32>
    %c2_118 = arith.constant 2 : index
    %c2_119 = arith.constant 2 : index
    %c0_120 = arith.constant 0 : index
    %c0_121 = arith.constant 0 : index
    %282 = vector.load %arg4[%c2_118, %c2_119, %c0_120, %c0_121] : memref<8x3x16x16xf32, #tpu.memory_space<vmem>>, vector<1x1x16x16xf32>
    %283 = vector.shape_cast %282 : vector<1x1x16x16xf32> to vector<16x16xf32>
    %284 = vector.shape_cast %281 : vector<16x16xf32> to vector<1x1x16x16xf32>
    tpu.vector_store %arg4[%c2_118, %c2_119, %c0_120, %c0_121], %284 {strides = array<i32>} : memref<8x3x16x16xf32, #tpu.memory_space<vmem>>, vector<1x1x16x16xf32>,
    %c8_i32_122 = arith.constant 8 : i32
    %285 = arith.muli %arg0, %c8_i32_122 : i32
    %c3_i32_123 = arith.constant 3 : i32
    %286 = arith.addi %285, %c3_i32_123 : i32
    %c4_i32_124 = arith.constant 4 : i32
    %287 = arith.muli %286, %c4_i32_124 : i32
    %288 = arith.index_cast %287 : i32 to index
    %289 = memref.load %arg2[%288] : memref<32xf32, #tpu.memory_space<smem>>
    %c1_i32_125 = arith.constant 1 : i32
    %290 = arith.addi %287, %c1_i32_125 : i32
    %291 = arith.index_cast %290 : i32 to index
    %292 = memref.load %arg2[%291] : memref<32xf32, #tpu.memory_space<smem>>
    %c2_i32_126 = arith.constant 2 : i32
    %293 = arith.addi %287, %c2_i32_126 : i32
    %294 = arith.index_cast %293 : i32 to index
    %295 = memref.load %arg2[%294] : memref<32xf32, #tpu.memory_space<smem>>
    %c3_i32_127 = arith.constant 3 : i32
    %296 = arith.addi %287, %c3_i32_127 : i32
    %297 = arith.index_cast %296 : i32 to index
    %298 = memref.load %arg2[%297] : memref<32xf32, #tpu.memory_space<smem>>
    %299 = tpu.iota {dimensions = array<i32: 0>} : vector<16x16xi32>
    %300 = arith.sitofp %299 : vector<16x16xi32> to vector<16x16xf32>
    %301 = tpu.iota {dimensions = array<i32: 1>} : vector<16x16xi32>
    %302 = arith.sitofp %301 : vector<16x16xi32> to vector<16x16xf32>
    %cst_128 = arith.constant 5.000000e-01 : f32
    %303 = vector.broadcast %cst_128 : f32 to vector<16x16xf32>
    %304 = arith.addf %300, %303 : vector<16x16xf32>
    %cst_129 = arith.constant 2.000000e+00 : f32
    %305 = vector.broadcast %cst_129 : f32 to vector<16x16xf32>
    %306 = arith.mulf %305, %304 : vector<16x16xf32>
    %cst_130 = arith.constant 1.600000e+01 : f32
    %307 = vector.broadcast %cst_130 : f32 to vector<16x16xf32>
    %308 = arith.divf %306, %307 : vector<16x16xf32>
    %cst_131 = arith.constant 1.000000e+00 : f32
    %309 = vector.broadcast %cst_131 : f32 to vector<16x16xf32>
    %310 = arith.subf %308, %309 : vector<16x16xf32>
    %311 = vector.broadcast %289 : f32 to vector<16x16xf32>
    %312 = arith.mulf %311, %310 : vector<16x16xf32>
    %313 = vector.broadcast %292 : f32 to vector<16x16xf32>
    %314 = arith.addf %312, %313 : vector<16x16xf32>
    %cst_132 = arith.constant 1.000000e+00 : f32
    %315 = vector.broadcast %cst_132 : f32 to vector<16x16xf32>
    %316 = arith.addf %314, %315 : vector<16x16xf32>
    %cst_133 = arith.constant 8.000000e+00 : f32
    %317 = vector.broadcast %cst_133 : f32 to vector<16x16xf32>
    %318 = arith.mulf %316, %317 : vector<16x16xf32>
    %cst_134 = arith.constant 5.000000e-01 : f32
    %319 = vector.broadcast %cst_134 : f32 to vector<16x16xf32>
    %320 = arith.subf %318, %319 : vector<16x16xf32>
    %321 = arith.subf %320, %302 : vector<16x16xf32>
    %322 = math.absf %321 : vector<16x16xf32>
    %cst_135 = arith.constant 1.000000e+00 : f32
    %323 = vector.broadcast %cst_135 : f32 to vector<16x16xf32>
    %324 = arith.subf %323, %322 : vector<16x16xf32>
    %cst_136 = arith.constant 0.000000e+00 : f32
    %325 = vector.broadcast %cst_136 : f32 to vector<16x16xf32>
    %326 = arith.maximumf %325, %324 : vector<16x16xf32>
    %327 = arith.truncf %326 : vector<16x16xf32> to vector<16x16xbf16>
    %328 = tpu.iota {dimensions = array<i32: 1>} : vector<16x16xi32>
    %329 = arith.sitofp %328 : vector<16x16xi32> to vector<16x16xf32>
    %330 = tpu.iota {dimensions = array<i32: 0>} : vector<16x16xi32>
    %331 = arith.sitofp %330 : vector<16x16xi32> to vector<16x16xf32>
    %cst_137 = arith.constant 5.000000e-01 : f32
    %332 = vector.broadcast %cst_137 : f32 to vector<16x16xf32>
    %333 = arith.addf %329, %332 : vector<16x16xf32>
    %cst_138 = arith.constant 2.000000e+00 : f32
    %334 = vector.broadcast %cst_138 : f32 to vector<16x16xf32>
    %335 = arith.mulf %334, %333 : vector<16x16xf32>
    %cst_139 = arith.constant 1.600000e+01 : f32
    %336 = vector.broadcast %cst_139 : f32 to vector<16x16xf32>
    %337 = arith.divf %335, %336 : vector<16x16xf32>
    %cst_140 = arith.constant 1.000000e+00 : f32
    %338 = vector.broadcast %cst_140 : f32 to vector<16x16xf32>
    %339 = arith.subf %337, %338 : vector<16x16xf32>
    %340 = vector.broadcast %295 : f32 to vector<16x16xf32>
    %341 = arith.mulf %340, %339 : vector<16x16xf32>
    %342 = vector.broadcast %298 : f32 to vector<16x16xf32>
    %343 = arith.addf %341, %342 : vector<16x16xf32>
    %cst_141 = arith.constant 1.000000e+00 : f32
    %344 = vector.broadcast %cst_141 : f32 to vector<16x16xf32>
    %345 = arith.addf %343, %344 : vector<16x16xf32>
    %cst_142 = arith.constant 8.000000e+00 : f32
    %346 = vector.broadcast %cst_142 : f32 to vector<16x16xf32>
    %347 = arith.mulf %345, %346 : vector<16x16xf32>
    %cst_143 = arith.constant 5.000000e-01 : f32
    %348 = vector.broadcast %cst_143 : f32 to vector<16x16xf32>
    %349 = arith.subf %347, %348 : vector<16x16xf32>
    %350 = arith.subf %349, %331 : vector<16x16xf32>
    %351 = math.absf %350 : vector<16x16xf32>
    %cst_144 = arith.constant 1.000000e+00 : f32
    %352 = vector.broadcast %cst_144 : f32 to vector<16x16xf32>
    %353 = arith.subf %352, %351 : vector<16x16xf32>
    %cst_145 = arith.constant 0.000000e+00 : f32
    %354 = vector.broadcast %cst_145 : f32 to vector<16x16xf32>
    %355 = arith.maximumf %354, %353 : vector<16x16xf32>
    %356 = arith.truncf %355 : vector<16x16xf32> to vector<16x16xbf16>
    %c3 = arith.constant 3 : index
    %c0_146 = arith.constant 0 : index
    %c0_147 = arith.constant 0 : index
    %c0_148 = arith.constant 0 : index
    %357 = vector.load %arg3[%c3, %c0_146, %c0_147, %c0_148] : memref<8x3x16x16xf32, #tpu.memory_space<vmem>>, vector<1x3x16x16xf32>
    %358 = vector.shape_cast %357 : vector<1x3x16x16xf32> to vector<3x16x16xf32>
    %359 = vector.shape_cast %358 : vector<3x16x16xf32> to vector<48x16xf32>
    %360 = arith.truncf %359 : vector<48x16xf32> to vector<48x16xbf16>
    %cst_149 = arith.constant dense<0.000000e+00> : vector<48x16xf32>
    %361 = tpu.matmul %360, %356, %cst_149 {dimension_numbers = #tpu.dot_dimension_numbers<[1], [0], [0], [1], [0, 0, 1, 1], [], []>} : vector<48x16xbf16>, vector<16x16xbf16>, vector<48x16xf32> -> vector<48x16xf32>
    %362 = vector.extract_strided_slice %361 {offsets = [0, 0], sizes = [16, 16], strides = [1, 1]} : vector<48x16xf32> to vector<16x16xf32>
    %363 = arith.truncf %362 : vector<16x16xf32> to vector<16x16xbf16>
    %cst_150 = arith.constant dense<0.000000e+00> : vector<16x16xf32>
    %364 = tpu.matmul %327, %363, %cst_150 {dimension_numbers = #tpu.dot_dimension_numbers<[1], [0], [0], [1], [0, 0, 1, 1], [], []>} : vector<16x16xbf16>, vector<16x16xbf16>, vector<16x16xf32> -> vector<16x16xf32>
    %c3_151 = arith.constant 3 : index
    %c0_152 = arith.constant 0 : index
    %c0_153 = arith.constant 0 : index
    %c0_154 = arith.constant 0 : index
    %365 = vector.load %arg4[%c3_151, %c0_152, %c0_153, %c0_154] : memref<8x3x16x16xf32, #tpu.memory_space<vmem>>, vector<1x1x16x16xf32>
    %366 = vector.shape_cast %365 : vector<1x1x16x16xf32> to vector<16x16xf32>
    %367 = vector.shape_cast %364 : vector<16x16xf32> to vector<1x1x16x16xf32>
    tpu.vector_store %arg4[%c3_151, %c0_152, %c0_153, %c0_154], %367 {strides = array<i32>} : memref<8x3x16x16xf32, #tpu.memory_space<vmem>>, vector<1x1x16x16xf32>,
    %368 = vector.extract_strided_slice %361 {offsets = [16, 0], sizes = [16, 16], strides = [1, 1]} : vector<48x16xf32> to vector<16x16xf32>
    %369 = arith.truncf %368 : vector<16x16xf32> to vector<16x16xbf16>
    %cst_155 = arith.constant dense<0.000000e+00> : vector<16x16xf32>
    %370 = tpu.matmul %327, %369, %cst_155 {dimension_numbers = #tpu.dot_dimension_numbers<[1], [0], [0], [1], [0, 0, 1, 1], [], []>} : vector<16x16xbf16>, vector<16x16xbf16>, vector<16x16xf32> -> vector<16x16xf32>
    %c3_156 = arith.constant 3 : index
    %c1_157 = arith.constant 1 : index
    %c0_158 = arith.constant 0 : index
    %c0_159 = arith.constant 0 : index
    %371 = vector.load %arg4[%c3_156, %c1_157, %c0_158, %c0_159] : memref<8x3x16x16xf32, #tpu.memory_space<vmem>>, vector<1x1x16x16xf32>
    %372 = vector.shape_cast %371 : vector<1x1x16x16xf32> to vector<16x16xf32>
    %373 = vector.shape_cast %370 : vector<16x16xf32> to vector<1x1x16x16xf32>
    tpu.vector_store %arg4[%c3_156, %c1_157, %c0_158, %c0_159], %373 {strides = array<i32>} : memref<8x3x16x16xf32, #tpu.memory_space<vmem>>, vector<1x1x16x16xf32>,
    %374 = vector.extract_strided_slice %361 {offsets = [32, 0], sizes = [16, 16], strides = [1, 1]} : vector<48x16xf32> to vector<16x16xf32>
    %375 = arith.truncf %374 : vector<16x16xf32> to vector<16x16xbf16>
    %cst_160 = arith.constant dense<0.000000e+00> : vector<16x16xf32>
    %376 = tpu.matmul %327, %375, %cst_160 {dimension_numbers = #tpu.dot_dimension_numbers<[1], [0], [0], [1], [0, 0, 1, 1], [], []>} : vector<16x16xbf16>, vector<16x16xbf16>, vector<16x16xf32> -> vector<16x16xf32>
    %c3_161 = arith.constant 3 : index
    %c2_162 = arith.constant 2 : index
    %c0_163 = arith.constant 0 : index
    %c0_164 = arith.constant 0 : index
    %377 = vector.load %arg4[%c3_161, %c2_162, %c0_163, %c0_164] : memref<8x3x16x16xf32, #tpu.memory_space<vmem>>, vector<1x1x16x16xf32>
    %378 = vector.shape_cast %377 : vector<1x1x16x16xf32> to vector<16x16xf32>
    %379 = vector.shape_cast %376 : vector<16x16xf32> to vector<1x1x16x16xf32>
    tpu.vector_store %arg4[%c3_161, %c2_162, %c0_163, %c0_164], %379 {strides = array<i32>} : memref<8x3x16x16xf32, #tpu.memory_space<vmem>>, vector<1x1x16x16xf32>,
    %c8_i32_165 = arith.constant 8 : i32
    %380 = arith.muli %arg0, %c8_i32_165 : i32
    %c4_i32_166 = arith.constant 4 : i32
    %381 = arith.addi %380, %c4_i32_166 : i32
    %c4_i32_167 = arith.constant 4 : i32
    %382 = arith.muli %381, %c4_i32_167 : i32
    %383 = arith.index_cast %382 : i32 to index
    %384 = memref.load %arg2[%383] : memref<32xf32, #tpu.memory_space<smem>>
    %c1_i32_168 = arith.constant 1 : i32
    %385 = arith.addi %382, %c1_i32_168 : i32
    %386 = arith.index_cast %385 : i32 to index
    %387 = memref.load %arg2[%386] : memref<32xf32, #tpu.memory_space<smem>>
    %c2_i32_169 = arith.constant 2 : i32
    %388 = arith.addi %382, %c2_i32_169 : i32
    %389 = arith.index_cast %388 : i32 to index
    %390 = memref.load %arg2[%389] : memref<32xf32, #tpu.memory_space<smem>>
    %c3_i32_170 = arith.constant 3 : i32
    %391 = arith.addi %382, %c3_i32_170 : i32
    %392 = arith.index_cast %391 : i32 to index
    %393 = memref.load %arg2[%392] : memref<32xf32, #tpu.memory_space<smem>>
    %394 = tpu.iota {dimensions = array<i32: 0>} : vector<16x16xi32>
    %395 = arith.sitofp %394 : vector<16x16xi32> to vector<16x16xf32>
    %396 = tpu.iota {dimensions = array<i32: 1>} : vector<16x16xi32>
    %397 = arith.sitofp %396 : vector<16x16xi32> to vector<16x16xf32>
    %cst_171 = arith.constant 5.000000e-01 : f32
    %398 = vector.broadcast %cst_171 : f32 to vector<16x16xf32>
    %399 = arith.addf %395, %398 : vector<16x16xf32>
    %cst_172 = arith.constant 2.000000e+00 : f32
    %400 = vector.broadcast %cst_172 : f32 to vector<16x16xf32>
    %401 = arith.mulf %400, %399 : vector<16x16xf32>
    %cst_173 = arith.constant 1.600000e+01 : f32
    %402 = vector.broadcast %cst_173 : f32 to vector<16x16xf32>
    %403 = arith.divf %401, %402 : vector<16x16xf32>
    %cst_174 = arith.constant 1.000000e+00 : f32
    %404 = vector.broadcast %cst_174 : f32 to vector<16x16xf32>
    %405 = arith.subf %403, %404 : vector<16x16xf32>
    %406 = vector.broadcast %384 : f32 to vector<16x16xf32>
    %407 = arith.mulf %406, %405 : vector<16x16xf32>
    %408 = vector.broadcast %387 : f32 to vector<16x16xf32>
    %409 = arith.addf %407, %408 : vector<16x16xf32>
    %cst_175 = arith.constant 1.000000e+00 : f32
    %410 = vector.broadcast %cst_175 : f32 to vector<16x16xf32>
    %411 = arith.addf %409, %410 : vector<16x16xf32>
    %cst_176 = arith.constant 8.000000e+00 : f32
    %412 = vector.broadcast %cst_176 : f32 to vector<16x16xf32>
    %413 = arith.mulf %411, %412 : vector<16x16xf32>
    %cst_177 = arith.constant 5.000000e-01 : f32
    %414 = vector.broadcast %cst_177 : f32 to vector<16x16xf32>
    %415 = arith.subf %413, %414 : vector<16x16xf32>
    %416 = arith.subf %415, %397 : vector<16x16xf32>
    %417 = math.absf %416 : vector<16x16xf32>
    %cst_178 = arith.constant 1.000000e+00 : f32
    %418 = vector.broadcast %cst_178 : f32 to vector<16x16xf32>
    %419 = arith.subf %418, %417 : vector<16x16xf32>
    %cst_179 = arith.constant 0.000000e+00 : f32
    %420 = vector.broadcast %cst_179 : f32 to vector<16x16xf32>
    %421 = arith.maximumf %420, %419 : vector<16x16xf32>
    %422 = arith.truncf %421 : vector<16x16xf32> to vector<16x16xbf16>
    %423 = tpu.iota {dimensions = array<i32: 1>} : vector<16x16xi32>
    %424 = arith.sitofp %423 : vector<16x16xi32> to vector<16x16xf32>
    %425 = tpu.iota {dimensions = array<i32: 0>} : vector<16x16xi32>
    %426 = arith.sitofp %425 : vector<16x16xi32> to vector<16x16xf32>
    %cst_180 = arith.constant 5.000000e-01 : f32
    %427 = vector.broadcast %cst_180 : f32 to vector<16x16xf32>
    %428 = arith.addf %424, %427 : vector<16x16xf32>
    %cst_181 = arith.constant 2.000000e+00 : f32
    %429 = vector.broadcast %cst_181 : f32 to vector<16x16xf32>
    %430 = arith.mulf %429, %428 : vector<16x16xf32>
    %cst_182 = arith.constant 1.600000e+01 : f32
    %431 = vector.broadcast %cst_182 : f32 to vector<16x16xf32>
    %432 = arith.divf %430, %431 : vector<16x16xf32>
    %cst_183 = arith.constant 1.000000e+00 : f32
    %433 = vector.broadcast %cst_183 : f32 to vector<16x16xf32>
    %434 = arith.subf %432, %433 : vector<16x16xf32>
    %435 = vector.broadcast %390 : f32 to vector<16x16xf32>
    %436 = arith.mulf %435, %434 : vector<16x16xf32>
    %437 = vector.broadcast %393 : f32 to vector<16x16xf32>
    %438 = arith.addf %436, %437 : vector<16x16xf32>
    %cst_184 = arith.constant 1.000000e+00 : f32
    %439 = vector.broadcast %cst_184 : f32 to vector<16x16xf32>
    %440 = arith.addf %438, %439 : vector<16x16xf32>
    %cst_185 = arith.constant 8.000000e+00 : f32
    %441 = vector.broadcast %cst_185 : f32 to vector<16x16xf32>
    %442 = arith.mulf %440, %441 : vector<16x16xf32>
    %cst_186 = arith.constant 5.000000e-01 : f32
    %443 = vector.broadcast %cst_186 : f32 to vector<16x16xf32>
    %444 = arith.subf %442, %443 : vector<16x16xf32>
    %445 = arith.subf %444, %426 : vector<16x16xf32>
    %446 = math.absf %445 : vector<16x16xf32>
    %cst_187 = arith.constant 1.000000e+00 : f32
    %447 = vector.broadcast %cst_187 : f32 to vector<16x16xf32>
    %448 = arith.subf %447, %446 : vector<16x16xf32>
    %cst_188 = arith.constant 0.000000e+00 : f32
    %449 = vector.broadcast %cst_188 : f32 to vector<16x16xf32>
    %450 = arith.maximumf %449, %448 : vector<16x16xf32>
    %451 = arith.truncf %450 : vector<16x16xf32> to vector<16x16xbf16>
    %c4 = arith.constant 4 : index
    %c0_189 = arith.constant 0 : index
    %c0_190 = arith.constant 0 : index
    %c0_191 = arith.constant 0 : index
    %452 = vector.load %arg3[%c4, %c0_189, %c0_190, %c0_191] : memref<8x3x16x16xf32, #tpu.memory_space<vmem>>, vector<1x3x16x16xf32>
    %453 = vector.shape_cast %452 : vector<1x3x16x16xf32> to vector<3x16x16xf32>
    %454 = vector.shape_cast %453 : vector<3x16x16xf32> to vector<48x16xf32>
    %455 = arith.truncf %454 : vector<48x16xf32> to vector<48x16xbf16>
    %cst_192 = arith.constant dense<0.000000e+00> : vector<48x16xf32>
    %456 = tpu.matmul %455, %451, %cst_192 {dimension_numbers = #tpu.dot_dimension_numbers<[1], [0], [0], [1], [0, 0, 1, 1], [], []>} : vector<48x16xbf16>, vector<16x16xbf16>, vector<48x16xf32> -> vector<48x16xf32>
    %457 = vector.extract_strided_slice %456 {offsets = [0, 0], sizes = [16, 16], strides = [1, 1]} : vector<48x16xf32> to vector<16x16xf32>
    %458 = arith.truncf %457 : vector<16x16xf32> to vector<16x16xbf16>
    %cst_193 = arith.constant dense<0.000000e+00> : vector<16x16xf32>
    %459 = tpu.matmul %422, %458, %cst_193 {dimension_numbers = #tpu.dot_dimension_numbers<[1], [0], [0], [1], [0, 0, 1, 1], [], []>} : vector<16x16xbf16>, vector<16x16xbf16>, vector<16x16xf32> -> vector<16x16xf32>
    %c4_194 = arith.constant 4 : index
    %c0_195 = arith.constant 0 : index
    %c0_196 = arith.constant 0 : index
    %c0_197 = arith.constant 0 : index
    %460 = vector.load %arg4[%c4_194, %c0_195, %c0_196, %c0_197] : memref<8x3x16x16xf32, #tpu.memory_space<vmem>>, vector<1x1x16x16xf32>
    %461 = vector.shape_cast %460 : vector<1x1x16x16xf32> to vector<16x16xf32>
    %462 = vector.shape_cast %459 : vector<16x16xf32> to vector<1x1x16x16xf32>
    tpu.vector_store %arg4[%c4_194, %c0_195, %c0_196, %c0_197], %462 {strides = array<i32>} : memref<8x3x16x16xf32, #tpu.memory_space<vmem>>, vector<1x1x16x16xf32>,
    %463 = vector.extract_strided_slice %456 {offsets = [16, 0], sizes = [16, 16], strides = [1, 1]} : vector<48x16xf32> to vector<16x16xf32>
    %464 = arith.truncf %463 : vector<16x16xf32> to vector<16x16xbf16>
    %cst_198 = arith.constant dense<0.000000e+00> : vector<16x16xf32>
    %465 = tpu.matmul %422, %464, %cst_198 {dimension_numbers = #tpu.dot_dimension_numbers<[1], [0], [0], [1], [0, 0, 1, 1], [], []>} : vector<16x16xbf16>, vector<16x16xbf16>, vector<16x16xf32> -> vector<16x16xf32>
    %c4_199 = arith.constant 4 : index
    %c1_200 = arith.constant 1 : index
    %c0_201 = arith.constant 0 : index
    %c0_202 = arith.constant 0 : index
    %466 = vector.load %arg4[%c4_199, %c1_200, %c0_201, %c0_202] : memref<8x3x16x16xf32, #tpu.memory_space<vmem>>, vector<1x1x16x16xf32>
    %467 = vector.shape_cast %466 : vector<1x1x16x16xf32> to vector<16x16xf32>
    %468 = vector.shape_cast %465 : vector<16x16xf32> to vector<1x1x16x16xf32>
    tpu.vector_store %arg4[%c4_199, %c1_200, %c0_201, %c0_202], %468 {strides = array<i32>} : memref<8x3x16x16xf32, #tpu.memory_space<vmem>>, vector<1x1x16x16xf32>,
    %469 = vector.extract_strided_slice %456 {offsets = [32, 0], sizes = [16, 16], strides = [1, 1]} : vector<48x16xf32> to vector<16x16xf32>
    %470 = arith.truncf %469 : vector<16x16xf32> to vector<16x16xbf16>
    %cst_203 = arith.constant dense<0.000000e+00> : vector<16x16xf32>
    %471 = tpu.matmul %422, %470, %cst_203 {dimension_numbers = #tpu.dot_dimension_numbers<[1], [0], [0], [1], [0, 0, 1, 1], [], []>} : vector<16x16xbf16>, vector<16x16xbf16>, vector<16x16xf32> -> vector<16x16xf32>
    %c4_204 = arith.constant 4 : index
    %c2_205 = arith.constant 2 : index
    %c0_206 = arith.constant 0 : index
    %c0_207 = arith.constant 0 : index
    %472 = vector.load %arg4[%c4_204, %c2_205, %c0_206, %c0_207] : memref<8x3x16x16xf32, #tpu.memory_space<vmem>>, vector<1x1x16x16xf32>
    %473 = vector.shape_cast %472 : vector<1x1x16x16xf32> to vector<16x16xf32>
    %474 = vector.shape_cast %471 : vector<16x16xf32> to vector<1x1x16x16xf32>
    tpu.vector_store %arg4[%c4_204, %c2_205, %c0_206, %c0_207], %474 {strides = array<i32>} : memref<8x3x16x16xf32, #tpu.memory_space<vmem>>, vector<1x1x16x16xf32>,
    %c8_i32_208 = arith.constant 8 : i32
    %475 = arith.muli %arg0, %c8_i32_208 : i32
    %c5_i32 = arith.constant 5 : i32
    %476 = arith.addi %475, %c5_i32 : i32
    %c4_i32_209 = arith.constant 4 : i32
    %477 = arith.muli %476, %c4_i32_209 : i32
    %478 = arith.index_cast %477 : i32 to index
    %479 = memref.load %arg2[%478] : memref<32xf32, #tpu.memory_space<smem>>
    %c1_i32_210 = arith.constant 1 : i32
    %480 = arith.addi %477, %c1_i32_210 : i32
    %481 = arith.index_cast %480 : i32 to index
    %482 = memref.load %arg2[%481] : memref<32xf32, #tpu.memory_space<smem>>
    %c2_i32_211 = arith.constant 2 : i32
    %483 = arith.addi %477, %c2_i32_211 : i32
    %484 = arith.index_cast %483 : i32 to index
    %485 = memref.load %arg2[%484] : memref<32xf32, #tpu.memory_space<smem>>
    %c3_i32_212 = arith.constant 3 : i32
    %486 = arith.addi %477, %c3_i32_212 : i32
    %487 = arith.index_cast %486 : i32 to index
    %488 = memref.load %arg2[%487] : memref<32xf32, #tpu.memory_space<smem>>
    %489 = tpu.iota {dimensions = array<i32: 0>} : vector<16x16xi32>
    %490 = arith.sitofp %489 : vector<16x16xi32> to vector<16x16xf32>
    %491 = tpu.iota {dimensions = array<i32: 1>} : vector<16x16xi32>
    %492 = arith.sitofp %491 : vector<16x16xi32> to vector<16x16xf32>
    %cst_213 = arith.constant 5.000000e-01 : f32
    %493 = vector.broadcast %cst_213 : f32 to vector<16x16xf32>
    %494 = arith.addf %490, %493 : vector<16x16xf32>
    %cst_214 = arith.constant 2.000000e+00 : f32
    %495 = vector.broadcast %cst_214 : f32 to vector<16x16xf32>
    %496 = arith.mulf %495, %494 : vector<16x16xf32>
    %cst_215 = arith.constant 1.600000e+01 : f32
    %497 = vector.broadcast %cst_215 : f32 to vector<16x16xf32>
    %498 = arith.divf %496, %497 : vector<16x16xf32>
    %cst_216 = arith.constant 1.000000e+00 : f32
    %499 = vector.broadcast %cst_216 : f32 to vector<16x16xf32>
    %500 = arith.subf %498, %499 : vector<16x16xf32>
    %501 = vector.broadcast %479 : f32 to vector<16x16xf32>
    %502 = arith.mulf %501, %500 : vector<16x16xf32>
    %503 = vector.broadcast %482 : f32 to vector<16x16xf32>
    %504 = arith.addf %502, %503 : vector<16x16xf32>
    %cst_217 = arith.constant 1.000000e+00 : f32
    %505 = vector.broadcast %cst_217 : f32 to vector<16x16xf32>
    %506 = arith.addf %504, %505 : vector<16x16xf32>
    %cst_218 = arith.constant 8.000000e+00 : f32
    %507 = vector.broadcast %cst_218 : f32 to vector<16x16xf32>
    %508 = arith.mulf %506, %507 : vector<16x16xf32>
    %cst_219 = arith.constant 5.000000e-01 : f32
    %509 = vector.broadcast %cst_219 : f32 to vector<16x16xf32>
    %510 = arith.subf %508, %509 : vector<16x16xf32>
    %511 = arith.subf %510, %492 : vector<16x16xf32>
    %512 = math.absf %511 : vector<16x16xf32>
    %cst_220 = arith.constant 1.000000e+00 : f32
    %513 = vector.broadcast %cst_220 : f32 to vector<16x16xf32>
    %514 = arith.subf %513, %512 : vector<16x16xf32>
    %cst_221 = arith.constant 0.000000e+00 : f32
    %515 = vector.broadcast %cst_221 : f32 to vector<16x16xf32>
    %516 = arith.maximumf %515, %514 : vector<16x16xf32>
    %517 = arith.truncf %516 : vector<16x16xf32> to vector<16x16xbf16>
    %518 = tpu.iota {dimensions = array<i32: 1>} : vector<16x16xi32>
    %519 = arith.sitofp %518 : vector<16x16xi32> to vector<16x16xf32>
    %520 = tpu.iota {dimensions = array<i32: 0>} : vector<16x16xi32>
    %521 = arith.sitofp %520 : vector<16x16xi32> to vector<16x16xf32>
    %cst_222 = arith.constant 5.000000e-01 : f32
    %522 = vector.broadcast %cst_222 : f32 to vector<16x16xf32>
    %523 = arith.addf %519, %522 : vector<16x16xf32>
    %cst_223 = arith.constant 2.000000e+00 : f32
    %524 = vector.broadcast %cst_223 : f32 to vector<16x16xf32>
    %525 = arith.mulf %524, %523 : vector<16x16xf32>
    %cst_224 = arith.constant 1.600000e+01 : f32
    %526 = vector.broadcast %cst_224 : f32 to vector<16x16xf32>
    %527 = arith.divf %525, %526 : vector<16x16xf32>
    %cst_225 = arith.constant 1.000000e+00 : f32
    %528 = vector.broadcast %cst_225 : f32 to vector<16x16xf32>
    %529 = arith.subf %527, %528 : vector<16x16xf32>
    %530 = vector.broadcast %485 : f32 to vector<16x16xf32>
    %531 = arith.mulf %530, %529 : vector<16x16xf32>
    %532 = vector.broadcast %488 : f32 to vector<16x16xf32>
    %533 = arith.addf %531, %532 : vector<16x16xf32>
    %cst_226 = arith.constant 1.000000e+00 : f32
    %534 = vector.broadcast %cst_226 : f32 to vector<16x16xf32>
    %535 = arith.addf %533, %534 : vector<16x16xf32>
    %cst_227 = arith.constant 8.000000e+00 : f32
    %536 = vector.broadcast %cst_227 : f32 to vector<16x16xf32>
    %537 = arith.mulf %535, %536 : vector<16x16xf32>
    %cst_228 = arith.constant 5.000000e-01 : f32
    %538 = vector.broadcast %cst_228 : f32 to vector<16x16xf32>
    %539 = arith.subf %537, %538 : vector<16x16xf32>
    %540 = arith.subf %539, %521 : vector<16x16xf32>
    %541 = math.absf %540 : vector<16x16xf32>
    %cst_229 = arith.constant 1.000000e+00 : f32
    %542 = vector.broadcast %cst_229 : f32 to vector<16x16xf32>
    %543 = arith.subf %542, %541 : vector<16x16xf32>
    %cst_230 = arith.constant 0.000000e+00 : f32
    %544 = vector.broadcast %cst_230 : f32 to vector<16x16xf32>
    %545 = arith.maximumf %544, %543 : vector<16x16xf32>
    %546 = arith.truncf %545 : vector<16x16xf32> to vector<16x16xbf16>
    %c5 = arith.constant 5 : index
    %c0_231 = arith.constant 0 : index
    %c0_232 = arith.constant 0 : index
    %c0_233 = arith.constant 0 : index
    %547 = vector.load %arg3[%c5, %c0_231, %c0_232, %c0_233] : memref<8x3x16x16xf32, #tpu.memory_space<vmem>>, vector<1x3x16x16xf32>
    %548 = vector.shape_cast %547 : vector<1x3x16x16xf32> to vector<3x16x16xf32>
    %549 = vector.shape_cast %548 : vector<3x16x16xf32> to vector<48x16xf32>
    %550 = arith.truncf %549 : vector<48x16xf32> to vector<48x16xbf16>
    %cst_234 = arith.constant dense<0.000000e+00> : vector<48x16xf32>
    %551 = tpu.matmul %550, %546, %cst_234 {dimension_numbers = #tpu.dot_dimension_numbers<[1], [0], [0], [1], [0, 0, 1, 1], [], []>} : vector<48x16xbf16>, vector<16x16xbf16>, vector<48x16xf32> -> vector<48x16xf32>
    %552 = vector.extract_strided_slice %551 {offsets = [0, 0], sizes = [16, 16], strides = [1, 1]} : vector<48x16xf32> to vector<16x16xf32>
    %553 = arith.truncf %552 : vector<16x16xf32> to vector<16x16xbf16>
    %cst_235 = arith.constant dense<0.000000e+00> : vector<16x16xf32>
    %554 = tpu.matmul %517, %553, %cst_235 {dimension_numbers = #tpu.dot_dimension_numbers<[1], [0], [0], [1], [0, 0, 1, 1], [], []>} : vector<16x16xbf16>, vector<16x16xbf16>, vector<16x16xf32> -> vector<16x16xf32>
    %c5_236 = arith.constant 5 : index
    %c0_237 = arith.constant 0 : index
    %c0_238 = arith.constant 0 : index
    %c0_239 = arith.constant 0 : index
    %555 = vector.load %arg4[%c5_236, %c0_237, %c0_238, %c0_239] : memref<8x3x16x16xf32, #tpu.memory_space<vmem>>, vector<1x1x16x16xf32>
    %556 = vector.shape_cast %555 : vector<1x1x16x16xf32> to vector<16x16xf32>
    %557 = vector.shape_cast %554 : vector<16x16xf32> to vector<1x1x16x16xf32>
    tpu.vector_store %arg4[%c5_236, %c0_237, %c0_238, %c0_239], %557 {strides = array<i32>} : memref<8x3x16x16xf32, #tpu.memory_space<vmem>>, vector<1x1x16x16xf32>,
    %558 = vector.extract_strided_slice %551 {offsets = [16, 0], sizes = [16, 16], strides = [1, 1]} : vector<48x16xf32> to vector<16x16xf32>
    %559 = arith.truncf %558 : vector<16x16xf32> to vector<16x16xbf16>
    %cst_240 = arith.constant dense<0.000000e+00> : vector<16x16xf32>
    %560 = tpu.matmul %517, %559, %cst_240 {dimension_numbers = #tpu.dot_dimension_numbers<[1], [0], [0], [1], [0, 0, 1, 1], [], []>} : vector<16x16xbf16>, vector<16x16xbf16>, vector<16x16xf32> -> vector<16x16xf32>
    %c5_241 = arith.constant 5 : index
    %c1_242 = arith.constant 1 : index
    %c0_243 = arith.constant 0 : index
    %c0_244 = arith.constant 0 : index
    %561 = vector.load %arg4[%c5_241, %c1_242, %c0_243, %c0_244] : memref<8x3x16x16xf32, #tpu.memory_space<vmem>>, vector<1x1x16x16xf32>
    %562 = vector.shape_cast %561 : vector<1x1x16x16xf32> to vector<16x16xf32>
    %563 = vector.shape_cast %560 : vector<16x16xf32> to vector<1x1x16x16xf32>
    tpu.vector_store %arg4[%c5_241, %c1_242, %c0_243, %c0_244], %563 {strides = array<i32>} : memref<8x3x16x16xf32, #tpu.memory_space<vmem>>, vector<1x1x16x16xf32>,
    %564 = vector.extract_strided_slice %551 {offsets = [32, 0], sizes = [16, 16], strides = [1, 1]} : vector<48x16xf32> to vector<16x16xf32>
    %565 = arith.truncf %564 : vector<16x16xf32> to vector<16x16xbf16>
    %cst_245 = arith.constant dense<0.000000e+00> : vector<16x16xf32>
    %566 = tpu.matmul %517, %565, %cst_245 {dimension_numbers = #tpu.dot_dimension_numbers<[1], [0], [0], [1], [0, 0, 1, 1], [], []>} : vector<16x16xbf16>, vector<16x16xbf16>, vector<16x16xf32> -> vector<16x16xf32>
    %c5_246 = arith.constant 5 : index
    %c2_247 = arith.constant 2 : index
    %c0_248 = arith.constant 0 : index
    %c0_249 = arith.constant 0 : index
    %567 = vector.load %arg4[%c5_246, %c2_247, %c0_248, %c0_249] : memref<8x3x16x16xf32, #tpu.memory_space<vmem>>, vector<1x1x16x16xf32>
    %568 = vector.shape_cast %567 : vector<1x1x16x16xf32> to vector<16x16xf32>
    %569 = vector.shape_cast %566 : vector<16x16xf32> to vector<1x1x16x16xf32>
    tpu.vector_store %arg4[%c5_246, %c2_247, %c0_248, %c0_249], %569 {strides = array<i32>} : memref<8x3x16x16xf32, #tpu.memory_space<vmem>>, vector<1x1x16x16xf32>,
    %c8_i32_250 = arith.constant 8 : i32
    %570 = arith.muli %arg0, %c8_i32_250 : i32
    %c6_i32 = arith.constant 6 : i32
    %571 = arith.addi %570, %c6_i32 : i32
    %c4_i32_251 = arith.constant 4 : i32
    %572 = arith.muli %571, %c4_i32_251 : i32
    %573 = arith.index_cast %572 : i32 to index
    %574 = memref.load %arg2[%573] : memref<32xf32, #tpu.memory_space<smem>>
    %c1_i32_252 = arith.constant 1 : i32
    %575 = arith.addi %572, %c1_i32_252 : i32
    %576 = arith.index_cast %575 : i32 to index
    %577 = memref.load %arg2[%576] : memref<32xf32, #tpu.memory_space<smem>>
    %c2_i32_253 = arith.constant 2 : i32
    %578 = arith.addi %572, %c2_i32_253 : i32
    %579 = arith.index_cast %578 : i32 to index
    %580 = memref.load %arg2[%579] : memref<32xf32, #tpu.memory_space<smem>>
    %c3_i32_254 = arith.constant 3 : i32
    %581 = arith.addi %572, %c3_i32_254 : i32
    %582 = arith.index_cast %581 : i32 to index
    %583 = memref.load %arg2[%582] : memref<32xf32, #tpu.memory_space<smem>>
    %584 = tpu.iota {dimensions = array<i32: 0>} : vector<16x16xi32>
    %585 = arith.sitofp %584 : vector<16x16xi32> to vector<16x16xf32>
    %586 = tpu.iota {dimensions = array<i32: 1>} : vector<16x16xi32>
    %587 = arith.sitofp %586 : vector<16x16xi32> to vector<16x16xf32>
    %cst_255 = arith.constant 5.000000e-01 : f32
    %588 = vector.broadcast %cst_255 : f32 to vector<16x16xf32>
    %589 = arith.addf %585, %588 : vector<16x16xf32>
    %cst_256 = arith.constant 2.000000e+00 : f32
    %590 = vector.broadcast %cst_256 : f32 to vector<16x16xf32>
    %591 = arith.mulf %590, %589 : vector<16x16xf32>
    %cst_257 = arith.constant 1.600000e+01 : f32
    %592 = vector.broadcast %cst_257 : f32 to vector<16x16xf32>
    %593 = arith.divf %591, %592 : vector<16x16xf32>
    %cst_258 = arith.constant 1.000000e+00 : f32
    %594 = vector.broadcast %cst_258 : f32 to vector<16x16xf32>
    %595 = arith.subf %593, %594 : vector<16x16xf32>
    %596 = vector.broadcast %574 : f32 to vector<16x16xf32>
    %597 = arith.mulf %596, %595 : vector<16x16xf32>
    %598 = vector.broadcast %577 : f32 to vector<16x16xf32>
    %599 = arith.addf %597, %598 : vector<16x16xf32>
    %cst_259 = arith.constant 1.000000e+00 : f32
    %600 = vector.broadcast %cst_259 : f32 to vector<16x16xf32>
    %601 = arith.addf %599, %600 : vector<16x16xf32>
    %cst_260 = arith.constant 8.000000e+00 : f32
    %602 = vector.broadcast %cst_260 : f32 to vector<16x16xf32>
    %603 = arith.mulf %601, %602 : vector<16x16xf32>
    %cst_261 = arith.constant 5.000000e-01 : f32
    %604 = vector.broadcast %cst_261 : f32 to vector<16x16xf32>
    %605 = arith.subf %603, %604 : vector<16x16xf32>
    %606 = arith.subf %605, %587 : vector<16x16xf32>
    %607 = math.absf %606 : vector<16x16xf32>
    %cst_262 = arith.constant 1.000000e+00 : f32
    %608 = vector.broadcast %cst_262 : f32 to vector<16x16xf32>
    %609 = arith.subf %608, %607 : vector<16x16xf32>
    %cst_263 = arith.constant 0.000000e+00 : f32
    %610 = vector.broadcast %cst_263 : f32 to vector<16x16xf32>
    %611 = arith.maximumf %610, %609 : vector<16x16xf32>
    %612 = arith.truncf %611 : vector<16x16xf32> to vector<16x16xbf16>
    %613 = tpu.iota {dimensions = array<i32: 1>} : vector<16x16xi32>
    %614 = arith.sitofp %613 : vector<16x16xi32> to vector<16x16xf32>
    %615 = tpu.iota {dimensions = array<i32: 0>} : vector<16x16xi32>
    %616 = arith.sitofp %615 : vector<16x16xi32> to vector<16x16xf32>
    %cst_264 = arith.constant 5.000000e-01 : f32
    %617 = vector.broadcast %cst_264 : f32 to vector<16x16xf32>
    %618 = arith.addf %614, %617 : vector<16x16xf32>
    %cst_265 = arith.constant 2.000000e+00 : f32
    %619 = vector.broadcast %cst_265 : f32 to vector<16x16xf32>
    %620 = arith.mulf %619, %618 : vector<16x16xf32>
    %cst_266 = arith.constant 1.600000e+01 : f32
    %621 = vector.broadcast %cst_266 : f32 to vector<16x16xf32>
    %622 = arith.divf %620, %621 : vector<16x16xf32>
    %cst_267 = arith.constant 1.000000e+00 : f32
    %623 = vector.broadcast %cst_267 : f32 to vector<16x16xf32>
    %624 = arith.subf %622, %623 : vector<16x16xf32>
    %625 = vector.broadcast %580 : f32 to vector<16x16xf32>
    %626 = arith.mulf %625, %624 : vector<16x16xf32>
    %627 = vector.broadcast %583 : f32 to vector<16x16xf32>
    %628 = arith.addf %626, %627 : vector<16x16xf32>
    %cst_268 = arith.constant 1.000000e+00 : f32
    %629 = vector.broadcast %cst_268 : f32 to vector<16x16xf32>
    %630 = arith.addf %628, %629 : vector<16x16xf32>
    %cst_269 = arith.constant 8.000000e+00 : f32
    %631 = vector.broadcast %cst_269 : f32 to vector<16x16xf32>
    %632 = arith.mulf %630, %631 : vector<16x16xf32>
    %cst_270 = arith.constant 5.000000e-01 : f32
    %633 = vector.broadcast %cst_270 : f32 to vector<16x16xf32>
    %634 = arith.subf %632, %633 : vector<16x16xf32>
    %635 = arith.subf %634, %616 : vector<16x16xf32>
    %636 = math.absf %635 : vector<16x16xf32>
    %cst_271 = arith.constant 1.000000e+00 : f32
    %637 = vector.broadcast %cst_271 : f32 to vector<16x16xf32>
    %638 = arith.subf %637, %636 : vector<16x16xf32>
    %cst_272 = arith.constant 0.000000e+00 : f32
    %639 = vector.broadcast %cst_272 : f32 to vector<16x16xf32>
    %640 = arith.maximumf %639, %638 : vector<16x16xf32>
    %641 = arith.truncf %640 : vector<16x16xf32> to vector<16x16xbf16>
    %c6 = arith.constant 6 : index
    %c0_273 = arith.constant 0 : index
    %c0_274 = arith.constant 0 : index
    %c0_275 = arith.constant 0 : index
    %642 = vector.load %arg3[%c6, %c0_273, %c0_274, %c0_275] : memref<8x3x16x16xf32, #tpu.memory_space<vmem>>, vector<1x3x16x16xf32>
    %643 = vector.shape_cast %642 : vector<1x3x16x16xf32> to vector<3x16x16xf32>
    %644 = vector.shape_cast %643 : vector<3x16x16xf32> to vector<48x16xf32>
    %645 = arith.truncf %644 : vector<48x16xf32> to vector<48x16xbf16>
    %cst_276 = arith.constant dense<0.000000e+00> : vector<48x16xf32>
    %646 = tpu.matmul %645, %641, %cst_276 {dimension_numbers = #tpu.dot_dimension_numbers<[1], [0], [0], [1], [0, 0, 1, 1], [], []>} : vector<48x16xbf16>, vector<16x16xbf16>, vector<48x16xf32> -> vector<48x16xf32>
    %647 = vector.extract_strided_slice %646 {offsets = [0, 0], sizes = [16, 16], strides = [1, 1]} : vector<48x16xf32> to vector<16x16xf32>
    %648 = arith.truncf %647 : vector<16x16xf32> to vector<16x16xbf16>
    %cst_277 = arith.constant dense<0.000000e+00> : vector<16x16xf32>
    %649 = tpu.matmul %612, %648, %cst_277 {dimension_numbers = #tpu.dot_dimension_numbers<[1], [0], [0], [1], [0, 0, 1, 1], [], []>} : vector<16x16xbf16>, vector<16x16xbf16>, vector<16x16xf32> -> vector<16x16xf32>
    %c6_278 = arith.constant 6 : index
    %c0_279 = arith.constant 0 : index
    %c0_280 = arith.constant 0 : index
    %c0_281 = arith.constant 0 : index
    %650 = vector.load %arg4[%c6_278, %c0_279, %c0_280, %c0_281] : memref<8x3x16x16xf32, #tpu.memory_space<vmem>>, vector<1x1x16x16xf32>
    %651 = vector.shape_cast %650 : vector<1x1x16x16xf32> to vector<16x16xf32>
    %652 = vector.shape_cast %649 : vector<16x16xf32> to vector<1x1x16x16xf32>
    tpu.vector_store %arg4[%c6_278, %c0_279, %c0_280, %c0_281], %652 {strides = array<i32>} : memref<8x3x16x16xf32, #tpu.memory_space<vmem>>, vector<1x1x16x16xf32>,
    %653 = vector.extract_strided_slice %646 {offsets = [16, 0], sizes = [16, 16], strides = [1, 1]} : vector<48x16xf32> to vector<16x16xf32>
    %654 = arith.truncf %653 : vector<16x16xf32> to vector<16x16xbf16>
    %cst_282 = arith.constant dense<0.000000e+00> : vector<16x16xf32>
    %655 = tpu.matmul %612, %654, %cst_282 {dimension_numbers = #tpu.dot_dimension_numbers<[1], [0], [0], [1], [0, 0, 1, 1], [], []>} : vector<16x16xbf16>, vector<16x16xbf16>, vector<16x16xf32> -> vector<16x16xf32>
    %c6_283 = arith.constant 6 : index
    %c1_284 = arith.constant 1 : index
    %c0_285 = arith.constant 0 : index
    %c0_286 = arith.constant 0 : index
    %656 = vector.load %arg4[%c6_283, %c1_284, %c0_285, %c0_286] : memref<8x3x16x16xf32, #tpu.memory_space<vmem>>, vector<1x1x16x16xf32>
    %657 = vector.shape_cast %656 : vector<1x1x16x16xf32> to vector<16x16xf32>
    %658 = vector.shape_cast %655 : vector<16x16xf32> to vector<1x1x16x16xf32>
    tpu.vector_store %arg4[%c6_283, %c1_284, %c0_285, %c0_286], %658 {strides = array<i32>} : memref<8x3x16x16xf32, #tpu.memory_space<vmem>>, vector<1x1x16x16xf32>,
    %659 = vector.extract_strided_slice %646 {offsets = [32, 0], sizes = [16, 16], strides = [1, 1]} : vector<48x16xf32> to vector<16x16xf32>
    %660 = arith.truncf %659 : vector<16x16xf32> to vector<16x16xbf16>
    %cst_287 = arith.constant dense<0.000000e+00> : vector<16x16xf32>
    %661 = tpu.matmul %612, %660, %cst_287 {dimension_numbers = #tpu.dot_dimension_numbers<[1], [0], [0], [1], [0, 0, 1, 1], [], []>} : vector<16x16xbf16>, vector<16x16xbf16>, vector<16x16xf32> -> vector<16x16xf32>
    %c6_288 = arith.constant 6 : index
    %c2_289 = arith.constant 2 : index
    %c0_290 = arith.constant 0 : index
    %c0_291 = arith.constant 0 : index
    %662 = vector.load %arg4[%c6_288, %c2_289, %c0_290, %c0_291] : memref<8x3x16x16xf32, #tpu.memory_space<vmem>>, vector<1x1x16x16xf32>
    %663 = vector.shape_cast %662 : vector<1x1x16x16xf32> to vector<16x16xf32>
    %664 = vector.shape_cast %661 : vector<16x16xf32> to vector<1x1x16x16xf32>
    tpu.vector_store %arg4[%c6_288, %c2_289, %c0_290, %c0_291], %664 {strides = array<i32>} : memref<8x3x16x16xf32, #tpu.memory_space<vmem>>, vector<1x1x16x16xf32>,
    %c8_i32_292 = arith.constant 8 : i32
    %665 = arith.muli %arg0, %c8_i32_292 : i32
    %c7_i32 = arith.constant 7 : i32
    %666 = arith.addi %665, %c7_i32 : i32
    %c4_i32_293 = arith.constant 4 : i32
    %667 = arith.muli %666, %c4_i32_293 : i32
    %668 = arith.index_cast %667 : i32 to index
    %669 = memref.load %arg2[%668] : memref<32xf32, #tpu.memory_space<smem>>
    %c1_i32_294 = arith.constant 1 : i32
    %670 = arith.addi %667, %c1_i32_294 : i32
    %671 = arith.index_cast %670 : i32 to index
    %672 = memref.load %arg2[%671] : memref<32xf32, #tpu.memory_space<smem>>
    %c2_i32_295 = arith.constant 2 : i32
    %673 = arith.addi %667, %c2_i32_295 : i32
    %674 = arith.index_cast %673 : i32 to index
    %675 = memref.load %arg2[%674] : memref<32xf32, #tpu.memory_space<smem>>
    %c3_i32_296 = arith.constant 3 : i32
    %676 = arith.addi %667, %c3_i32_296 : i32
    %677 = arith.index_cast %676 : i32 to index
    %678 = memref.load %arg2[%677] : memref<32xf32, #tpu.memory_space<smem>>
    %679 = tpu.iota {dimensions = array<i32: 0>} : vector<16x16xi32>
    %680 = arith.sitofp %679 : vector<16x16xi32> to vector<16x16xf32>
    %681 = tpu.iota {dimensions = array<i32: 1>} : vector<16x16xi32>
    %682 = arith.sitofp %681 : vector<16x16xi32> to vector<16x16xf32>
    %cst_297 = arith.constant 5.000000e-01 : f32
    %683 = vector.broadcast %cst_297 : f32 to vector<16x16xf32>
    %684 = arith.addf %680, %683 : vector<16x16xf32>
    %cst_298 = arith.constant 2.000000e+00 : f32
    %685 = vector.broadcast %cst_298 : f32 to vector<16x16xf32>
    %686 = arith.mulf %685, %684 : vector<16x16xf32>
    %cst_299 = arith.constant 1.600000e+01 : f32
    %687 = vector.broadcast %cst_299 : f32 to vector<16x16xf32>
    %688 = arith.divf %686, %687 : vector<16x16xf32>
    %cst_300 = arith.constant 1.000000e+00 : f32
    %689 = vector.broadcast %cst_300 : f32 to vector<16x16xf32>
    %690 = arith.subf %688, %689 : vector<16x16xf32>
    %691 = vector.broadcast %669 : f32 to vector<16x16xf32>
    %692 = arith.mulf %691, %690 : vector<16x16xf32>
    %693 = vector.broadcast %672 : f32 to vector<16x16xf32>
    %694 = arith.addf %692, %693 : vector<16x16xf32>
    %cst_301 = arith.constant 1.000000e+00 : f32
    %695 = vector.broadcast %cst_301 : f32 to vector<16x16xf32>
    %696 = arith.addf %694, %695 : vector<16x16xf32>
    %cst_302 = arith.constant 8.000000e+00 : f32
    %697 = vector.broadcast %cst_302 : f32 to vector<16x16xf32>
    %698 = arith.mulf %696, %697 : vector<16x16xf32>
    %cst_303 = arith.constant 5.000000e-01 : f32
    %699 = vector.broadcast %cst_303 : f32 to vector<16x16xf32>
    %700 = arith.subf %698, %699 : vector<16x16xf32>
    %701 = arith.subf %700, %682 : vector<16x16xf32>
    %702 = math.absf %701 : vector<16x16xf32>
    %cst_304 = arith.constant 1.000000e+00 : f32
    %703 = vector.broadcast %cst_304 : f32 to vector<16x16xf32>
    %704 = arith.subf %703, %702 : vector<16x16xf32>
    %cst_305 = arith.constant 0.000000e+00 : f32
    %705 = vector.broadcast %cst_305 : f32 to vector<16x16xf32>
    %706 = arith.maximumf %705, %704 : vector<16x16xf32>
    %707 = arith.truncf %706 : vector<16x16xf32> to vector<16x16xbf16>
    %708 = tpu.iota {dimensions = array<i32: 1>} : vector<16x16xi32>
    %709 = arith.sitofp %708 : vector<16x16xi32> to vector<16x16xf32>
    %710 = tpu.iota {dimensions = array<i32: 0>} : vector<16x16xi32>
    %711 = arith.sitofp %710 : vector<16x16xi32> to vector<16x16xf32>
    %cst_306 = arith.constant 5.000000e-01 : f32
    %712 = vector.broadcast %cst_306 : f32 to vector<16x16xf32>
    %713 = arith.addf %709, %712 : vector<16x16xf32>
    %cst_307 = arith.constant 2.000000e+00 : f32
    %714 = vector.broadcast %cst_307 : f32 to vector<16x16xf32>
    %715 = arith.mulf %714, %713 : vector<16x16xf32>
    %cst_308 = arith.constant 1.600000e+01 : f32
    %716 = vector.broadcast %cst_308 : f32 to vector<16x16xf32>
    %717 = arith.divf %715, %716 : vector<16x16xf32>
    %cst_309 = arith.constant 1.000000e+00 : f32
    %718 = vector.broadcast %cst_309 : f32 to vector<16x16xf32>
    %719 = arith.subf %717, %718 : vector<16x16xf32>
    %720 = vector.broadcast %675 : f32 to vector<16x16xf32>
    %721 = arith.mulf %720, %719 : vector<16x16xf32>
    %722 = vector.broadcast %678 : f32 to vector<16x16xf32>
    %723 = arith.addf %721, %722 : vector<16x16xf32>
    %cst_310 = arith.constant 1.000000e+00 : f32
    %724 = vector.broadcast %cst_310 : f32 to vector<16x16xf32>
    %725 = arith.addf %723, %724 : vector<16x16xf32>
    %cst_311 = arith.constant 8.000000e+00 : f32
    %726 = vector.broadcast %cst_311 : f32 to vector<16x16xf32>
    %727 = arith.mulf %725, %726 : vector<16x16xf32>
    %cst_312 = arith.constant 5.000000e-01 : f32
    %728 = vector.broadcast %cst_312 : f32 to vector<16x16xf32>
    %729 = arith.subf %727, %728 : vector<16x16xf32>
    %730 = arith.subf %729, %711 : vector<16x16xf32>
    %731 = math.absf %730 : vector<16x16xf32>
    %cst_313 = arith.constant 1.000000e+00 : f32
    %732 = vector.broadcast %cst_313 : f32 to vector<16x16xf32>
    %733 = arith.subf %732, %731 : vector<16x16xf32>
    %cst_314 = arith.constant 0.000000e+00 : f32
    %734 = vector.broadcast %cst_314 : f32 to vector<16x16xf32>
    %735 = arith.maximumf %734, %733 : vector<16x16xf32>
    %736 = arith.truncf %735 : vector<16x16xf32> to vector<16x16xbf16>
    %c7 = arith.constant 7 : index
    %c0_315 = arith.constant 0 : index
    %c0_316 = arith.constant 0 : index
    %c0_317 = arith.constant 0 : index
    %737 = vector.load %arg3[%c7, %c0_315, %c0_316, %c0_317] : memref<8x3x16x16xf32, #tpu.memory_space<vmem>>, vector<1x3x16x16xf32>
    %738 = vector.shape_cast %737 : vector<1x3x16x16xf32> to vector<3x16x16xf32>
    %739 = vector.shape_cast %738 : vector<3x16x16xf32> to vector<48x16xf32>
    %740 = arith.truncf %739 : vector<48x16xf32> to vector<48x16xbf16>
    %cst_318 = arith.constant dense<0.000000e+00> : vector<48x16xf32>
    %741 = tpu.matmul %740, %736, %cst_318 {dimension_numbers = #tpu.dot_dimension_numbers<[1], [0], [0], [1], [0, 0, 1, 1], [], []>} : vector<48x16xbf16>, vector<16x16xbf16>, vector<48x16xf32> -> vector<48x16xf32>
    %742 = vector.extract_strided_slice %741 {offsets = [0, 0], sizes = [16, 16], strides = [1, 1]} : vector<48x16xf32> to vector<16x16xf32>
    %743 = arith.truncf %742 : vector<16x16xf32> to vector<16x16xbf16>
    %cst_319 = arith.constant dense<0.000000e+00> : vector<16x16xf32>
    %744 = tpu.matmul %707, %743, %cst_319 {dimension_numbers = #tpu.dot_dimension_numbers<[1], [0], [0], [1], [0, 0, 1, 1], [], []>} : vector<16x16xbf16>, vector<16x16xbf16>, vector<16x16xf32> -> vector<16x16xf32>
    %c7_320 = arith.constant 7 : index
    %c0_321 = arith.constant 0 : index
    %c0_322 = arith.constant 0 : index
    %c0_323 = arith.constant 0 : index
    %745 = vector.load %arg4[%c7_320, %c0_321, %c0_322, %c0_323] : memref<8x3x16x16xf32, #tpu.memory_space<vmem>>, vector<1x1x16x16xf32>
    %746 = vector.shape_cast %745 : vector<1x1x16x16xf32> to vector<16x16xf32>
    %747 = vector.shape_cast %744 : vector<16x16xf32> to vector<1x1x16x16xf32>
    tpu.vector_store %arg4[%c7_320, %c0_321, %c0_322, %c0_323], %747 {strides = array<i32>} : memref<8x3x16x16xf32, #tpu.memory_space<vmem>>, vector<1x1x16x16xf32>,
    %748 = vector.extract_strided_slice %741 {offsets = [16, 0], sizes = [16, 16], strides = [1, 1]} : vector<48x16xf32> to vector<16x16xf32>
    %749 = arith.truncf %748 : vector<16x16xf32> to vector<16x16xbf16>
    %cst_324 = arith.constant dense<0.000000e+00> : vector<16x16xf32>
    %750 = tpu.matmul %707, %749, %cst_324 {dimension_numbers = #tpu.dot_dimension_numbers<[1], [0], [0], [1], [0, 0, 1, 1], [], []>} : vector<16x16xbf16>, vector<16x16xbf16>, vector<16x16xf32> -> vector<16x16xf32>
    %c7_325 = arith.constant 7 : index
    %c1_326 = arith.constant 1 : index
    %c0_327 = arith.constant 0 : index
    %c0_328 = arith.constant 0 : index
    %751 = vector.load %arg4[%c7_325, %c1_326, %c0_327, %c0_328] : memref<8x3x16x16xf32, #tpu.memory_space<vmem>>, vector<1x1x16x16xf32>
    %752 = vector.shape_cast %751 : vector<1x1x16x16xf32> to vector<16x16xf32>
    %753 = vector.shape_cast %750 : vector<16x16xf32> to vector<1x1x16x16xf32>
    tpu.vector_store %arg4[%c7_325, %c1_326, %c0_327, %c0_328], %753 {strides = array<i32>} : memref<8x3x16x16xf32, #tpu.memory_space<vmem>>, vector<1x1x16x16xf32>,
    %754 = vector.extract_strided_slice %741 {offsets = [32, 0], sizes = [16, 16], strides = [1, 1]} : vector<48x16xf32> to vector<16x16xf32>
    %755 = arith.truncf %754 : vector<16x16xf32> to vector<16x16xbf16>
    %cst_329 = arith.constant dense<0.000000e+00> : vector<16x16xf32>
    %756 = tpu.matmul %707, %755, %cst_329 {dimension_numbers = #tpu.dot_dimension_numbers<[1], [0], [0], [1], [0, 0, 1, 1], [], []>} : vector<16x16xbf16>, vector<16x16xbf16>, vector<16x16xf32> -> vector<16x16xf32>
    %c7_330 = arith.constant 7 : index
    %c2_331 = arith.constant 2 : index
    %c0_332 = arith.constant 0 : index
    %c0_333 = arith.constant 0 : index
    %757 = vector.load %arg4[%c7_330, %c2_331, %c0_332, %c0_333] : memref<8x3x16x16xf32, #tpu.memory_space<vmem>>, vector<1x1x16x16xf32>
    %758 = vector.shape_cast %757 : vector<1x1x16x16xf32> to vector<16x16xf32>
    %759 = vector.shape_cast %756 : vector<16x16xf32> to vector<1x1x16x16xf32>
    tpu.vector_store %arg4[%c7_330, %c2_331, %c0_332, %c0_333], %759 {strides = array<i32>} : memref<8x3x16x16xf32, #tpu.memory_space<vmem>>, vector<1x1x16x16xf32>,
    return
  }
  func.func @transform_0(%arg0: i32, %arg1: i32) -> i32 {
    %c0_i32 = arith.constant 0 : i32
    %c0_i32_0 = arith.constant 0 : i32
    return %c0_i32 : i32
  }
  func.func @transform_1(%arg0: i32, %arg1: i32) -> (i32, i32, i32, i32) {
    %c0_i32 = arith.constant 0 : i32
    %c0_i32_0 = arith.constant 0 : i32
    %c0_i32_1 = arith.constant 0 : i32
    return %arg0, %arg1, %c0_i32, %c0_i32_0 : i32, i32, i32, i32
  }
  func.func @transform_2(%arg0: i32, %arg1: i32) -> (i32, i32, i32, i32) {
    %c0_i32 = arith.constant 0 : i32
    %c0_i32_0 = arith.constant 0 : i32
    %c0_i32_1 = arith.constant 0 : i32
    return %arg0, %arg1, %c0_i32, %c0_i32_0 : i32, i32, i32, i32
  }
}

</mosaic_0001>

<llo_original>
// kernel: tpu_custom_call.1
$region0: #{tpu_custom_call.1}
  #allocation0 [shape = 'u32[]', space=smem, size = 0x4, offset = 0x4, fixed_abs, tag = 'smem constant byte address 0x4 - core index']
  #allocation1 [shape = 'u32[144,128]{1,0:T(1,128)}', space=vmem, size = 0x12000, scoped, tag = 'internal scratch']
  %s0 = inlined_call_operand.hbm [shape: f32[32], index: 0, kind: input, shape index: {}]
  %s1 = inlined_call_operand.hbm [shape: f32[8,3,16,16], index: 1, kind: input, shape index: {}]
  %s2 = inlined_call_operand.hbm [shape: f32[8,3,16,16], index: 2, kind: output, shape index: {}]
  %s3 = sld [smem:[#allocation0]]
  $region26: #{tpu_custom_call.1} parent=0
    _
  %s5 = ssub.s32 1, %s3
  %s6 = scalar_select 0, %s5, %s3
  $region1: #{tpu_custom_call.1} parent=0
    #allocation2 [shape = 'u8[512]{0}', space=smem, size = 0x200, scoped, tag = 'input window, operand 0, single buffered']
    #allocation3 [shape = 's32[1]{0}', space=sflag, size = 0x4, scoped, tag = 'scoped memory for tpu_custom_call.1']
    #allocation4 [shape = 's32[1]{0}', space=sflag, size = 0x4, scoped, tag = 'scoped memory for tpu_custom_call.1']
    #allocation5 [shape = 's32[1]{0}', space=sflag, size = 0x4, scoped, tag = 'scoped memory for tpu_custom_call.1']
    #allocation6 [shape = 'u8[196608]{0}', space=vmem, size = 0x30000, scoped, tag = 'input window, operand 1, single buffered']
    #allocation7 [shape = 'u8[196608]{0}', space=vmem, size = 0x30000, scoped, tag = 'output window, operand 0, single buffered']
    %7 = vsyncpa [#allocation5], 0
    %8 = vsyncpa [#allocation3], 0
    %9 = vsyncpa [#allocation4], 0
    // Predicated region
    $region2: #{tpu_custom_call.1} parent=1 // pred_check
      _
    $region3: #{tpu_custom_call.1} parent=1 // pred_check_branch
      %11 = sbr.rel (0) target = $region5
    $region4: #{tpu_custom_call.1} parent=1 // pred_region
      %s13 = ssub.s32 16, 16
      %14 = vsyncadd [#allocation5], %s13
      %17 = dma.hbm_to_smem %s0, 16, [#allocation2], [#allocation5]
    $region5: #{tpu_custom_call.1} parent=1 // pred_fallthru
      _
    // Predicated region
    $region6: #{tpu_custom_call.1} parent=1 // pred_check
      _
    $region7: #{tpu_custom_call.1} parent=1 // pred_check_branch
      %19 = sbr.rel (0) target = $region9
    $region8: #{tpu_custom_call.1} parent=1 // pred_region
      %s21 = ssub.s32 6144, 6144
      %22 = vsyncadd [#allocation3], %s21
      %s23 = sshll.u32 [#allocation6], 4
      %s24 = int_to_ptr.vmem [resolvable:$true] %s23
      %29 = dma.hbm_to_vmem [thread:$0]  %s1, 6144, %s24, [#allocation3], 128, 128, 8
    $region9: #{tpu_custom_call.1} parent=1 // pred_fallthru
      _
    // Predicated region
    $region10: #{tpu_custom_call.1} parent=1 // pred_check
      _
    $region11: #{tpu_custom_call.1} parent=1 // pred_check_branch
      %31 = sbr.rel (0) target = $region13
    $region12: #{tpu_custom_call.1} parent=1 // pred_region
      %32 = dma.done [#allocation5], 16
    $region13: #{tpu_custom_call.1} parent=1 // pred_fallthru
      _
    // Predicated region
    $region14: #{tpu_custom_call.1} parent=1 // pred_check
      _
    $region15: #{tpu_custom_call.1} parent=1 // pred_check_branch
      %34 = sbr.rel (0) target = $region17
    $region16: #{tpu_custom_call.1} parent=1 // pred_region
      %35 = dma.done [#allocation3], 6144
    $region17: #{tpu_custom_call.1} parent=1 // pred_fallthru
      _
    %36 = sfence
    %s38 = smul.u32 0, 32
    %s39 = sld [smem:[#allocation2 + %s38]]
    %s40 = sadd.s32 %s38, 1
    %s41 = sld [smem:[#allocation2 + %s40]]
    %s42 = sadd.s32 %s38, 2
    %s43 = sld [smem:[#allocation2 + %s42]]
    %s44 = sadd.s32 %s38, 3
    %s45 = sld [smem:[#allocation2 + %s44]]
    %v46 = vlaneseq
    %v47 = vshrl.u32 %v46, 7
    %v48 = vadd.s32 %v47, 8
    %v49 = vcvt.s32.f32 %v47
    %v50 = vcvt.s32.f32 %v48
    %v51 = vlaneseq
    %v52 = vand.u32 %v51, 127
    %v53 = vcvt.s32.f32 %v52
    %v54 = vadd.f32 %v49, 0.5
    %v55 = vadd.f32 %v50, 0.5
    %v56 = vmul.f32 %v54, 2.0
    %v57 = vmul.f32 %v55, 2.0
    %v58 = vrcp.pop 16.0
    %v59 = vmul.f32 %v56, %v58
    %v60 = vmul.f32 %v57, %v58
    %v61 = vsub.f32 %v59, 1.0
    %v62 = vsub.f32 %v60, 1.0
    %v63 = vstv %s39
    %v64 = vmul.f32 %v63, %v61
    %v65 = vmul.f32 %v63, %v62
    %v66 = vstv %s41
    %v67 = vadd.f32 %v64, %v66
    %v68 = vadd.f32 %v65, %v66
    %v69 = vadd.f32 %v67, 1.0
    %v70 = vadd.f32 %v68, 1.0
    %v71 = vmul.f32 %v69, 8.0
    %v72 = vmul.f32 %v70, 8.0
    %v73 = vsub.f32 %v71, 0.5
    %v74 = vsub.f32 %v72, 0.5
    %v75 = vsub.f32 %v73, %v53
    %v76 = vsub.f32 %v74, %v53
    %v77 = vand.u32 2147483647, %v75
    %v78 = vand.u32 2147483647, %v76
    %v79 = vsub.f32 1.0, %v77
    %v80 = vsub.f32 1.0, %v78
    %v81 = vmax.f32 %v79, 0.0
    %v82 = vmax.f32 %v80, 0.0
    %v83 = vpack.c.bf16 %v82, %v81
    %v84 = vadd.f32 %v53, 0.5
    %v85 = vmul.f32 %v84, 2.0
    %v86 = vmul.f32 %v85, %v58
    %v87 = vsub.f32 %v86, 1.0
    %v88 = vstv %s43
    %v89 = vmul.f32 %v88, %v87
    %v90 = vstv %s45
    %v91 = vadd.f32 %v89, %v90
    %v92 = vadd.f32 %v91, 1.0
    %v93 = vmul.f32 %v92, 8.0
    %v94 = vsub.f32 %v93, 0.5
    %v95 = vsub.f32 %v94, %v49
    %v96 = vsub.f32 %v94, %v50
    %v97 = vand.u32 2147483647, %v95
    %v98 = vand.u32 2147483647, %v96
    %v99 = vsub.f32 1.0, %v97
    %v100 = vsub.f32 1.0, %v98
    %v101 = vmax.f32 %v99, 0.0
    %v102 = vmax.f32 %v100, 0.0
    %v103 = vpack.c.bf16 %v102, %v101
    %v104 = vld [vmem:[#allocation6] sm:$0xff]
    %v105 = vld [vmem:[#allocation6 + $0x8] sm:$0xff]
    %v106 = vld [vmem:[#allocation6 + $0x10] sm:$0xff]
    %v107 = vld [vmem:[#allocation6 + $0x18] sm:$0xff]
    %v108 = vld [vmem:[#allocation6 + $0x20] sm:$0xff]
    %v109 = vld [vmem:[#allocation6 + $0x28] sm:$0xff]
    %v110 = vpack.c.bf16 %v105, %v104
    %v111 = vpack.c.bf16 %v107, %v106
    %v112 = vpack.c.bf16 %v109, %v108
    %vm113 = vcmask 130048
    %v115 = vsel %vm113, %v110, 0
    %v118 = vsel %vm113, %v111, 0
    %v121 = vsel %vm113, %v112, 0
    %123 = vmatprep.subr.bf16.mxu0 0
    %124 = vmatpush1.bf16.msra.mxu0 0
    %125 = vmatprep.subr.bf16.mxu0 0
    %126 = vmatpush1.bf16.msra.mxu0 0
    %127 = vmatprep.subr.bf16.mxu0 0
    %128 = vmatpush1.bf16.msra.mxu0 0
    %129 = vmatprep.subr.bf16.mxu0 0
    %130 = vmatpush1.bf16.msra.mxu0 0
    %131 = vmatprep.subr.bf16.mxu0 0
    %132 = vmatpush1.bf16.msra.mxu0 0
    %133 = vmatprep.subr.bf16.mxu0 0
    %134 = vmatpush1.bf16.msra.mxu0 0
    %135 = vmatprep.subr.bf16.mxu0 0
    %136 = vmatpush1.bf16.msra.mxu0 0
    %137 = vmatprep.subr.bf16.mxu0 0
    %138 = vmatpush1.bf16.msra.mxu0 %v103
    %139 = vmatprep.subr.bf16.mxu0 0
    %140 = vmatpush2.bf16.msra.mxu0 0
    %141 = vmatprep.subr.bf16.mxu0 0
    %142 = vmatpush2.bf16.msra.mxu0 0
    %143 = vmatprep.subr.bf16.mxu0 0
    %144 = vmatpush2.bf16.msra.mxu0 0
    %145 = vmatprep.subr.bf16.mxu0 0
    %146 = vmatpush2.bf16.msra.mxu0 0
    %147 = vmatprep.subr.bf16.mxu0 0
    %148 = vmatpush2.bf16.msra.mxu0 0
    %149 = vmatprep.subr.bf16.mxu0 0
    %150 = vmatpush2.bf16.msra.mxu0 0
    %151 = vmatprep.subr.bf16.mxu0 0
    %152 = vmatpush2.bf16.msra.mxu0 0
    %153 = vmatprep.subr.bf16.mxu0 0
    %154 = vmatpush2.bf16.msra.mxu0 0
    %155 = vmatprep.mubr.bf16.mxu0 0
    %156 = vmatmul.mubr.bf16.gmra.mxu0 %v115
    %v157 = vpop.f32.mrf.mxu0
    %v158 = vadd.f32 0.0, %v157
    %v159 = vpop.f32.mrf.mxu0
    %v160 = vpop.f32.mrf.mxu0
    %v161 = vadd.f32 0.0, %v160
    %v162 = vpop.f32.mrf.mxu0
    %163 = vmatprep.mubr.bf16.mxu0 0
    %164 = vmatmul.mubr.bf16.gmra.mxu0 %v118
    %v165 = vpop.f32.mrf.mxu0
    %v166 = vadd.f32 0.0, %v165
    %v167 = vpop.f32.mrf.mxu0
    %v168 = vpop.f32.mrf.mxu0
    %v169 = vadd.f32 0.0, %v168
    %v170 = vpop.f32.mrf.mxu0
    %171 = vmatprep.mubr.bf16.mxu0 0
    %172 = vmatmul.mubr.bf16.gmra.mxu0 %v121
    %v173 = vpop.f32.mrf.mxu0
    %v174 = vadd.f32 0.0, %v173
    %v175 = vpop.f32.mrf.mxu0
    %v176 = vpop.f32.mrf.mxu0
    %v177 = vadd.f32 0.0, %v176
    %v178 = vpop.f32.mrf.mxu0
    %179 = vdwg.mxu0
    %v180 = vpack.c.bf16 %v161, %v158
    %v182 = vsel %vm113, %v83, 0
    %184 = vmatprep.subr.bf16.mxu0 0
    %185 = vmatpush1.bf16.msra.mxu0 0
    %186 = vmatprep.subr.bf16.mxu0 0
    %187 = vmatpush1.bf16.msra.mxu0 0
    %188 = vmatprep.subr.bf16.mxu0 0
    %189 = vmatpush1.bf16.msra.mxu0 0
    %190 = vmatprep.subr.bf16.mxu0 0
    %191 = vmatpush1.bf16.msra.mxu0 0
    %192 = vmatprep.subr.bf16.mxu0 0
    %193 = vmatpush1.bf16.msra.mxu0 0
    %194 = vmatprep.subr.bf16.mxu0 0
    %195 = vmatpush1.bf16.msra.mxu0 0
    %196 = vmatprep.subr.bf16.mxu0 0
    %197 = vmatpush1.bf16.msra.mxu0 0
    %198 = vmatprep.subr.bf16.mxu0 0
    %199 = vmatpush1.bf16.msra.mxu0 %v180
    %200 = vmatprep.subr.bf16.mxu0 0
    %201 = vmatpush2.bf16.msra.mxu0 0
    %202 = vmatprep.subr.bf16.mxu0 0
    %203 = vmatpush2.bf16.msra.mxu0 0
    %204 = vmatprep.subr.bf16.mxu0 0
    %205 = vmatpush2.bf16.msra.mxu0 0
    %206 = vmatprep.subr.bf16.mxu0 0
    %207 = vmatpush2.bf16.msra.mxu0 0
    %208 = vmatprep.subr.bf16.mxu0 0
    %209 = vmatpush2.bf16.msra.mxu0 0
    %210 = vmatprep.subr.bf16.mxu0 0
    %211 = vmatpush2.bf16.msra.mxu0 0
    %212 = vmatprep.subr.bf16.mxu0 0
    %213 = vmatpush2.bf16.msra.mxu0 0
    %214 = vmatprep.subr.bf16.mxu0 0
    %215 = vmatpush2.bf16.msra.mxu0 0
    %216 = vmatprep.mubr.bf16.mxu0 0
    %217 = vmatmul.mubr.bf16.gmra.mxu0 %v182
    %v218 = vpop.f32.mrf.mxu0
    %v219 = vadd.f32 0.0, %v218
    %v220 = vpop.f32.mrf.mxu0
    %v221 = vpop.f32.mrf.mxu0
    %v222 = vadd.f32 0.0, %v221
    %v223 = vpop.f32.mrf.mxu0
    %224 = vdwg.mxu0
    %225 = vst.msk [vmem:[#allocation7] sm:$0xff] %vm113, %v219
    %226 = vst.msk [vmem:[#allocation7 + $0x8] sm:$0xff] %vm113, %v222
    %v227 = vpack.c.bf16 %v169, %v166
    %228 = vmatprep.subr.bf16.mxu0 0
    %229 = vmatpush1.bf16.msra.mxu0 0
    %230 = vmatprep.subr.bf16.mxu0 0
    %231 = vmatpush1.bf16.msra.mxu0 0
    %232 = vmatprep.subr.bf16.mxu0 0
    %233 = vmatpush1.bf16.msra.mxu0 0
    %234 = vmatprep.subr.bf16.mxu0 0
    %235 = vmatpush1.bf16.msra.mxu0 0
    %236 = vmatprep.subr.bf16.mxu0 0
    %237 = vmatpush1.bf16.msra.mxu0 0
    %238 = vmatprep.subr.bf16.mxu0 0
    %239 = vmatpush1.bf16.msra.mxu0 0
    %240 = vmatprep.subr.bf16.mxu0 0
    %241 = vmatpush1.bf16.msra.mxu0 0
    %242 = vmatprep.subr.bf16.mxu0 0
    %243 = vmatpush1.bf16.msra.mxu0 %v227
    %244 = vmatprep.subr.bf16.mxu0 0
    %245 = vmatpush2.bf16.msra.mxu0 0
    %246 = vmatprep.subr.bf16.mxu0 0
    %247 = vmatpush2.bf16.msra.mxu0 0
    %248 = vmatprep.subr.bf16.mxu0 0
    %249 = vmatpush2.bf16.msra.mxu0 0
    %250 = vmatprep.subr.bf16.mxu0 0
    %251 = vmatpush2.bf16.msra.mxu0 0
    %252 = vmatprep.subr.bf16.mxu0 0
    %253 = vmatpush2.bf16.msra.mxu0 0
    %254 = vmatprep.subr.bf16.mxu0 0
    %255 = vmatpush2.bf16.msra.mxu0 0
    %256 = vmatprep.subr.bf16.mxu0 0
    %257 = vmatpush2.bf16.msra.mxu0 0
    %258 = vmatprep.subr.bf16.mxu0 0
    %259 = vmatpush2.bf16.msra.mxu0 0
    %260 = vmatprep.mubr.bf16.mxu0 0
    %261 = vmatmul.mubr.bf16.gmra.mxu0 %v182
    %v262 = vpop.f32.mrf.mxu0
    %v263 = vadd.f32 0.0, %v262
    %v264 = vpop.f32.mrf.mxu0
    %v265 = vpop.f32.mrf.mxu0
    %v266 = vadd.f32 0.0, %v265
    %v267 = vpop.f32.mrf.mxu0
    %268 = vdwg.mxu0
    %s269 = scalar_lea.vmem [#allocation7], 16
    %270 = vst.msk [vmem:[%s269] sm:$0xff] %vm113, %v263
    %271 = vst.msk [vmem:[%s269 + $0x8] sm:$0xff] %vm113, %v266
    %v272 = vpack.c.bf16 %v177, %v174
    %273 = vmatprep.subr.bf16.mxu0 0
    %274 = vmatpush1.bf16.msra.mxu0 0
    %275 = vmatprep.subr.bf16.mxu0 0
    %276 = vmatpush1.bf16.msra.mxu0 0
    %277 = vmatprep.subr.bf16.mxu0 0
    %278 = vmatpush1.bf16.msra.mxu0 0
    %279 = vmatprep.subr.bf16.mxu0 0
    %280 = vmatpush1.bf16.msra.mxu0 0
    %281 = vmatprep.subr.bf16.mxu0 0
    %282 = vmatpush1.bf16.msra.mxu0 0
    %283 = vmatprep.subr.bf16.mxu0 0
    %284 = vmatpush1.bf16.msra.mxu0 0
    %285 = vmatprep.subr.bf16.mxu0 0
    %286 = vmatpush1.bf16.msra.mxu0 0
    %287 = vmatprep.subr.bf16.mxu0 0
    %288 = vmatpush1.bf16.msra.mxu0 %v272
    %289 = vmatprep.subr.bf16.mxu0 0
    %290 = vmatpush2.bf16.msra.mxu0 0
    %291 = vmatprep.subr.bf16.mxu0 0
    %292 = vmatpush2.bf16.msra.mxu0 0
    %293 = vmatprep.subr.bf16.mxu0 0
    %294 = vmatpush2.bf16.msra.mxu0 0
    %295 = vmatprep.subr.bf16.mxu0 0
    %296 = vmatpush2.bf16.msra.mxu0 0
    %297 = vmatprep.subr.bf16.mxu0 0
    %298 = vmatpush2.bf16.msra.mxu0 0
    %299 = vmatprep.subr.bf16.mxu0 0
    %300 = vmatpush2.bf16.msra.mxu0 0
    %301 = vmatprep.subr.bf16.mxu0 0
    %302 = vmatpush2.bf16.msra.mxu0 0
    %303 = vmatprep.subr.bf16.mxu0 0
    %304 = vmatpush2.bf16.msra.mxu0 0
    %305 = vmatprep.mubr.bf16.mxu0 0
    %306 = vmatmul.mubr.bf16.gmra.mxu0 %v182
    %v307 = vpop.f32.mrf.mxu0
    %v308 = vadd.f32 0.0, %v307
    %v309 = vpop.f32.mrf.mxu0
    %v310 = vpop.f32.mrf.mxu0
    %v311 = vadd.f32 0.0, %v310
    %v312 = vpop.f32.mrf.mxu0
    %313 = vdwg.mxu0
    %s314 = scalar_lea.vmem [#allocation7], 32
    %315 = vst.msk [vmem:[%s314] sm:$0xff] %vm113, %v308
    %316 = vst.msk [vmem:[%s314 + $0x8] sm:$0xff] %vm113, %v311
    %s317 = smul.u32 0, 8
    %s318 = sadd.s32 %s317, 1
    %s319 = smul.u32 %s318, 4
    %s320 = sld [smem:[#allocation2 + %s319]]
    %s321 = sadd.s32 %s319, 1
    %s322 = sld [smem:[#allocation2 + %s321]]
    %s323 = sadd.s32 %s319, 2
    %s324 = sld [smem:[#allocation2 + %s323]]
    %s325 = sadd.s32 %s319, 3
    %s326 = sld [smem:[#allocation2 + %s325]]
    %v327 = vstv %s320
    %v328 = vmul.f32 %v327, %v61
    %v329 = vmul.f32 %v327, %v62
    %v330 = vstv %s322
    %v331 = vadd.f32 %v328, %v330
    %v332 = vadd.f32 %v329, %v330
    %v333 = vadd.f32 %v331, 1.0
    %v334 = vadd.f32 %v332, 1.0
    %v335 = vmul.f32 %v333, 8.0
    %v336 = vmul.f32 %v334, 8.0
    %v337 = vsub.f32 %v335, 0.5
    %v338 = vsub.f32 %v336, 0.5
    %v339 = vsub.f32 %v337, %v53
    %v340 = vsub.f32 %v338, %v53
    %v341 = vand.u32 2147483647, %v339
    %v342 = vand.u32 2147483647, %v340
    %v343 = vsub.f32 1.0, %v341
    %v344 = vsub.f32 1.0, %v342
    %v345 = vmax.f32 %v343, 0.0
    %v346 = vmax.f32 %v344, 0.0
    %v347 = vpack.c.bf16 %v346, %v345
    %v348 = vstv %s324
    %v349 = vmul.f32 %v348, %v87
    %v350 = vstv %s326
    %v351 = vadd.f32 %v349, %v350
    %v352 = vadd.f32 %v351, 1.0
    %v353 = vmul.f32 %v352, 8.0
    %v354 = vsub.f32 %v353, 0.5
    %v355 = vsub.f32 %v354, %v49
    %v356 = vsub.f32 %v354, %v50
    %v357 = vand.u32 2147483647, %v355
    %v358 = vand.u32 2147483647, %v356
    %v359 = vsub.f32 1.0, %v357
    %v360 = vsub.f32 1.0, %v358
    %v361 = vmax.f32 %v359, 0.0
    %v362 = vmax.f32 %v360, 0.0
    %v363 = vpack.c.bf16 %v362, %v361
    %s364 = scalar_lea.vmem [#allocation6], 48
    %v365 = vld [vmem:[%s364] sm:$0xff]
    %v366 = vld [vmem:[%s364 + $0x8] sm:$0xff]
    %v367 = vld [vmem:[%s364 + $0x10] sm:$0xff]
    %v368 = vld [vmem:[%s364 + $0x18] sm:$0xff]
    %v369 = vld [vmem:[%s364 + $0x20] sm:$0xff]
    %v370 = vld [vmem:[%s364 + $0x28] sm:$0xff]
    %v371 = vpack.c.bf16 %v366, %v365
    %v372 = vpack.c.bf16 %v368, %v367
    %v373 = vpack.c.bf16 %v370, %v369
    %v375 = vsel %vm113, %v371, 0
    %v378 = vsel %vm113, %v372, 0
    %v381 = vsel %vm113, %v373, 0
    %383 = vmatprep.subr.bf16.mxu0 0
    %384 = vmatpush1.bf16.msra.mxu0 0
    %385 = vmatprep.subr.bf16.mxu0 0
    %386 = vmatpush1.bf16.msra.mxu0 0
    %387 = vmatprep.subr.bf16.mxu0 0
    %388 = vmatpush1.bf16.msra.mxu0 0
    %389 = vmatprep.subr.bf16.mxu0 0
    %390 = vmatpush1.bf16.msra.mxu0 0
    %391 = vmatprep.subr.bf16.mxu0 0
    %392 = vmatpush1.bf16.msra.mxu0 0
    %393 = vmatprep.subr.bf16.mxu0 0
    %394 = vmatpush1.bf16.msra.mxu0 0
    %395 = vmatprep.subr.bf16.mxu0 0
    %396 = vmatpush1.bf16.msra.mxu0 0
    %397 = vmatprep.subr.bf16.mxu0 0
    %398 = vmatpush1.bf16.msra.mxu0 %v363
    %399 = vmatprep.subr.bf16.mxu0 0
    %400 = vmatpush2.bf16.msra.mxu0 0
    %401 = vmatprep.subr.bf16.mxu0 0
    %402 = vmatpush2.bf16.msra.mxu0 0
    %403 = vmatprep.subr.bf16.mxu0 0
    %404 = vmatpush2.bf16.msra.mxu0 0
    %405 = vmatprep.subr.bf16.mxu0 0
    %406 = vmatpush2.bf16.msra.mxu0 0
    %407 = vmatprep.subr.bf16.mxu0 0
    %408 = vmatpush2.bf16.msra.mxu0 0
    %409 = vmatprep.subr.bf16.mxu0 0
    %410 = vmatpush2.bf16.msra.mxu0 0
    %411 = vmatprep.subr.bf16.mxu0 0
    %412 = vmatpush2.bf16.msra.mxu0 0
    %413 = vmatprep.subr.bf16.mxu0 0
    %414 = vmatpush2.bf16.msra.mxu0 0
    %415 = vmatprep.mubr.bf16.mxu0 0
    %416 = vmatmul.mubr.bf16.gmra.mxu0 %v375
    %v417 = vpop.f32.mrf.mxu0
    %v418 = vadd.f32 0.0, %v417
    %v419 = vpop.f32.mrf.mxu0
    %v420 = vpop.f32.mrf.mxu0
    %v421 = vadd.f32 0.0, %v420
    %v422 = vpop.f32.mrf.mxu0
    %423 = vmatprep.mubr.bf16.mxu0 0
    %424 = vmatmul.mubr.bf16.gmra.mxu0 %v378
    %v425 = vpop.f32.mrf.mxu0
    %v426 = vadd.f32 0.0, %v425
    %v427 = vpop.f32.mrf.mxu0
    %v428 = vpop.f32.mrf.mxu0
    %v429 = vadd.f32 0.0, %v428
    %v430 = vpop.f32.mrf.mxu0
    %431 = vmatprep.mubr.bf16.mxu0 0
    %432 = vmatmul.mubr.bf16.gmra.mxu0 %v381
    %v433 = vpop.f32.mrf.mxu0
    %v434 = vadd.f32 0.0, %v433
    %v435 = vpop.f32.mrf.mxu0
    %v436 = vpop.f32.mrf.mxu0
    %v437 = vadd.f32 0.0, %v436
    %v438 = vpop.f32.mrf.mxu0
    %439 = vdwg.mxu0
    %v440 = vpack.c.bf16 %v421, %v418
    %v442 = vsel %vm113, %v347, 0
    %444 = vmatprep.subr.bf16.mxu0 0
    %445 = vmatpush1.bf16.msra.mxu0 0
    %446 = vmatprep.subr.bf16.mxu0 0
    %447 = vmatpush1.bf16.msra.mxu0 0
    %448 = vmatprep.subr.bf16.mxu0 0
    %449 = vmatpush1.bf16.msra.mxu0 0
    %450 = vmatprep.subr.bf16.mxu0 0
    %451 = vmatpush1.bf16.msra.mxu0 0
    %452 = vmatprep.subr.bf16.mxu0 0
    %453 = vmatpush1.bf16.msra.mxu0 0
    %454 = vmatprep.subr.bf16.mxu0 0
    %455 = vmatpush1.bf16.msra.mxu0 0
    %456 = vmatprep.subr.bf16.mxu0 0
    %457 = vmatpush1.bf16.msra.mxu0 0
    %458 = vmatprep.subr.bf16.mxu0 0
    %459 = vmatpush1.bf16.msra.mxu0 %v440
    %460 = vmatprep.subr.bf16.mxu0 0
    %461 = vmatpush2.bf16.msra.mxu0 0
    %462 = vmatprep.subr.bf16.mxu0 0
    %463 = vmatpush2.bf16.msra.mxu0 0
    %464 = vmatprep.subr.bf16.mxu0 0
    %465 = vmatpush2.bf16.msra.mxu0 0
    %466 = vmatprep.subr.bf16.mxu0 0
    %467 = vmatpush2.bf16.msra.mxu0 0
    %468 = vmatprep.subr.bf16.mxu0 0
    %469 = vmatpush2.bf16.msra.mxu0 0
    %470 = vmatprep.subr.bf16.mxu0 0
    %471 = vmatpush2.bf16.msra.mxu0 0
    %472 = vmatprep.subr.bf16.mxu0 0
    %473 = vmatpush2.bf16.msra.mxu0 0
    %474 = vmatprep.subr.bf16.mxu0 0
    %475 = vmatpush2.bf16.msra.mxu0 0
    %476 = vmatprep.mubr.bf16.mxu0 0
    %477 = vmatmul.mubr.bf16.gmra.mxu0 %v442
    %v478 = vpop.f32.mrf.mxu0
    %v479 = vadd.f32 0.0, %v478
    %v480 = vpop.f32.mrf.mxu0
    %v481 = vpop.f32.mrf.mxu0
    %v482 = vadd.f32 0.0, %v481
    %v483 = vpop.f32.mrf.mxu0
    %484 = vdwg.mxu0
    %s485 = scalar_lea.vmem [#allocation7], 48
    %486 = vst.msk [vmem:[%s485] sm:$0xff] %vm113, %v479
    %487 = vst.msk [vmem:[%s485 + $0x8] sm:$0xff] %vm113, %v482
    %v488 = vpack.c.bf16 %v429, %v426
    %489 = vmatprep.subr.bf16.mxu0 0
    %490 = vmatpush1.bf16.msra.mxu0 0
    %491 = vmatprep.subr.bf16.mxu0 0
    %492 = vmatpush1.bf16.msra.mxu0 0
    %493 = vmatprep.subr.bf16.mxu0 0
    %494 = vmatpush1.bf16.msra.mxu0 0
    %495 = vmatprep.subr.bf16.mxu0 0
    %496 = vmatpush1.bf16.msra.mxu0 0
    %497 = vmatprep.subr.bf16.mxu0 0
    %498 = vmatpush1.bf16.msra.mxu0 0
    %499 = vmatprep.subr.bf16.mxu0 0
    %500 = vmatpush1.bf16.msra.mxu0 0
    %501 = vmatprep.subr.bf16.mxu0 0
    %502 = vmatpush1.bf16.msra.mxu0 0
    %503 = vmatprep.subr.bf16.mxu0 0
    %504 = vmatpush1.bf16.msra.mxu0 %v488
    %505 = vmatprep.subr.bf16.mxu0 0
    %506 = vmatpush2.bf16.msra.mxu0 0
    %507 = vmatprep.subr.bf16.mxu0 0
    %508 = vmatpush2.bf16.msra.mxu0 0
    %509 = vmatprep.subr.bf16.mxu0 0
    %510 = vmatpush2.bf16.msra.mxu0 0
    %511 = vmatprep.subr.bf16.mxu0 0
    %512 = vmatpush2.bf16.msra.mxu0 0
    %513 = vmatprep.subr.bf16.mxu0 0
    %514 = vmatpush2.bf16.msra.mxu0 0
    %515 = vmatprep.subr.bf16.mxu0 0
    %516 = vmatpush2.bf16.msra.mxu0 0
    %517 = vmatprep.subr.bf16.mxu0 0
    %518 = vmatpush2.bf16.msra.mxu0 0
    %519 = vmatprep.subr.bf16.mxu0 0
    %520 = vmatpush2.bf16.msra.mxu0 0
    %521 = vmatprep.mubr.bf16.mxu0 0
    %522 = vmatmul.mubr.bf16.gmra.mxu0 %v442
    %v523 = vpop.f32.mrf.mxu0
    %v524 = vadd.f32 0.0, %v523
    %v525 = vpop.f32.mrf.mxu0
    %v526 = vpop.f32.mrf.mxu0
    %v527 = vadd.f32 0.0, %v526
    %v528 = vpop.f32.mrf.mxu0
    %529 = vdwg.mxu0
    %s530 = scalar_lea.vmem [#allocation7], 64
    %531 = vst.msk [vmem:[%s530] sm:$0xff] %vm113, %v524
    %532 = vst.msk [vmem:[%s530 + $0x8] sm:$0xff] %vm113, %v527
    %v533 = vpack.c.bf16 %v437, %v434
    %534 = vmatprep.subr.bf16.mxu0 0
    %535 = vmatpush1.bf16.msra.mxu0 0
    %536 = vmatprep.subr.bf16.mxu0 0
    %537 = vmatpush1.bf16.msra.mxu0 0
    %538 = vmatprep.subr.bf16.mxu0 0
    %539 = vmatpush1.bf16.msra.mxu0 0
    %540 = vmatprep.subr.bf16.mxu0 0
    %541 = vmatpush1.bf16.msra.mxu0 0
    %542 = vmatprep.subr.bf16.mxu0 0
    %543 = vmatpush1.bf16.msra.mxu0 0
    %544 = vmatprep.subr.bf16.mxu0 0
    %545 = vmatpush1.bf16.msra.mxu0 0
    %546 = vmatprep.subr.bf16.mxu0 0
    %547 = vmatpush1.bf16.msra.mxu0 0
    %548 = vmatprep.subr.bf16.mxu0 0
    %549 = vmatpush1.bf16.msra.mxu0 %v533
    %550 = vmatprep.subr.bf16.mxu0 0
    %551 = vmatpush2.bf16.msra.mxu0 0
    %552 = vmatprep.subr.bf16.mxu0 0
    %553 = vmatpush2.bf16.msra.mxu0 0
    %554 = vmatprep.subr.bf16.mxu0 0
    %555 = vmatpush2.bf16.msra.mxu0 0
    %556 = vmatprep.subr.bf16.mxu0 0
    %557 = vmatpush2.bf16.msra.mxu0 0
    %558 = vmatprep.subr.bf16.mxu0 0
    %559 = vmatpush2.bf16.msra.mxu0 0
    %560 = vmatprep.subr.bf16.mxu0 0
    %561 = vmatpush2.bf16.msra.mxu0 0
    %562 = vmatprep.subr.bf16.mxu0 0
    %563 = vmatpush2.bf16.msra.mxu0 0
    %564 = vmatprep.subr.bf16.mxu0 0
    %565 = vmatpush2.bf16.msra.mxu0 0
    %566 = vmatprep.mubr.bf16.mxu0 0
    %567 = vmatmul.mubr.bf16.gmra.mxu0 %v442
    %v568 = vpop.f32.mrf.mxu0
    %v569 = vadd.f32 0.0, %v568
    %v570 = vpop.f32.mrf.mxu0
    %v571 = vpop.f32.mrf.mxu0
    %v572 = vadd.f32 0.0, %v571
    %v573 = vpop.f32.mrf.mxu0
    %574 = vdwg.mxu0
    %s575 = scalar_lea.vmem [#allocation7], 80
    %576 = vst.msk [vmem:[%s575] sm:$0xff] %vm113, %v569
    %577 = vst.msk [vmem:[%s575 + $0x8] sm:$0xff] %vm113, %v572
    %s578 = sadd.s32 %s317, 2
    %s579 = smul.u32 %s578, 4
    %s580 = sld [smem:[#allocation2 + %s579]]
    %s581 = sadd.s32 %s579, 1
    %s582 = sld [smem:[#allocation2 + %s581]]
    %s583 = sadd.s32 %s579, 2
    %s584 = sld [smem:[#allocation2 + %s583]]
    %s585 = sadd.s32 %s579, 3
    %s586 = sld [smem:[#allocation2 + %s585]]
    %v587 = vstv %s580
    %v588 = vmul.f32 %v587, %v61
    %v589 = vmul.f32 %v587, %v62
    %v590 = vstv %s582
    %v591 = vadd.f32 %v588, %v590
    %v592 = vadd.f32 %v589, %v590
    %v593 = vadd.f32 %v591, 1.0
    %v594 = vadd.f32 %v592, 1.0
    %v595 = vmul.f32 %v593, 8.0
    %v596 = vmul.f32 %v594, 8.0
    %v597 = vsub.f32 %v595, 0.5
    %v598 = vsub.f32 %v596, 0.5
    %v599 = vsub.f32 %v597, %v53
    %v600 = vsub.f32 %v598, %v53
    %v601 = vand.u32 2147483647, %v599
    %v602 = vand.u32 2147483647, %v600
    %v603 = vsub.f32 1.0, %v601
    %v604 = vsub.f32 1.0, %v602
    %v605 = vmax.f32 %v603, 0.0
    %v606 = vmax.f32 %v604, 0.0
    %v607 = vpack.c.bf16 %v606, %v605
    %v608 = vstv %s584
    %v609 = vmul.f32 %v608, %v87
    %v610 = vstv %s586
    %v611 = vadd.f32 %v609, %v610
    %v612 = vadd.f32 %v611, 1.0
    %v613 = vmul.f32 %v612, 8.0
    %v614 = vsub.f32 %v613, 0.5
    %v615 = vsub.f32 %v614, %v49
    %v616 = vsub.f32 %v614, %v50
    %v617 = vand.u32 2147483647, %v615
    %v618 = vand.u32 2147483647, %v616
    %v619 = vsub.f32 1.0, %v617
    %v620 = vsub.f32 1.0, %v618
    %v621 = vmax.f32 %v619, 0.0
    %v622 = vmax.f32 %v620, 0.0
    %v623 = vpack.c.bf16 %v622, %v621
    %s624 = scalar_lea.vmem [#allocation6], 96
    %v625 = vld [vmem:[%s624] sm:$0xff]
    %v626 = vld [vmem:[%s624 + $0x8] sm:$0xff]
    %v627 = vld [vmem:[%s624 + $0x10] sm:$0xff]
    %v628 = vld [vmem:[%s624 + $0x18] sm:$0xff]
    %v629 = vld [vmem:[%s624 + $0x20] sm:$0xff]
    %v630 = vld [vmem:[%s624 + $0x28] sm:$0xff]
    %v631 = vpack.c.bf16 %v626, %v625
    %v632 = vpack.c.bf16 %v628, %v627
    %v633 = vpack.c.bf16 %v630, %v629
    %v635 = vsel %vm113, %v631, 0
    %v638 = vsel %vm113, %v632, 0
    %v641 = vsel %vm113, %v633, 0
    %643 = vmatprep.subr.bf16.mxu0 0
    %644 = vmatpush1.bf16.msra.mxu0 0
    %645 = vmatprep.subr.bf16.mxu0 0
    %646 = vmatpush1.bf16.msra.mxu0 0
    %647 = vmatprep.subr.bf16.mxu0 0
    %648 = vmatpush1.bf16.msra.mxu0 0
    %649 = vmatprep.subr.bf16.mxu0 0
    %650 = vmatpush1.bf16.msra.mxu0 0
    %651 = vmatprep.subr.bf16.mxu0 0
    %652 = vmatpush1.bf16.msra.mxu0 0
    %653 = vmatprep.subr.bf16.mxu0 0
    %654 = vmatpush1.bf16.msra.mxu0 0
    %655 = vmatprep.subr.bf16.mxu0 0
    %656 = vmatpush1.bf16.msra.mxu0 0
    %657 = vmatprep.subr.bf16.mxu0 0
    %658 = vmatpush1.bf16.msra.mxu0 %v623
    %659 = vmatprep.subr.bf16.mxu0 0
    %660 = vmatpush2.bf16.msra.mxu0 0
    %661 = vmatprep.subr.bf16.mxu0 0
    %662 = vmatpush2.bf16.msra.mxu0 0
    %663 = vmatprep.subr.bf16.mxu0 0
    %664 = vmatpush2.bf16.msra.mxu0 0
    %665 = vmatprep.subr.bf16.mxu0 0
    %666 = vmatpush2.bf16.msra.mxu0 0
    %667 = vmatprep.subr.bf16.mxu0 0
    %668 = vmatpush2.bf16.msra.mxu0 0
    %669 = vmatprep.subr.bf16.mxu0 0
    %670 = vmatpush2.bf16.msra.mxu0 0
    %671 = vmatprep.subr.bf16.mxu0 0
    %672 = vmatpush2.bf16.msra.mxu0 0
    %673 = vmatprep.subr.bf16.mxu0 0
    %674 = vmatpush2.bf16.msra.mxu0 0
    %675 = vmatprep.mubr.bf16.mxu0 0
    %676 = vmatmul.mubr.bf16.gmra.mxu0 %v635
    %v677 = vpop.f32.mrf.mxu0
    %v678 = vadd.f32 0.0, %v677
    %v679 = vpop.f32.mrf.mxu0
    %v680 = vpop.f32.mrf.mxu0
    %v681 = vadd.f32 0.0, %v680
    %v682 = vpop.f32.mrf.mxu0
    %683 = vmatprep.mubr.bf16.mxu0 0
    %684 = vmatmul.mubr.bf16.gmra.mxu0 %v638
    %v685 = vpop.f32.mrf.mxu0
    %v686 = vadd.f32 0.0, %v685
    %v687 = vpop.f32.mrf.mxu0
    %v688 = vpop.f32.mrf.mxu0
    %v689 = vadd.f32 0.0, %v688
    %v690 = vpop.f32.mrf.mxu0
    %691 = vmatprep.mubr.bf16.mxu0 0
    %692 = vmatmul.mubr.bf16.gmra.mxu0 %v641
    %v693 = vpop.f32.mrf.mxu0
    %v694 = vadd.f32 0.0, %v693
    %v695 = vpop.f32.mrf.mxu0
    %v696 = vpop.f32.mrf.mxu0
    %v697 = vadd.f32 0.0, %v696
    %v698 = vpop.f32.mrf.mxu0
    %699 = vdwg.mxu0
    %v700 = vpack.c.bf16 %v681, %v678
    %v702 = vsel %vm113, %v607, 0
    %704 = vmatprep.subr.bf16.mxu0 0
    %705 = vmatpush1.bf16.msra.mxu0 0
    %706 = vmatprep.subr.bf16.mxu0 0
    %707 = vmatpush1.bf16.msra.mxu0 0
    %708 = vmatprep.subr.bf16.mxu0 0
    %709 = vmatpush1.bf16.msra.mxu0 0
    %710 = vmatprep.subr.bf16.mxu0 0
    %711 = vmatpush1.bf16.msra.mxu0 0
    %712 = vmatprep.subr.bf16.mxu0 0
    %713 = vmatpush1.bf16.msra.mxu0 0
    %714 = vmatprep.subr.bf16.mxu0 0
    %715 = vmatpush1.bf16.msra.mxu0 0
    %716 = vmatprep.subr.bf16.mxu0 0
    %717 = vmatpush1.bf16.msra.mxu0 0
    %718 = vmatprep.subr.bf16.mxu0 0
    %719 = vmatpush1.bf16.msra.mxu0 %v700
    %720 = vmatprep.subr.bf16.mxu0 0
    %721 = vmatpush2.bf16.msra.mxu0 0
    %722 = vmatprep.subr.bf16.mxu0 0
    %723 = vmatpush2.bf16.msra.mxu0 0
    %724 = vmatprep.subr.bf16.mxu0 0
    %725 = vmatpush2.bf16.msra.mxu0 0
    %726 = vmatprep.subr.bf16.mxu0 0
    %727 = vmatpush2.bf16.msra.mxu0 0
    %728 = vmatprep.subr.bf16.mxu0 0
    %729 = vmatpush2.bf16.msra.mxu0 0
    %730 = vmatprep.subr.bf16.mxu0 0
    %731 = vmatpush2.bf16.msra.mxu0 0
    %732 = vmatprep.subr.bf16.mxu0 0
    %733 = vmatpush2.bf16.msra.mxu0 0
    %734 = vmatprep.subr.bf16.mxu0 0
    %735 = vmatpush2.bf16.msra.mxu0 0
    %736 = vmatprep.mubr.bf16.mxu0 0
    %737 = vmatmul.mubr.bf16.gmra.mxu0 %v702
    %v738 = vpop.f32.mrf.mxu0
    %v739 = vadd.f32 0.0, %v738
    %v740 = vpop.f32.mrf.mxu0
    %v741 = vpop.f32.mrf.mxu0
    %v742 = vadd.f32 0.0, %v741
    %v743 = vpop.f32.mrf.mxu0
    %744 = vdwg.mxu0
    %s745 = scalar_lea.vmem [#allocation7], 96
    %746 = vst.msk [vmem:[%s745] sm:$0xff] %vm113, %v739
    %747 = vst.msk [vmem:[%s745 + $0x8] sm:$0xff] %vm113, %v742
    %v748 = vpack.c.bf16 %v689, %v686
    %749 = vmatprep.subr.bf16.mxu0 0
    %750 = vmatpush1.bf16.msra.mxu0 0
    %751 = vmatprep.subr.bf16.mxu0 0
    %752 = vmatpush1.bf16.msra.mxu0 0
    %753 = vmatprep.subr.bf16.mxu0 0
    %754 = vmatpush1.bf16.msra.mxu0 0
    %755 = vmatprep.subr.bf16.mxu0 0
    %756 = vmatpush1.bf16.msra.mxu0 0
    %757 = vmatprep.subr.bf16.mxu0 0
    %758 = vmatpush1.bf16.msra.mxu0 0
    %759 = vmatprep.subr.bf16.mxu0 0
    %760 = vmatpush1.bf16.msra.mxu0 0
    %761 = vmatprep.subr.bf16.mxu0 0
    %762 = vmatpush1.bf16.msra.mxu0 0
    %763 = vmatprep.subr.bf16.mxu0 0
    %764 = vmatpush1.bf16.msra.mxu0 %v748
    %765 = vmatprep.subr.bf16.mxu0 0
    %766 = vmatpush2.bf16.msra.mxu0 0
    %767 = vmatprep.subr.bf16.mxu0 0
    %768 = vmatpush2.bf16.msra.mxu0 0
    %769 = vmatprep.subr.bf16.mxu0 0
    %770 = vmatpush2.bf16.msra.mxu0 0
    %771 = vmatprep.subr.bf16.mxu0 0
    %772 = vmatpush2.bf16.msra.mxu0 0
    %773 = vmatprep.subr.bf16.mxu0 0
    %774 = vmatpush2.bf16.msra.mxu0 0
    %775 = vmatprep.subr.bf16.mxu0 0
    %776 = vmatpush2.bf16.msra.mxu0 0
    %777 = vmatprep.subr.bf16.mxu0 0
    %778 = vmatpush2.bf16.msra.mxu0 0
    %779 = vmatprep.subr.bf16.mxu0 0
    %780 = vmatpush2.bf16.msra.mxu0 0
    %781 = vmatprep.mubr.bf16.mxu0 0
    %782 = vmatmul.mubr.bf16.gmra.mxu0 %v702
    %v783 = vpop.f32.mrf.mxu0
    %v784 = vadd.f32 0.0, %v783
    %v785 = vpop.f32.mrf.mxu0
    %v786 = vpop.f32.mrf.mxu0
    %v787 = vadd.f32 0.0, %v786
    %v788 = vpop.f32.mrf.mxu0
    %789 = vdwg.mxu0
    %s790 = scalar_lea.vmem [#allocation7], 112
    %791 = vst.msk [vmem:[%s790] sm:$0xff] %vm113, %v784
    %792 = vst.msk [vmem:[%s790 + $0x8] sm:$0xff] %vm113, %v787
    %v793 = vpack.c.bf16 %v697, %v694
    %794 = vmatprep.subr.bf16.mxu0 0
    %795 = vmatpush1.bf16.msra.mxu0 0
    %796 = vmatprep.subr.bf16.mxu0 0
    %797 = vmatpush1.bf16.msra.mxu0 0
    %798 = vmatprep.subr.bf16.mxu0 0
    %799 = vmatpush1.bf16.msra.mxu0 0
    %800 = vmatprep.subr.bf16.mxu0 0
    %801 = vmatpush1.bf16.msra.mxu0 0
    %802 = vmatprep.subr.bf16.mxu0 0
    %803 = vmatpush1.bf16.msra.mxu0 0
    %804 = vmatprep.subr.bf16.mxu0 0
    %805 = vmatpush1.bf16.msra.mxu0 0
    %806 = vmatprep.subr.bf16.mxu0 0
    %807 = vmatpush1.bf16.msra.mxu0 0
    %808 = vmatprep.subr.bf16.mxu0 0
    %809 = vmatpush1.bf16.msra.mxu0 %v793
    %810 = vmatprep.subr.bf16.mxu0 0
    %811 = vmatpush2.bf16.msra.mxu0 0
    %812 = vmatprep.subr.bf16.mxu0 0
    %813 = vmatpush2.bf16.msra.mxu0 0
    %814 = vmatprep.subr.bf16.mxu0 0
    %815 = vmatpush2.bf16.msra.mxu0 0
    %816 = vmatprep.subr.bf16.mxu0 0
    %817 = vmatpush2.bf16.msra.mxu0 0
    %818 = vmatprep.subr.bf16.mxu0 0
    %819 = vmatpush2.bf16.msra.mxu0 0
    %820 = vmatprep.subr.bf16.mxu0 0
    %821 = vmatpush2.bf16.msra.mxu0 0
    %822 = vmatprep.subr.bf16.mxu0 0
    %823 = vmatpush2.bf16.msra.mxu0 0
    %824 = vmatprep.subr.bf16.mxu0 0
    %825 = vmatpush2.bf16.msra.mxu0 0
    %826 = vmatprep.mubr.bf16.mxu0 0
    %827 = vmatmul.mubr.bf16.gmra.mxu0 %v702
    %v828 = vpop.f32.mrf.mxu0
    %v829 = vadd.f32 0.0, %v828
    %v830 = vpop.f32.mrf.mxu0
    %v831 = vpop.f32.mrf.mxu0
    %v832 = vadd.f32 0.0, %v831
    %v833 = vpop.f32.mrf.mxu0
    %834 = vdwg.mxu0
    %s835 = scalar_lea.vmem [#allocation7], 128
    %836 = vst.msk [vmem:[%s835] sm:$0xff] %vm113, %v829
    %837 = vst.msk [vmem:[%s835 + $0x8] sm:$0xff] %vm113, %v832
    %s838 = sadd.s32 %s317, 3
    %s839 = smul.u32 %s838, 4
    %s840 = sld [smem:[#allocation2 + %s839]]
    %s841 = sadd.s32 %s839, 1
    %s842 = sld [smem:[#allocation2 + %s841]]
    %s843 = sadd.s32 %s839, 2
    %s844 = sld [smem:[#allocation2 + %s843]]
    %s845 = sadd.s32 %s839, 3
    %s846 = sld [smem:[#allocation2 + %s845]]
    %v847 = vstv %s840
    %v848 = vmul.f32 %v847, %v61
    %v849 = vmul.f32 %v847, %v62
    %v850 = vstv %s842
    %v851 = vadd.f32 %v848, %v850
    %v852 = vadd.f32 %v849, %v850
    %v853 = vadd.f32 %v851, 1.0
    %v854 = vadd.f32 %v852, 1.0
    %v855 = vmul.f32 %v853, 8.0
    %v856 = vmul.f32 %v854, 8.0
    %v857 = vsub.f32 %v855, 0.5
    %v858 = vsub.f32 %v856, 0.5
    %v859 = vsub.f32 %v857, %v53
    %v860 = vsub.f32 %v858, %v53
    %v861 = vand.u32 2147483647, %v859
    %v862 = vand.u32 2147483647, %v860
    %v863 = vsub.f32 1.0, %v861
    %v864 = vsub.f32 1.0, %v862
    %v865 = vmax.f32 %v863, 0.0
    %v866 = vmax.f32 %v864, 0.0
    %v867 = vpack.c.bf16 %v866, %v865
    %v868 = vstv %s844
    %v869 = vmul.f32 %v868, %v87
    %v870 = vstv %s846
    %v871 = vadd.f32 %v869, %v870
    %v872 = vadd.f32 %v871, 1.0
    %v873 = vmul.f32 %v872, 8.0
    %v874 = vsub.f32 %v873, 0.5
    %v875 = vsub.f32 %v874, %v49
    %v876 = vsub.f32 %v874, %v50
    %v877 = vand.u32 2147483647, %v875
    %v878 = vand.u32 2147483647, %v876
    %v879 = vsub.f32 1.0, %v877
    %v880 = vsub.f32 1.0, %v878
    %v881 = vmax.f32 %v879, 0.0
    %v882 = vmax.f32 %v880, 0.0
    %v883 = vpack.c.bf16 %v882, %v881
    %s884 = scalar_lea.vmem [#allocation6], 144
    %v885 = vld [vmem:[%s884] sm:$0xff]
    %v886 = vld [vmem:[%s884 + $0x8] sm:$0xff]
    %v887 = vld [vmem:[%s884 + $0x10] sm:$0xff]
    %v888 = vld [vmem:[%s884 + $0x18] sm:$0xff]
    %v889 = vld [vmem:[%s884 + $0x20] sm:$0xff]
    %v890 = vld [vmem:[%s884 + $0x28] sm:$0xff]
    %v891 = vpack.c.bf16 %v886, %v885
    %v892 = vpack.c.bf16 %v888, %v887
    %v893 = vpack.c.bf16 %v890, %v889
    %v895 = vsel %vm113, %v891, 0
    %v898 = vsel %vm113, %v892, 0
    %v901 = vsel %vm113, %v893, 0
    %903 = vmatprep.subr.bf16.mxu0 0
    %904 = vmatpush1.bf16.msra.mxu0 0
    %905 = vmatprep.subr.bf16.mxu0 0
    %906 = vmatpush1.bf16.msra.mxu0 0
    %907 = vmatprep.subr.bf16.mxu0 0
    %908 = vmatpush1.bf16.msra.mxu0 0
    %909 = vmatprep.subr.bf16.mxu0 0
    %910 = vmatpush1.bf16.msra.mxu0 0
    %911 = vmatprep.subr.bf16.mxu0 0
    %912 = vmatpush1.bf16.msra.mxu0 0
    %913 = vmatprep.subr.bf16.mxu0 0
    %914 = vmatpush1.bf16.msra.mxu0 0
    %915 = vmatprep.subr.bf16.mxu0 0
    %916 = vmatpush1.bf16.msra.mxu0 0
    %917 = vmatprep.subr.bf16.mxu0 0
    %918 = vmatpush1.bf16.msra.mxu0 %v883
    %919 = vmatprep.subr.bf16.mxu0 0
    %920 = vmatpush2.bf16.msra.mxu0 0
    %921 = vmatprep.subr.bf16.mxu0 0
    %922 = vmatpush2.bf16.msra.mxu0 0
    %923 = vmatprep.subr.bf16.mxu0 0
    %924 = vmatpush2.bf16.msra.mxu0 0
    %925 = vmatprep.subr.bf16.mxu0 0
    %926 = vmatpush2.bf16.msra.mxu0 0
    %927 = vmatprep.subr.bf16.mxu0 0
    %928 = vmatpush2.bf16.msra.mxu0 0
    %929 = vmatprep.subr.bf16.mxu0 0
    %930 = vmatpush2.bf16.msra.mxu0 0
    %931 = vmatprep.subr.bf16.mxu0 0
    %932 = vmatpush2.bf16.msra.mxu0 0
    %933 = vmatprep.subr.bf16.mxu0 0
    %934 = vmatpush2.bf16.msra.mxu0 0
    %935 = vmatprep.mubr.bf16.mxu0 0
    %936 = vmatmul.mubr.bf16.gmra.mxu0 %v895
    %v937 = vpop.f32.mrf.mxu0
    %v938 = vadd.f32 0.0, %v937
    %v939 = vpop.f32.mrf.mxu0
    %v940 = vpop.f32.mrf.mxu0
    %v941 = vadd.f32 0.0, %v940
    %v942 = vpop.f32.mrf.mxu0
    %943 = vmatprep.mubr.bf16.mxu0 0
    %944 = vmatmul.mubr.bf16.gmra.mxu0 %v898
    %v945 = vpop.f32.mrf.mxu0
    %v946 = vadd.f32 0.0, %v945
    %v947 = vpop.f32.mrf.mxu0
    %v948 = vpop.f32.mrf.mxu0
    %v949 = vadd.f32 0.0, %v948
    %v950 = vpop.f32.mrf.mxu0
    %951 = vmatprep.mubr.bf16.mxu0 0
    %952 = vmatmul.mubr.bf16.gmra.mxu0 %v901
    %v953 = vpop.f32.mrf.mxu0
    %v954 = vadd.f32 0.0, %v953
    %v955 = vpop.f32.mrf.mxu0
    %v956 = vpop.f32.mrf.mxu0
    %v957 = vadd.f32 0.0, %v956
    %v958 = vpop.f32.mrf.mxu0
    %959 = vdwg.mxu0
    %v960 = vpack.c.bf16 %v941, %v938
    %v962 = vsel %vm113, %v867, 0
    %964 = vmatprep.subr.bf16.mxu0 0
    %965 = vmatpush1.bf16.msra.mxu0 0
    %966 = vmatprep.subr.bf16.mxu0 0
    %967 = vmatpush1.bf16.msra.mxu0 0
    %968 = vmatprep.subr.bf16.mxu0 0
    %969 = vmatpush1.bf16.msra.mxu0 0
    %970 = vmatprep.subr.bf16.mxu0 0
    %971 = vmatpush1.bf16.msra.mxu0 0
    %972 = vmatprep.subr.bf16.mxu0 0
    %973 = vmatpush1.bf16.msra.mxu0 0
    %974 = vmatprep.subr.bf16.mxu0 0
    %975 = vmatpush1.bf16.msra.mxu0 0
    %976 = vmatprep.subr.bf16.mxu0 0
    %977 = vmatpush1.bf16.msra.mxu0 0
    %978 = vmatprep.subr.bf16.mxu0 0
    %979 = vmatpush1.bf16.msra.mxu0 %v960
    %980 = vmatprep.subr.bf16.mxu0 0
    %981 = vmatpush2.bf16.msra.mxu0 0
    %982 = vmatprep.subr.bf16.mxu0 0
    %983 = vmatpush2.bf16.msra.mxu0 0
    %984 = vmatprep.subr.bf16.mxu0 0
    %985 = vmatpush2.bf16.msra.mxu0 0
    %986 = vmatprep.subr.bf16.mxu0 0
    %987 = vmatpush2.bf16.msra.mxu0 0
    %988 = vmatprep.subr.bf16.mxu0 0
    %989 = vmatpush2.bf16.msra.mxu0 0
    %990 = vmatprep.subr.bf16.mxu0 0
    %991 = vmatpush2.bf16.msra.mxu0 0
    %992 = vmatprep.subr.bf16.mxu0 0
    %993 = vmatpush2.bf16.msra.mxu0 0
    %994 = vmatprep.subr.bf16.mxu0 0
    %995 = vmatpush2.bf16.msra.mxu0 0
    %996 = vmatprep.mubr.bf16.mxu0 0
    %997 = vmatmul.mubr.bf16.gmra.mxu0 %v962
    %v998 = vpop.f32.mrf.mxu0
    %v999 = vadd.f32 0.0, %v998
    %v1000 = vpop.f32.mrf.mxu0
    %v1001 = vpop.f32.mrf.mxu0
    %v1002 = vadd.f32 0.0, %v1001
    %v1003 = vpop.f32.mrf.mxu0
    %1004 = vdwg.mxu0
    %s1005 = scalar_lea.vmem [#allocation7], 144
    %1006 = vst.msk [vmem:[%s1005] sm:$0xff] %vm113, %v999
    %1007 = vst.msk [vmem:[%s1005 + $0x8] sm:$0xff] %vm113, %v1002
    %v1008 = vpack.c.bf16 %v949, %v946
    %1009 = vmatprep.subr.bf16.mxu0 0
    %1010 = vmatpush1.bf16.msra.mxu0 0
    %1011 = vmatprep.subr.bf16.mxu0 0
    %1012 = vmatpush1.bf16.msra.mxu0 0
    %1013 = vmatprep.subr.bf16.mxu0 0
    %1014 = vmatpush1.bf16.msra.mxu0 0
    %1015 = vmatprep.subr.bf16.mxu0 0
    %1016 = vmatpush1.bf16.msra.mxu0 0
    %1017 = vmatprep.subr.bf16.mxu0 0
    %1018 = vmatpush1.bf16.msra.mxu0 0
    %1019 = vmatprep.subr.bf16.mxu0 0
    %1020 = vmatpush1.bf16.msra.mxu0 0
    %1021 = vmatprep.subr.bf16.mxu0 0
    %1022 = vmatpush1.bf16.msra.mxu0 0
    %1023 = vmatprep.subr.bf16.mxu0 0
    %1024 = vmatpush1.bf16.msra.mxu0 %v1008
    %1025 = vmatprep.subr.bf16.mxu0 0
    %1026 = vmatpush2.bf16.msra.mxu0 0
    %1027 = vmatprep.subr.bf16.mxu0 0
    %1028 = vmatpush2.bf16.msra.mxu0 0
    %1029 = vmatprep.subr.bf16.mxu0 0
    %1030 = vmatpush2.bf16.msra.mxu0 0
    %1031 = vmatprep.subr.bf16.mxu0 0
    %1032 = vmatpush2.bf16.msra.mxu0 0
    %1033 = vmatprep.subr.bf16.mxu0 0
    %1034 = vmatpush2.bf16.msra.mxu0 0
    %1035 = vmatprep.subr.bf16.mxu0 0
    %1036 = vmatpush2.bf16.msra.mxu0 0
    %1037 = vmatprep.subr.bf16.mxu0 0
    %1038 = vmatpush2.bf16.msra.mxu0 0
    %1039 = vmatprep.subr.bf16.mxu0 0
    %1040 = vmatpush2.bf16.msra.mxu0 0
    %1041 = vmatprep.mubr.bf16.mxu0 0
    %1042 = vmatmul.mubr.bf16.gmra.mxu0 %v962
    %v1043 = vpop.f32.mrf.mxu0
    %v1044 = vadd.f32 0.0, %v1043
    %v1045 = vpop.f32.mrf.mxu0
    %v1046 = vpop.f32.mrf.mxu0
    %v1047 = vadd.f32 0.0, %v1046
    %v1048 = vpop.f32.mrf.mxu0
    %1049 = vdwg.mxu0
    %s1050 = scalar_lea.vmem [#allocation7], 160
    %1051 = vst.msk [vmem:[%s1050] sm:$0xff] %vm113, %v1044
    %1052 = vst.msk [vmem:[%s1050 + $0x8] sm:$0xff] %vm113, %v1047
    %v1053 = vpack.c.bf16 %v957, %v954
    %1054 = vmatprep.subr.bf16.mxu0 0
    %1055 = vmatpush1.bf16.msra.mxu0 0
    %1056 = vmatprep.subr.bf16.mxu0 0
    %1057 = vmatpush1.bf16.msra.mxu0 0
    %1058 = vmatprep.subr.bf16.mxu0 0
    %1059 = vmatpush1.bf16.msra.mxu0 0
    %1060 = vmatprep.subr.bf16.mxu0 0
    %1061 = vmatpush1.bf16.msra.mxu0 0
    %1062 = vmatprep.subr.bf16.mxu0 0
    %1063 = vmatpush1.bf16.msra.mxu0 0
    %1064 = vmatprep.subr.bf16.mxu0 0
    %1065 = vmatpush1.bf16.msra.mxu0 0
    %1066 = vmatprep.subr.bf16.mxu0 0
    %1067 = vmatpush1.bf16.msra.mxu0 0
    %1068 = vmatprep.subr.bf16.mxu0 0
    %1069 = vmatpush1.bf16.msra.mxu0 %v1053
    %1070 = vmatprep.subr.bf16.mxu0 0
    %1071 = vmatpush2.bf16.msra.mxu0 0
    %1072 = vmatprep.subr.bf16.mxu0 0
    %1073 = vmatpush2.bf16.msra.mxu0 0
    %1074 = vmatprep.subr.bf16.mxu0 0
    %1075 = vmatpush2.bf16.msra.mxu0 0
    %1076 = vmatprep.subr.bf16.mxu0 0
    %1077 = vmatpush2.bf16.msra.mxu0 0
    %1078 = vmatprep.subr.bf16.mxu0 0
    %1079 = vmatpush2.bf16.msra.mxu0 0
    %1080 = vmatprep.subr.bf16.mxu0 0
    %1081 = vmatpush2.bf16.msra.mxu0 0
    %1082 = vmatprep.subr.bf16.mxu0 0
    %1083 = vmatpush2.bf16.msra.mxu0 0
    %1084 = vmatprep.subr.bf16.mxu0 0
    %1085 = vmatpush2.bf16.msra.mxu0 0
    %1086 = vmatprep.mubr.bf16.mxu0 0
    %1087 = vmatmul.mubr.bf16.gmra.mxu0 %v962
    %v1088 = vpop.f32.mrf.mxu0
    %v1089 = vadd.f32 0.0, %v1088
    %v1090 = vpop.f32.mrf.mxu0
    %v1091 = vpop.f32.mrf.mxu0
    %v1092 = vadd.f32 0.0, %v1091
    %v1093 = vpop.f32.mrf.mxu0
    %1094 = vdwg.mxu0
    %s1095 = scalar_lea.vmem [#allocation7], 176
    %1096 = vst.msk [vmem:[%s1095] sm:$0xff] %vm113, %v1089
    %1097 = vst.msk [vmem:[%s1095 + $0x8] sm:$0xff] %vm113, %v1092
    %s1098 = sadd.s32 %s317, 4
    %s1099 = smul.u32 %s1098, 4
    %s1100 = sld [smem:[#allocation2 + %s1099]]
    %s1101 = sadd.s32 %s1099, 1
    %s1102 = sld [smem:[#allocation2 + %s1101]]
    %s1103 = sadd.s32 %s1099, 2
    %s1104 = sld [smem:[#allocation2 + %s1103]]
    %s1105 = sadd.s32 %s1099, 3
    %s1106 = sld [smem:[#allocation2 + %s1105]]
    %v1107 = vstv %s1100
    %v1108 = vmul.f32 %v1107, %v61
    %v1109 = vmul.f32 %v1107, %v62
    %v1110 = vstv %s1102
    %v1111 = vadd.f32 %v1108, %v1110
    %v1112 = vadd.f32 %v1109, %v1110
    %v1113 = vadd.f32 %v1111, 1.0
    %v1114 = vadd.f32 %v1112, 1.0
    %v1115 = vmul.f32 %v1113, 8.0
    %v1116 = vmul.f32 %v1114, 8.0
    %v1117 = vsub.f32 %v1115, 0.5
    %v1118 = vsub.f32 %v1116, 0.5
    %v1119 = vsub.f32 %v1117, %v53
    %v1120 = vsub.f32 %v1118, %v53
    %v1121 = vand.u32 2147483647, %v1119
    %v1122 = vand.u32 2147483647, %v1120
    %v1123 = vsub.f32 1.0, %v1121
    %v1124 = vsub.f32 1.0, %v1122
    %v1125 = vmax.f32 %v1123, 0.0
    %v1126 = vmax.f32 %v1124, 0.0
    %v1127 = vpack.c.bf16 %v1126, %v1125
    %v1128 = vstv %s1104
    %v1129 = vmul.f32 %v1128, %v87
    %v1130 = vstv %s1106
    %v1131 = vadd.f32 %v1129, %v1130
    %v1132 = vadd.f32 %v1131, 1.0
    %v1133 = vmul.f32 %v1132, 8.0
    %v1134 = vsub.f32 %v1133, 0.5
    %v1135 = vsub.f32 %v1134, %v49
    %v1136 = vsub.f32 %v1134, %v50
    %v1137 = vand.u32 2147483647, %v1135
    %v1138 = vand.u32 2147483647, %v1136
    %v1139 = vsub.f32 1.0, %v1137
    %v1140 = vsub.f32 1.0, %v1138
    %v1141 = vmax.f32 %v1139, 0.0
    %v1142 = vmax.f32 %v1140, 0.0
    %v1143 = vpack.c.bf16 %v1142, %v1141
    %s1144 = scalar_lea.vmem [#allocation6], 192
    %v1145 = vld [vmem:[%s1144] sm:$0xff]
    %v1146 = vld [vmem:[%s1144 + $0x8] sm:$0xff]
    %v1147 = vld [vmem:[%s1144 + $0x10] sm:$0xff]
    %v1148 = vld [vmem:[%s1144 + $0x18] sm:$0xff]
    %v1149 = vld [vmem:[%s1144 + $0x20] sm:$0xff]
    %v1150 = vld [vmem:[%s1144 + $0x28] sm:$0xff]
    %v1151 = vpack.c.bf16 %v1146, %v1145
    %v1152 = vpack.c.bf16 %v1148, %v1147
    %v1153 = vpack.c.bf16 %v1150, %v1149
    %v1155 = vsel %vm113, %v1151, 0
    %v1158 = vsel %vm113, %v1152, 0
    %v1161 = vsel %vm113, %v1153, 0
    %1163 = vmatprep.subr.bf16.mxu0 0
    %1164 = vmatpush1.bf16.msra.mxu0 0
    %1165 = vmatprep.subr.bf16.mxu0 0
    %1166 = vmatpush1.bf16.msra.mxu0 0
    %1167 = vmatprep.subr.bf16.mxu0 0
    %1168 = vmatpush1.bf16.msra.mxu0 0
    %1169 = vmatprep.subr.bf16.mxu0 0
    %1170 = vmatpush1.bf16.msra.mxu0 0
    %1171 = vmatprep.subr.bf16.mxu0 0
    %1172 = vmatpush1.bf16.msra.mxu0 0
    %1173 = vmatprep.subr.bf16.mxu0 0
    %1174 = vmatpush1.bf16.msra.mxu0 0
    %1175 = vmatprep.subr.bf16.mxu0 0
    %1176 = vmatpush1.bf16.msra.mxu0 0
    %1177 = vmatprep.subr.bf16.mxu0 0
    %1178 = vmatpush1.bf16.msra.mxu0 %v1143
    %1179 = vmatprep.subr.bf16.mxu0 0
    %1180 = vmatpush2.bf16.msra.mxu0 0
    %1181 = vmatprep.subr.bf16.mxu0 0
    %1182 = vmatpush2.bf16.msra.mxu0 0
    %1183 = vmatprep.subr.bf16.mxu0 0
    %1184 = vmatpush2.bf16.msra.mxu0 0
    %1185 = vmatprep.subr.bf16.mxu0 0
    %1186 = vmatpush2.bf16.msra.mxu0 0
    %1187 = vmatprep.subr.bf16.mxu0 0
    %1188 = vmatpush2.bf16.msra.mxu0 0
    %1189 = vmatprep.subr.bf16.mxu0 0
    %1190 = vmatpush2.bf16.msra.mxu0 0
    %1191 = vmatprep.subr.bf16.mxu0 0
    %1192 = vmatpush2.bf16.msra.mxu0 0
    %1193 = vmatprep.subr.bf16.mxu0 0
    %1194 = vmatpush2.bf16.msra.mxu0 0
    %1195 = vmatprep.mubr.bf16.mxu0 0
    %1196 = vmatmul.mubr.bf16.gmra.mxu0 %v1155
    %v1197 = vpop.f32.mrf.mxu0
    %v1198 = vadd.f32 0.0, %v1197
    %v1199 = vpop.f32.mrf.mxu0
    %v1200 = vpop.f32.mrf.mxu0
    %v1201 = vadd.f32 0.0, %v1200
    %v1202 = vpop.f32.mrf.mxu0
    %1203 = vmatprep.mubr.bf16.mxu0 0
    %1204 = vmatmul.mubr.bf16.gmra.mxu0 %v1158
    %v1205 = vpop.f32.mrf.mxu0
    %v1206 = vadd.f32 0.0, %v1205
    %v1207 = vpop.f32.mrf.mxu0
    %v1208 = vpop.f32.mrf.mxu0
    %v1209 = vadd.f32 0.0, %v1208
    %v1210 = vpop.f32.mrf.mxu0
    %1211 = vmatprep.mubr.bf16.mxu0 0
    %1212 = vmatmul.mubr.bf16.gmra.mxu0 %v1161
    %v1213 = vpop.f32.mrf.mxu0
    %v1214 = vadd.f32 0.0, %v1213
    %v1215 = vpop.f32.mrf.mxu0
    %v1216 = vpop.f32.mrf.mxu0
    %v1217 = vadd.f32 0.0, %v1216
    %v1218 = vpop.f32.mrf.mxu0
    %1219 = vdwg.mxu0
    %v1220 = vpack.c.bf16 %v1201, %v1198
    %v1222 = vsel %vm113, %v1127, 0
    %1224 = vmatprep.subr.bf16.mxu0 0
    %1225 = vmatpush1.bf16.msra.mxu0 0
    %1226 = vmatprep.subr.bf16.mxu0 0
    %1227 = vmatpush1.bf16.msra.mxu0 0
    %1228 = vmatprep.subr.bf16.mxu0 0
    %1229 = vmatpush1.bf16.msra.mxu0 0
    %1230 = vmatprep.subr.bf16.mxu0 0
    %1231 = vmatpush1.bf16.msra.mxu0 0
    %1232 = vmatprep.subr.bf16.mxu0 0
    %1233 = vmatpush1.bf16.msra.mxu0 0
    %1234 = vmatprep.subr.bf16.mxu0 0
    %1235 = vmatpush1.bf16.msra.mxu0 0
    %1236 = vmatprep.subr.bf16.mxu0 0
    %1237 = vmatpush1.bf16.msra.mxu0 0
    %1238 = vmatprep.subr.bf16.mxu0 0
    %1239 = vmatpush1.bf16.msra.mxu0 %v1220
    %1240 = vmatprep.subr.bf16.mxu0 0
    %1241 = vmatpush2.bf16.msra.mxu0 0
    %1242 = vmatprep.subr.bf16.mxu0 0
    %1243 = vmatpush2.bf16.msra.mxu0 0
    %1244 = vmatprep.subr.bf16.mxu0 0
    %1245 = vmatpush2.bf16.msra.mxu0 0
    %1246 = vmatprep.subr.bf16.mxu0 0
    %1247 = vmatpush2.bf16.msra.mxu0 0
    %1248 = vmatprep.subr.bf16.mxu0 0
    %1249 = vmatpush2.bf16.msra.mxu0 0
    %1250 = vmatprep.subr.bf16.mxu0 0
    %1251 = vmatpush2.bf16.msra.mxu0 0
    %1252 = vmatprep.subr.bf16.mxu0 0
    %1253 = vmatpush2.bf16.msra.mxu0 0
    %1254 = vmatprep.subr.bf16.mxu0 0
    %1255 = vmatpush2.bf16.msra.mxu0 0
    %1256 = vmatprep.mubr.bf16.mxu0 0
    %1257 = vmatmul.mubr.bf16.gmra.mxu0 %v1222
    %v1258 = vpop.f32.mrf.mxu0
    %v1259 = vadd.f32 0.0, %v1258
    %v1260 = vpop.f32.mrf.mxu0
    %v1261 = vpop.f32.mrf.mxu0
    %v1262 = vadd.f32 0.0, %v1261
    %v1263 = vpop.f32.mrf.mxu0
    %1264 = vdwg.mxu0
    %s1265 = scalar_lea.vmem [#allocation7], 192
    %1266 = vst.msk [vmem:[%s1265] sm:$0xff] %vm113, %v1259
    %1267 = vst.msk [vmem:[%s1265 + $0x8] sm:$0xff] %vm113, %v1262
    %v1268 = vpack.c.bf16 %v1209, %v1206
    %1269 = vmatprep.subr.bf16.mxu0 0
    %1270 = vmatpush1.bf16.msra.mxu0 0
    %1271 = vmatprep.subr.bf16.mxu0 0
    %1272 = vmatpush1.bf16.msra.mxu0 0
    %1273 = vmatprep.subr.bf16.mxu0 0
    %1274 = vmatpush1.bf16.msra.mxu0 0
    %1275 = vmatprep.subr.bf16.mxu0 0
    %1276 = vmatpush1.bf16.msra.mxu0 0
    %1277 = vmatprep.subr.bf16.mxu0 0
    %1278 = vmatpush1.bf16.msra.mxu0 0
    %1279 = vmatprep.subr.bf16.mxu0 0
    %1280 = vmatpush1.bf16.msra.mxu0 0
    %1281 = vmatprep.subr.bf16.mxu0 0
    %1282 = vmatpush1.bf16.msra.mxu0 0
    %1283 = vmatprep.subr.bf16.mxu0 0
    %1284 = vmatpush1.bf16.msra.mxu0 %v1268
    %1285 = vmatprep.subr.bf16.mxu0 0
    %1286 = vmatpush2.bf16.msra.mxu0 0
    %1287 = vmatprep.subr.bf16.mxu0 0
    %1288 = vmatpush2.bf16.msra.mxu0 0
    %1289 = vmatprep.subr.bf16.mxu0 0
    %1290 = vmatpush2.bf16.msra.mxu0 0
    %1291 = vmatprep.subr.bf16.mxu0 0
    %1292 = vmatpush2.bf16.msra.mxu0 0
    %1293 = vmatprep.subr.bf16.mxu0 0
    %1294 = vmatpush2.bf16.msra.mxu0 0
    %1295 = vmatprep.subr.bf16.mxu0 0
    %1296 = vmatpush2.bf16.msra.mxu0 0
    %1297 = vmatprep.subr.bf16.mxu0 0
    %1298 = vmatpush2.bf16.msra.mxu0 0
    %1299 = vmatprep.subr.bf16.mxu0 0
    %1300 = vmatpush2.bf16.msra.mxu0 0
    %1301 = vmatprep.mubr.bf16.mxu0 0
    %1302 = vmatmul.mubr.bf16.gmra.mxu0 %v1222
    %v1303 = vpop.f32.mrf.mxu0
    %v1304 = vadd.f32 0.0, %v1303
    %v1305 = vpop.f32.mrf.mxu0
    %v1306 = vpop.f32.mrf.mxu0
    %v1307 = vadd.f32 0.0, %v1306
    %v1308 = vpop.f32.mrf.mxu0
    %1309 = vdwg.mxu0
    %s1310 = scalar_lea.vmem [#allocation7], 208
    %1311 = vst.msk [vmem:[%s1310] sm:$0xff] %vm113, %v1304
    %1312 = vst.msk [vmem:[%s1310 + $0x8] sm:$0xff] %vm113, %v1307
    %v1313 = vpack.c.bf16 %v1217, %v1214
    %1314 = vmatprep.subr.bf16.mxu0 0
    %1315 = vmatpush1.bf16.msra.mxu0 0
    %1316 = vmatprep.subr.bf16.mxu0 0
    %1317 = vmatpush1.bf16.msra.mxu0 0
    %1318 = vmatprep.subr.bf16.mxu0 0
    %1319 = vmatpush1.bf16.msra.mxu0 0
    %1320 = vmatprep.subr.bf16.mxu0 0
    %1321 = vmatpush1.bf16.msra.mxu0 0
    %1322 = vmatprep.subr.bf16.mxu0 0
    %1323 = vmatpush1.bf16.msra.mxu0 0
    %1324 = vmatprep.subr.bf16.mxu0 0
    %1325 = vmatpush1.bf16.msra.mxu0 0
    %1326 = vmatprep.subr.bf16.mxu0 0
    %1327 = vmatpush1.bf16.msra.mxu0 0
    %1328 = vmatprep.subr.bf16.mxu0 0
    %1329 = vmatpush1.bf16.msra.mxu0 %v1313
    %1330 = vmatprep.subr.bf16.mxu0 0
    %1331 = vmatpush2.bf16.msra.mxu0 0
    %1332 = vmatprep.subr.bf16.mxu0 0
    %1333 = vmatpush2.bf16.msra.mxu0 0
    %1334 = vmatprep.subr.bf16.mxu0 0
    %1335 = vmatpush2.bf16.msra.mxu0 0
    %1336 = vmatprep.subr.bf16.mxu0 0
    %1337 = vmatpush2.bf16.msra.mxu0 0
    %1338 = vmatprep.subr.bf16.mxu0 0
    %1339 = vmatpush2.bf16.msra.mxu0 0
    %1340 = vmatprep.subr.bf16.mxu0 0
    %1341 = vmatpush2.bf16.msra.mxu0 0
    %1342 = vmatprep.subr.bf16.mxu0 0
    %1343 = vmatpush2.bf16.msra.mxu0 0
    %1344 = vmatprep.subr.bf16.mxu0 0
    %1345 = vmatpush2.bf16.msra.mxu0 0
    %1346 = vmatprep.mubr.bf16.mxu0 0
    %1347 = vmatmul.mubr.bf16.gmra.mxu0 %v1222
    %v1348 = vpop.f32.mrf.mxu0
    %v1349 = vadd.f32 0.0, %v1348
    %v1350 = vpop.f32.mrf.mxu0
    %v1351 = vpop.f32.mrf.mxu0
    %v1352 = vadd.f32 0.0, %v1351
    %v1353 = vpop.f32.mrf.mxu0
    %1354 = vdwg.mxu0
    %s1355 = scalar_lea.vmem [#allocation7], 224
    %1356 = vst.msk [vmem:[%s1355] sm:$0xff] %vm113, %v1349
    %1357 = vst.msk [vmem:[%s1355 + $0x8] sm:$0xff] %vm113, %v1352
    %s1358 = sadd.s32 %s317, 5
    %s1359 = smul.u32 %s1358, 4
    %s1360 = sld [smem:[#allocation2 + %s1359]]
    %s1361 = sadd.s32 %s1359, 1
    %s1362 = sld [smem:[#allocation2 + %s1361]]
    %s1363 = sadd.s32 %s1359, 2
    %s1364 = sld [smem:[#allocation2 + %s1363]]
    %s1365 = sadd.s32 %s1359, 3
    %s1366 = sld [smem:[#allocation2 + %s1365]]
    %v1367 = vstv %s1360
    %v1368 = vmul.f32 %v1367, %v61
    %v1369 = vmul.f32 %v1367, %v62
    %v1370 = vstv %s1362
    %v1371 = vadd.f32 %v1368, %v1370
    %v1372 = vadd.f32 %v1369, %v1370
    %v1373 = vadd.f32 %v1371, 1.0
    %v1374 = vadd.f32 %v1372, 1.0
    %v1375 = vmul.f32 %v1373, 8.0
    %v1376 = vmul.f32 %v1374, 8.0
    %v1377 = vsub.f32 %v1375, 0.5
    %v1378 = vsub.f32 %v1376, 0.5
    %v1379 = vsub.f32 %v1377, %v53
    %v1380 = vsub.f32 %v1378, %v53
    %v1381 = vand.u32 2147483647, %v1379
    %v1382 = vand.u32 2147483647, %v1380
    %v1383 = vsub.f32 1.0, %v1381
    %v1384 = vsub.f32 1.0, %v1382
    %v1385 = vmax.f32 %v1383, 0.0
    %v1386 = vmax.f32 %v1384, 0.0
    %v1387 = vpack.c.bf16 %v1386, %v1385
    %v1388 = vstv %s1364
    %v1389 = vmul.f32 %v1388, %v87
    %v1390 = vstv %s1366
    %v1391 = vadd.f32 %v1389, %v1390
    %v1392 = vadd.f32 %v1391, 1.0
    %v1393 = vmul.f32 %v1392, 8.0
    %v1394 = vsub.f32 %v1393, 0.5
    %v1395 = vsub.f32 %v1394, %v49
    %v1396 = vsub.f32 %v1394, %v50
    %v1397 = vand.u32 2147483647, %v1395
    %v1398 = vand.u32 2147483647, %v1396
    %v1399 = vsub.f32 1.0, %v1397
    %v1400 = vsub.f32 1.0, %v1398
    %v1401 = vmax.f32 %v1399, 0.0
    %v1402 = vmax.f32 %v1400, 0.0
    %v1403 = vpack.c.bf16 %v1402, %v1401
    %s1404 = scalar_lea.vmem [#allocation6], 240
    %v1405 = vld [vmem:[%s1404] sm:$0xff]
    %v1406 = vld [vmem:[%s1404 + $0x8] sm:$0xff]
    %v1407 = vld [vmem:[%s1404 + $0x10] sm:$0xff]
    %v1408 = vld [vmem:[%s1404 + $0x18] sm:$0xff]
    %v1409 = vld [vmem:[%s1404 + $0x20] sm:$0xff]
    %v1410 = vld [vmem:[%s1404 + $0x28] sm:$0xff]
    %v1411 = vpack.c.bf16 %v1406, %v1405
    %v1412 = vpack.c.bf16 %v1408, %v1407
    %v1413 = vpack.c.bf16 %v1410, %v1409
    %v1415 = vsel %vm113, %v1411, 0
    %v1418 = vsel %vm113, %v1412, 0
    %v1421 = vsel %vm113, %v1413, 0
    %1423 = vmatprep.subr.bf16.mxu0 0
    %1424 = vmatpush1.bf16.msra.mxu0 0
    %1425 = vmatprep.subr.bf16.mxu0 0
    %1426 = vmatpush1.bf16.msra.mxu0 0
    %1427 = vmatprep.subr.bf16.mxu0 0
    %1428 = vmatpush1.bf16.msra.mxu0 0
    %1429 = vmatprep.subr.bf16.mxu0 0
    %1430 = vmatpush1.bf16.msra.mxu0 0
    %1431 = vmatprep.subr.bf16.mxu0 0
    %1432 = vmatpush1.bf16.msra.mxu0 0
    %1433 = vmatprep.subr.bf16.mxu0 0
    %1434 = vmatpush1.bf16.msra.mxu0 0
    %1435 = vmatprep.subr.bf16.mxu0 0
    %1436 = vmatpush1.bf16.msra.mxu0 0
    %1437 = vmatprep.subr.bf16.mxu0 0
    %1438 = vmatpush1.bf16.msra.mxu0 %v1403
    %1439 = vmatprep.subr.bf16.mxu0 0
    %1440 = vmatpush2.bf16.msra.mxu0 0
    %1441 = vmatprep.subr.bf16.mxu0 0
    %1442 = vmatpush2.bf16.msra.mxu0 0
    %1443 = vmatprep.subr.bf16.mxu0 0
    %1444 = vmatpush2.bf16.msra.mxu0 0
    %1445 = vmatprep.subr.bf16.mxu0 0
    %1446 = vmatpush2.bf16.msra.mxu0 0
    %1447 = vmatprep.subr.bf16.mxu0 0
    %1448 = vmatpush2.bf16.msra.mxu0 0
    %1449 = vmatprep.subr.bf16.mxu0 0
    %1450 = vmatpush2.bf16.msra.mxu0 0
    %1451 = vmatprep.subr.bf16.mxu0 0
    %1452 = vmatpush2.bf16.msra.mxu0 0
    %1453 = vmatprep.subr.bf16.mxu0 0
    %1454 = vmatpush2.bf16.msra.mxu0 0
    %1455 = vmatprep.mubr.bf16.mxu0 0
    %1456 = vmatmul.mubr.bf16.gmra.mxu0 %v1415
    %v1457 = vpop.f32.mrf.mxu0
    %v1458 = vadd.f32 0.0, %v1457
    %v1459 = vpop.f32.mrf.mxu0
    %v1460 = vpop.f32.mrf.mxu0
    %v1461 = vadd.f32 0.0, %v1460
    %v1462 = vpop.f32.mrf.mxu0
    %1463 = vmatprep.mubr.bf16.mxu0 0
    %1464 = vmatmul.mubr.bf16.gmra.mxu0 %v1418
    %v1465 = vpop.f32.mrf.mxu0
    %v1466 = vadd.f32 0.0, %v1465
    %v1467 = vpop.f32.mrf.mxu0
    %v1468 = vpop.f32.mrf.mxu0
    %v1469 = vadd.f32 0.0, %v1468
    %v1470 = vpop.f32.mrf.mxu0
    %1471 = vmatprep.mubr.bf16.mxu0 0
    %1472 = vmatmul.mubr.bf16.gmra.mxu0 %v1421
    %v1473 = vpop.f32.mrf.mxu0
    %v1474 = vadd.f32 0.0, %v1473
    %v1475 = vpop.f32.mrf.mxu0
    %v1476 = vpop.f32.mrf.mxu0
    %v1477 = vadd.f32 0.0, %v1476
    %v1478 = vpop.f32.mrf.mxu0
    %1479 = vdwg.mxu0
    %v1480 = vpack.c.bf16 %v1461, %v1458
    %v1482 = vsel %vm113, %v1387, 0
    %1484 = vmatprep.subr.bf16.mxu0 0
    %1485 = vmatpush1.bf16.msra.mxu0 0
    %1486 = vmatprep.subr.bf16.mxu0 0
    %1487 = vmatpush1.bf16.msra.mxu0 0
    %1488 = vmatprep.subr.bf16.mxu0 0
    %1489 = vmatpush1.bf16.msra.mxu0 0
    %1490 = vmatprep.subr.bf16.mxu0 0
    %1491 = vmatpush1.bf16.msra.mxu0 0
    %1492 = vmatprep.subr.bf16.mxu0 0
    %1493 = vmatpush1.bf16.msra.mxu0 0
    %1494 = vmatprep.subr.bf16.mxu0 0
    %1495 = vmatpush1.bf16.msra.mxu0 0
    %1496 = vmatprep.subr.bf16.mxu0 0
    %1497 = vmatpush1.bf16.msra.mxu0 0
    %1498 = vmatprep.subr.bf16.mxu0 0
    %1499 = vmatpush1.bf16.msra.mxu0 %v1480
    %1500 = vmatprep.subr.bf16.mxu0 0
    %1501 = vmatpush2.bf16.msra.mxu0 0
    %1502 = vmatprep.subr.bf16.mxu0 0
    %1503 = vmatpush2.bf16.msra.mxu0 0
    %1504 = vmatprep.subr.bf16.mxu0 0
    %1505 = vmatpush2.bf16.msra.mxu0 0
    %1506 = vmatprep.subr.bf16.mxu0 0
    %1507 = vmatpush2.bf16.msra.mxu0 0
    %1508 = vmatprep.subr.bf16.mxu0 0
    %1509 = vmatpush2.bf16.msra.mxu0 0
    %1510 = vmatprep.subr.bf16.mxu0 0
    %1511 = vmatpush2.bf16.msra.mxu0 0
    %1512 = vmatprep.subr.bf16.mxu0 0
    %1513 = vmatpush2.bf16.msra.mxu0 0
    %1514 = vmatprep.subr.bf16.mxu0 0
    %1515 = vmatpush2.bf16.msra.mxu0 0
    %1516 = vmatprep.mubr.bf16.mxu0 0
    %1517 = vmatmul.mubr.bf16.gmra.mxu0 %v1482
    %v1518 = vpop.f32.mrf.mxu0
    %v1519 = vadd.f32 0.0, %v1518
    %v1520 = vpop.f32.mrf.mxu0
    %v1521 = vpop.f32.mrf.mxu0
    %v1522 = vadd.f32 0.0, %v1521
    %v1523 = vpop.f32.mrf.mxu0
    %1524 = vdwg.mxu0
    %s1525 = scalar_lea.vmem [#allocation7], 240
    %1526 = vst.msk [vmem:[%s1525] sm:$0xff] %vm113, %v1519
    %1527 = vst.msk [vmem:[%s1525 + $0x8] sm:$0xff] %vm113, %v1522
    %v1528 = vpack.c.bf16 %v1469, %v1466
    %1529 = vmatprep.subr.bf16.mxu0 0
    %1530 = vmatpush1.bf16.msra.mxu0 0
    %1531 = vmatprep.subr.bf16.mxu0 0
    %1532 = vmatpush1.bf16.msra.mxu0 0
    %1533 = vmatprep.subr.bf16.mxu0 0
    %1534 = vmatpush1.bf16.msra.mxu0 0
    %1535 = vmatprep.subr.bf16.mxu0 0
    %1536 = vmatpush1.bf16.msra.mxu0 0
    %1537 = vmatprep.subr.bf16.mxu0 0
    %1538 = vmatpush1.bf16.msra.mxu0 0
    %1539 = vmatprep.subr.bf16.mxu0 0
    %1540 = vmatpush1.bf16.msra.mxu0 0
    %1541 = vmatprep.subr.bf16.mxu0 0
    %1542 = vmatpush1.bf16.msra.mxu0 0
    %1543 = vmatprep.subr.bf16.mxu0 0
    %1544 = vmatpush1.bf16.msra.mxu0 %v1528
    %1545 = vmatprep.subr.bf16.mxu0 0
    %1546 = vmatpush2.bf16.msra.mxu0 0
    %1547 = vmatprep.subr.bf16.mxu0 0
    %1548 = vmatpush2.bf16.msra.mxu0 0
    %1549 = vmatprep.subr.bf16.mxu0 0
    %1550 = vmatpush2.bf16.msra.mxu0 0
    %1551 = vmatprep.subr.bf16.mxu0 0
    %1552 = vmatpush2.bf16.msra.mxu0 0
    %1553 = vmatprep.subr.bf16.mxu0 0
    %1554 = vmatpush2.bf16.msra.mxu0 0
    %1555 = vmatprep.subr.bf16.mxu0 0
    %1556 = vmatpush2.bf16.msra.mxu0 0
    %1557 = vmatprep.subr.bf16.mxu0 0
    %1558 = vmatpush2.bf16.msra.mxu0 0
    %1559 = vmatprep.subr.bf16.mxu0 0
    %1560 = vmatpush2.bf16.msra.mxu0 0
    %1561 = vmatprep.mubr.bf16.mxu0 0
    %1562 = vmatmul.mubr.bf16.gmra.mxu0 %v1482
    %v1563 = vpop.f32.mrf.mxu0
    %v1564 = vadd.f32 0.0, %v1563
    %v1565 = vpop.f32.mrf.mxu0
    %v1566 = vpop.f32.mrf.mxu0
    %v1567 = vadd.f32 0.0, %v1566
    %v1568 = vpop.f32.mrf.mxu0
    %1569 = vdwg.mxu0
    %s1570 = scalar_lea.vmem [#allocation7], 256
    %1571 = vst.msk [vmem:[%s1570] sm:$0xff] %vm113, %v1564
    %1572 = vst.msk [vmem:[%s1570 + $0x8] sm:$0xff] %vm113, %v1567
    %v1573 = vpack.c.bf16 %v1477, %v1474
    %1574 = vmatprep.subr.bf16.mxu0 0
    %1575 = vmatpush1.bf16.msra.mxu0 0
    %1576 = vmatprep.subr.bf16.mxu0 0
    %1577 = vmatpush1.bf16.msra.mxu0 0
    %1578 = vmatprep.subr.bf16.mxu0 0
    %1579 = vmatpush1.bf16.msra.mxu0 0
    %1580 = vmatprep.subr.bf16.mxu0 0
    %1581 = vmatpush1.bf16.msra.mxu0 0
    %1582 = vmatprep.subr.bf16.mxu0 0
    %1583 = vmatpush1.bf16.msra.mxu0 0
    %1584 = vmatprep.subr.bf16.mxu0 0
    %1585 = vmatpush1.bf16.msra.mxu0 0
    %1586 = vmatprep.subr.bf16.mxu0 0
    %1587 = vmatpush1.bf16.msra.mxu0 0
    %1588 = vmatprep.subr.bf16.mxu0 0
    %1589 = vmatpush1.bf16.msra.mxu0 %v1573
    %1590 = vmatprep.subr.bf16.mxu0 0
    %1591 = vmatpush2.bf16.msra.mxu0 0
    %1592 = vmatprep.subr.bf16.mxu0 0
    %1593 = vmatpush2.bf16.msra.mxu0 0
    %1594 = vmatprep.subr.bf16.mxu0 0
    %1595 = vmatpush2.bf16.msra.mxu0 0
    %1596 = vmatprep.subr.bf16.mxu0 0
    %1597 = vmatpush2.bf16.msra.mxu0 0
    %1598 = vmatprep.subr.bf16.mxu0 0
    %1599 = vmatpush2.bf16.msra.mxu0 0
    %1600 = vmatprep.subr.bf16.mxu0 0
    %1601 = vmatpush2.bf16.msra.mxu0 0
    %1602 = vmatprep.subr.bf16.mxu0 0
    %1603 = vmatpush2.bf16.msra.mxu0 0
    %1604 = vmatprep.subr.bf16.mxu0 0
    %1605 = vmatpush2.bf16.msra.mxu0 0
    %1606 = vmatprep.mubr.bf16.mxu0 0
    %1607 = vmatmul.mubr.bf16.gmra.mxu0 %v1482
    %v1608 = vpop.f32.mrf.mxu0
    %v1609 = vadd.f32 0.0, %v1608
    %v1610 = vpop.f32.mrf.mxu0
    %v1611 = vpop.f32.mrf.mxu0
    %v1612 = vadd.f32 0.0, %v1611
    %v1613 = vpop.f32.mrf.mxu0
    %1614 = vdwg.mxu0
    %s1615 = scalar_lea.vmem [#allocation7], 272
    %1616 = vst.msk [vmem:[%s1615] sm:$0xff] %vm113, %v1609
    %1617 = vst.msk [vmem:[%s1615 + $0x8] sm:$0xff] %vm113, %v1612
    %s1618 = sadd.s32 %s317, 6
    %s1619 = smul.u32 %s1618, 4
    %s1620 = sld [smem:[#allocation2 + %s1619]]
    %s1621 = sadd.s32 %s1619, 1
    %s1622 = sld [smem:[#allocation2 + %s1621]]
    %s1623 = sadd.s32 %s1619, 2
    %s1624 = sld [smem:[#allocation2 + %s1623]]
    %s1625 = sadd.s32 %s1619, 3
    %s1626 = sld [smem:[#allocation2 + %s1625]]
    %v1627 = vstv %s1620
    %v1628 = vmul.f32 %v1627, %v61
    %v1629 = vmul.f32 %v1627, %v62
    %v1630 = vstv %s1622
    %v1631 = vadd.f32 %v1628, %v1630
    %v1632 = vadd.f32 %v1629, %v1630
    %v1633 = vadd.f32 %v1631, 1.0
    %v1634 = vadd.f32 %v1632, 1.0
    %v1635 = vmul.f32 %v1633, 8.0
    %v1636 = vmul.f32 %v1634, 8.0
    %v1637 = vsub.f32 %v1635, 0.5
    %v1638 = vsub.f32 %v1636, 0.5
    %v1639 = vsub.f32 %v1637, %v53
    %v1640 = vsub.f32 %v1638, %v53
    %v1641 = vand.u32 2147483647, %v1639
    %v1642 = vand.u32 2147483647, %v1640
    %v1643 = vsub.f32 1.0, %v1641
    %v1644 = vsub.f32 1.0, %v1642
    %v1645 = vmax.f32 %v1643, 0.0
    %v1646 = vmax.f32 %v1644, 0.0
    %v1647 = vpack.c.bf16 %v1646, %v1645
    %v1648 = vstv %s1624
    %v1649 = vmul.f32 %v1648, %v87
    %v1650 = vstv %s1626
    %v1651 = vadd.f32 %v1649, %v1650
    %v1652 = vadd.f32 %v1651, 1.0
    %v1653 = vmul.f32 %v1652, 8.0
    %v1654 = vsub.f32 %v1653, 0.5
    %v1655 = vsub.f32 %v1654, %v49
    %v1656 = vsub.f32 %v1654, %v50
    %v1657 = vand.u32 2147483647, %v1655
    %v1658 = vand.u32 2147483647, %v1656
    %v1659 = vsub.f32 1.0, %v1657
    %v1660 = vsub.f32 1.0, %v1658
    %v1661 = vmax.f32 %v1659, 0.0
    %v1662 = vmax.f32 %v1660, 0.0
    %v1663 = vpack.c.bf16 %v1662, %v1661
    %s1664 = scalar_lea.vmem [#allocation6], 288
    %v1665 = vld [vmem:[%s1664] sm:$0xff]
    %v1666 = vld [vmem:[%s1664 + $0x8] sm:$0xff]
    %v1667 = vld [vmem:[%s1664 + $0x10] sm:$0xff]
    %v1668 = vld [vmem:[%s1664 + $0x18] sm:$0xff]
    %v1669 = vld [vmem:[%s1664 + $0x20] sm:$0xff]
    %v1670 = vld [vmem:[%s1664 + $0x28] sm:$0xff]
    %v1671 = vpack.c.bf16 %v1666, %v1665
    %v1672 = vpack.c.bf16 %v1668, %v1667
    %v1673 = vpack.c.bf16 %v1670, %v1669
    %v1675 = vsel %vm113, %v1671, 0
    %v1678 = vsel %vm113, %v1672, 0
    %v1681 = vsel %vm113, %v1673, 0
    %1683 = vmatprep.subr.bf16.mxu0 0
    %1684 = vmatpush1.bf16.msra.mxu0 0
    %1685 = vmatprep.subr.bf16.mxu0 0
    %1686 = vmatpush1.bf16.msra.mxu0 0
    %1687 = vmatprep.subr.bf16.mxu0 0
    %1688 = vmatpush1.bf16.msra.mxu0 0
    %1689 = vmatprep.subr.bf16.mxu0 0
    %1690 = vmatpush1.bf16.msra.mxu0 0
    %1691 = vmatprep.subr.bf16.mxu0 0
    %1692 = vmatpush1.bf16.msra.mxu0 0
    %1693 = vmatprep.subr.bf16.mxu0 0
    %1694 = vmatpush1.bf16.msra.mxu0 0
    %1695 = vmatprep.subr.bf16.mxu0 0
    %1696 = vmatpush1.bf16.msra.mxu0 0
    %1697 = vmatprep.subr.bf16.mxu0 0
    %1698 = vmatpush1.bf16.msra.mxu0 %v1663
    %1699 = vmatprep.subr.bf16.mxu0 0
    %1700 = vmatpush2.bf16.msra.mxu0 0
    %1701 = vmatprep.subr.bf16.mxu0 0
    %1702 = vmatpush2.bf16.msra.mxu0 0
    %1703 = vmatprep.subr.bf16.mxu0 0
    %1704 = vmatpush2.bf16.msra.mxu0 0
    %1705 = vmatprep.subr.bf16.mxu0 0
    %1706 = vmatpush2.bf16.msra.mxu0 0
    %1707 = vmatprep.subr.bf16.mxu0 0
    %1708 = vmatpush2.bf16.msra.mxu0 0
    %1709 = vmatprep.subr.bf16.mxu0 0
    %1710 = vmatpush2.bf16.msra.mxu0 0
    %1711 = vmatprep.subr.bf16.mxu0 0
    %1712 = vmatpush2.bf16.msra.mxu0 0
    %1713 = vmatprep.subr.bf16.mxu0 0
    %1714 = vmatpush2.bf16.msra.mxu0 0
    %1715 = vmatprep.mubr.bf16.mxu0 0
    %1716 = vmatmul.mubr.bf16.gmra.mxu0 %v1675
    %v1717 = vpop.f32.mrf.mxu0
    %v1718 = vadd.f32 0.0, %v1717
    %v1719 = vpop.f32.mrf.mxu0
    %v1720 = vpop.f32.mrf.mxu0
    %v1721 = vadd.f32 0.0, %v1720
    %v1722 = vpop.f32.mrf.mxu0
    %1723 = vmatprep.mubr.bf16.mxu0 0
    %1724 = vmatmul.mubr.bf16.gmra.mxu0 %v1678
    %v1725 = vpop.f32.mrf.mxu0
    %v1726 = vadd.f32 0.0, %v1725
    %v1727 = vpop.f32.mrf.mxu0
    %v1728 = vpop.f32.mrf.mxu0
    %v1729 = vadd.f32 0.0, %v1728
    %v1730 = vpop.f32.mrf.mxu0
    %1731 = vmatprep.mubr.bf16.mxu0 0
    %1732 = vmatmul.mubr.bf16.gmra.mxu0 %v1681
    %v1733 = vpop.f32.mrf.mxu0
    %v1734 = vadd.f32 0.0, %v1733
    %v1735 = vpop.f32.mrf.mxu0
    %v1736 = vpop.f32.mrf.mxu0
    %v1737 = vadd.f32 0.0, %v1736
    %v1738 = vpop.f32.mrf.mxu0
    %1739 = vdwg.mxu0
    %v1740 = vpack.c.bf16 %v1721, %v1718
    %v1742 = vsel %vm113, %v1647, 0
    %1744 = vmatprep.subr.bf16.mxu0 0
    %1745 = vmatpush1.bf16.msra.mxu0 0
    %1746 = vmatprep.subr.bf16.mxu0 0
    %1747 = vmatpush1.bf16.msra.mxu0 0
    %1748 = vmatprep.subr.bf16.mxu0 0
    %1749 = vmatpush1.bf16.msra.mxu0 0
    %1750 = vmatprep.subr.bf16.mxu0 0
    %1751 = vmatpush1.bf16.msra.mxu0 0
    %1752 = vmatprep.subr.bf16.mxu0 0
    %1753 = vmatpush1.bf16.msra.mxu0 0
    %1754 = vmatprep.subr.bf16.mxu0 0
    %1755 = vmatpush1.bf16.msra.mxu0 0
    %1756 = vmatprep.subr.bf16.mxu0 0
    %1757 = vmatpush1.bf16.msra.mxu0 0
    %1758 = vmatprep.subr.bf16.mxu0 0
    %1759 = vmatpush1.bf16.msra.mxu0 %v1740
    %1760 = vmatprep.subr.bf16.mxu0 0
    %1761 = vmatpush2.bf16.msra.mxu0 0
    %1762 = vmatprep.subr.bf16.mxu0 0
    %1763 = vmatpush2.bf16.msra.mxu0 0
    %1764 = vmatprep.subr.bf16.mxu0 0
    %1765 = vmatpush2.bf16.msra.mxu0 0
    %1766 = vmatprep.subr.bf16.mxu0 0
    %1767 = vmatpush2.bf16.msra.mxu0 0
    %1768 = vmatprep.subr.bf16.mxu0 0
    %1769 = vmatpush2.bf16.msra.mxu0 0
    %1770 = vmatprep.subr.bf16.mxu0 0
    %1771 = vmatpush2.bf16.msra.mxu0 0
    %1772 = vmatprep.subr.bf16.mxu0 0
    %1773 = vmatpush2.bf16.msra.mxu0 0
    %1774 = vmatprep.subr.bf16.mxu0 0
    %1775 = vmatpush2.bf16.msra.mxu0 0
    %1776 = vmatprep.mubr.bf16.mxu0 0
    %1777 = vmatmul.mubr.bf16.gmra.mxu0 %v1742
    %v1778 = vpop.f32.mrf.mxu0
    %v1779 = vadd.f32 0.0, %v1778
    %v1780 = vpop.f32.mrf.mxu0
    %v1781 = vpop.f32.mrf.mxu0
    %v1782 = vadd.f32 0.0, %v1781
    %v1783 = vpop.f32.mrf.mxu0
    %1784 = vdwg.mxu0
    %s1785 = scalar_lea.vmem [#allocation7], 288
    %1786 = vst.msk [vmem:[%s1785] sm:$0xff] %vm113, %v1779
    %1787 = vst.msk [vmem:[%s1785 + $0x8] sm:$0xff] %vm113, %v1782
    %v1788 = vpack.c.bf16 %v1729, %v1726
    %1789 = vmatprep.subr.bf16.mxu0 0
    %1790 = vmatpush1.bf16.msra.mxu0 0
    %1791 = vmatprep.subr.bf16.mxu0 0
    %1792 = vmatpush1.bf16.msra.mxu0 0
    %1793 = vmatprep.subr.bf16.mxu0 0
    %1794 = vmatpush1.bf16.msra.mxu0 0
    %1795 = vmatprep.subr.bf16.mxu0 0
    %1796 = vmatpush1.bf16.msra.mxu0 0
    %1797 = vmatprep.subr.bf16.mxu0 0
    %1798 = vmatpush1.bf16.msra.mxu0 0
    %1799 = vmatprep.subr.bf16.mxu0 0
    %1800 = vmatpush1.bf16.msra.mxu0 0
    %1801 = vmatprep.subr.bf16.mxu0 0
    %1802 = vmatpush1.bf16.msra.mxu0 0
    %1803 = vmatprep.subr.bf16.mxu0 0
    %1804 = vmatpush1.bf16.msra.mxu0 %v1788
    %1805 = vmatprep.subr.bf16.mxu0 0
    %1806 = vmatpush2.bf16.msra.mxu0 0
    %1807 = vmatprep.subr.bf16.mxu0 0
    %1808 = vmatpush2.bf16.msra.mxu0 0
    %1809 = vmatprep.subr.bf16.mxu0 0
    %1810 = vmatpush2.bf16.msra.mxu0 0
    %1811 = vmatprep.subr.bf16.mxu0 0
    %1812 = vmatpush2.bf16.msra.mxu0 0
    %1813 = vmatprep.subr.bf16.mxu0 0
    %1814 = vmatpush2.bf16.msra.mxu0 0
    %1815 = vmatprep.subr.bf16.mxu0 0
    %1816 = vmatpush2.bf16.msra.mxu0 0
    %1817 = vmatprep.subr.bf16.mxu0 0
    %1818 = vmatpush2.bf16.msra.mxu0 0
    %1819 = vmatprep.subr.bf16.mxu0 0
    %1820 = vmatpush2.bf16.msra.mxu0 0
    %1821 = vmatprep.mubr.bf16.mxu0 0
    %1822 = vmatmul.mubr.bf16.gmra.mxu0 %v1742
    %v1823 = vpop.f32.mrf.mxu0
    %v1824 = vadd.f32 0.0, %v1823
    %v1825 = vpop.f32.mrf.mxu0
    %v1826 = vpop.f32.mrf.mxu0
    %v1827 = vadd.f32 0.0, %v1826
    %v1828 = vpop.f32.mrf.mxu0
    %1829 = vdwg.mxu0
    %s1830 = scalar_lea.vmem [#allocation7], 304
    %1831 = vst.msk [vmem:[%s1830] sm:$0xff] %vm113, %v1824
    %1832 = vst.msk [vmem:[%s1830 + $0x8] sm:$0xff] %vm113, %v1827
    %v1833 = vpack.c.bf16 %v1737, %v1734
    %1834 = vmatprep.subr.bf16.mxu0 0
    %1835 = vmatpush1.bf16.msra.mxu0 0
    %1836 = vmatprep.subr.bf16.mxu0 0
    %1837 = vmatpush1.bf16.msra.mxu0 0
    %1838 = vmatprep.subr.bf16.mxu0 0
    %1839 = vmatpush1.bf16.msra.mxu0 0
    %1840 = vmatprep.subr.bf16.mxu0 0
    %1841 = vmatpush1.bf16.msra.mxu0 0
    %1842 = vmatprep.subr.bf16.mxu0 0
    %1843 = vmatpush1.bf16.msra.mxu0 0
    %1844 = vmatprep.subr.bf16.mxu0 0
    %1845 = vmatpush1.bf16.msra.mxu0 0
    %1846 = vmatprep.subr.bf16.mxu0 0
    %1847 = vmatpush1.bf16.msra.mxu0 0
    %1848 = vmatprep.subr.bf16.mxu0 0
    %1849 = vmatpush1.bf16.msra.mxu0 %v1833
    %1850 = vmatprep.subr.bf16.mxu0 0
    %1851 = vmatpush2.bf16.msra.mxu0 0
    %1852 = vmatprep.subr.bf16.mxu0 0
    %1853 = vmatpush2.bf16.msra.mxu0 0
    %1854 = vmatprep.subr.bf16.mxu0 0
    %1855 = vmatpush2.bf16.msra.mxu0 0
    %1856 = vmatprep.subr.bf16.mxu0 0
    %1857 = vmatpush2.bf16.msra.mxu0 0
    %1858 = vmatprep.subr.bf16.mxu0 0
    %1859 = vmatpush2.bf16.msra.mxu0 0
    %1860 = vmatprep.subr.bf16.mxu0 0
    %1861 = vmatpush2.bf16.msra.mxu0 0
    %1862 = vmatprep.subr.bf16.mxu0 0
    %1863 = vmatpush2.bf16.msra.mxu0 0
    %1864 = vmatprep.subr.bf16.mxu0 0
    %1865 = vmatpush2.bf16.msra.mxu0 0
    %1866 = vmatprep.mubr.bf16.mxu0 0
    %1867 = vmatmul.mubr.bf16.gmra.mxu0 %v1742
    %v1868 = vpop.f32.mrf.mxu0
    %v1869 = vadd.f32 0.0, %v1868
    %v1870 = vpop.f32.mrf.mxu0
    %v1871 = vpop.f32.mrf.mxu0
    %v1872 = vadd.f32 0.0, %v1871
    %v1873 = vpop.f32.mrf.mxu0
    %1874 = vdwg.mxu0
    %s1875 = scalar_lea.vmem [#allocation7], 320
    %1876 = vst.msk [vmem:[%s1875] sm:$0xff] %vm113, %v1869
    %1877 = vst.msk [vmem:[%s1875 + $0x8] sm:$0xff] %vm113, %v1872
    %s1878 = sadd.s32 %s317, 7
    %s1879 = smul.u32 %s1878, 4
    %s1880 = sld [smem:[#allocation2 + %s1879]]
    %s1881 = sadd.s32 %s1879, 1
    %s1882 = sld [smem:[#allocation2 + %s1881]]
    %s1883 = sadd.s32 %s1879, 2
    %s1884 = sld [smem:[#allocation2 + %s1883]]
    %s1885 = sadd.s32 %s1879, 3
    %s1886 = sld [smem:[#allocation2 + %s1885]]
    %v1887 = vstv %s1880
    %v1888 = vmul.f32 %v1887, %v61
    %v1889 = vmul.f32 %v1887, %v62
    %v1890 = vstv %s1882
    %v1891 = vadd.f32 %v1888, %v1890
    %v1892 = vadd.f32 %v1889, %v1890
    %v1893 = vadd.f32 %v1891, 1.0
    %v1894 = vadd.f32 %v1892, 1.0
    %v1895 = vmul.f32 %v1893, 8.0
    %v1896 = vmul.f32 %v1894, 8.0
    %v1897 = vsub.f32 %v1895, 0.5
    %v1898 = vsub.f32 %v1896, 0.5
    %v1899 = vsub.f32 %v1897, %v53
    %v1900 = vsub.f32 %v1898, %v53
    %v1901 = vand.u32 2147483647, %v1899
    %v1902 = vand.u32 2147483647, %v1900
    %v1903 = vsub.f32 1.0, %v1901
    %v1904 = vsub.f32 1.0, %v1902
    %v1905 = vmax.f32 %v1903, 0.0
    %v1906 = vmax.f32 %v1904, 0.0
    %v1907 = vpack.c.bf16 %v1906, %v1905
    %v1908 = vstv %s1884
    %v1909 = vmul.f32 %v1908, %v87
    %v1910 = vstv %s1886
    %v1911 = vadd.f32 %v1909, %v1910
    %v1912 = vadd.f32 %v1911, 1.0
    %v1913 = vmul.f32 %v1912, 8.0
    %v1914 = vsub.f32 %v1913, 0.5
    %v1915 = vsub.f32 %v1914, %v49
    %v1916 = vsub.f32 %v1914, %v50
    %v1917 = vand.u32 2147483647, %v1915
    %v1918 = vand.u32 2147483647, %v1916
    %v1919 = vsub.f32 1.0, %v1917
    %v1920 = vsub.f32 1.0, %v1918
    %v1921 = vmax.f32 %v1919, 0.0
    %v1922 = vmax.f32 %v1920, 0.0
    %v1923 = vpack.c.bf16 %v1922, %v1921
    %s1924 = scalar_lea.vmem [#allocation6], 336
    %v1925 = vld [vmem:[%s1924] sm:$0xff]
    %v1926 = vld [vmem:[%s1924 + $0x8] sm:$0xff]
    %v1927 = vld [vmem:[%s1924 + $0x10] sm:$0xff]
    %v1928 = vld [vmem:[%s1924 + $0x18] sm:$0xff]
    %v1929 = vld [vmem:[%s1924 + $0x20] sm:$0xff]
    %v1930 = vld [vmem:[%s1924 + $0x28] sm:$0xff]
    %v1931 = vpack.c.bf16 %v1926, %v1925
    %v1932 = vpack.c.bf16 %v1928, %v1927
    %v1933 = vpack.c.bf16 %v1930, %v1929
    %v1935 = vsel %vm113, %v1931, 0
    %v1938 = vsel %vm113, %v1932, 0
    %v1941 = vsel %vm113, %v1933, 0
    %1943 = vmatprep.subr.bf16.mxu0 0
    %1944 = vmatpush1.bf16.msra.mxu0 0
    %1945 = vmatprep.subr.bf16.mxu0 0
    %1946 = vmatpush1.bf16.msra.mxu0 0
    %1947 = vmatprep.subr.bf16.mxu0 0
    %1948 = vmatpush1.bf16.msra.mxu0 0
    %1949 = vmatprep.subr.bf16.mxu0 0
    %1950 = vmatpush1.bf16.msra.mxu0 0
    %1951 = vmatprep.subr.bf16.mxu0 0
    %1952 = vmatpush1.bf16.msra.mxu0 0
    %1953 = vmatprep.subr.bf16.mxu0 0
    %1954 = vmatpush1.bf16.msra.mxu0 0
    %1955 = vmatprep.subr.bf16.mxu0 0
    %1956 = vmatpush1.bf16.msra.mxu0 0
    %1957 = vmatprep.subr.bf16.mxu0 0
    %1958 = vmatpush1.bf16.msra.mxu0 %v1923
    %1959 = vmatprep.subr.bf16.mxu0 0
    %1960 = vmatpush2.bf16.msra.mxu0 0
    %1961 = vmatprep.subr.bf16.mxu0 0
    %1962 = vmatpush2.bf16.msra.mxu0 0
    %1963 = vmatprep.subr.bf16.mxu0 0
    %1964 = vmatpush2.bf16.msra.mxu0 0
    %1965 = vmatprep.subr.bf16.mxu0 0
    %1966 = vmatpush2.bf16.msra.mxu0 0
    %1967 = vmatprep.subr.bf16.mxu0 0
    %1968 = vmatpush2.bf16.msra.mxu0 0
    %1969 = vmatprep.subr.bf16.mxu0 0
    %1970 = vmatpush2.bf16.msra.mxu0 0
    %1971 = vmatprep.subr.bf16.mxu0 0
    %1972 = vmatpush2.bf16.msra.mxu0 0
    %1973 = vmatprep.subr.bf16.mxu0 0
    %1974 = vmatpush2.bf16.msra.mxu0 0
    %1975 = vmatprep.mubr.bf16.mxu0 0
    %1976 = vmatmul.mubr.bf16.gmra.mxu0 %v1935
    %v1977 = vpop.f32.mrf.mxu0
    %v1978 = vadd.f32 0.0, %v1977
    %v1979 = vpop.f32.mrf.mxu0
    %v1980 = vpop.f32.mrf.mxu0
    %v1981 = vadd.f32 0.0, %v1980
    %v1982 = vpop.f32.mrf.mxu0
    %1983 = vmatprep.mubr.bf16.mxu0 0
    %1984 = vmatmul.mubr.bf16.gmra.mxu0 %v1938
    %v1985 = vpop.f32.mrf.mxu0
    %v1986 = vadd.f32 0.0, %v1985
    %v1987 = vpop.f32.mrf.mxu0
    %v1988 = vpop.f32.mrf.mxu0
    %v1989 = vadd.f32 0.0, %v1988
    %v1990 = vpop.f32.mrf.mxu0
    %1991 = vmatprep.mubr.bf16.mxu0 0
    %1992 = vmatmul.mubr.bf16.gmra.mxu0 %v1941
    %v1993 = vpop.f32.mrf.mxu0
    %v1994 = vadd.f32 0.0, %v1993
    %v1995 = vpop.f32.mrf.mxu0
    %v1996 = vpop.f32.mrf.mxu0
    %v1997 = vadd.f32 0.0, %v1996
    %v1998 = vpop.f32.mrf.mxu0
    %1999 = vdwg.mxu0
    %v2000 = vpack.c.bf16 %v1981, %v1978
    %v2002 = vsel %vm113, %v1907, 0
    %2004 = vmatprep.subr.bf16.mxu0 0
    %2005 = vmatpush1.bf16.msra.mxu0 0
    %2006 = vmatprep.subr.bf16.mxu0 0
    %2007 = vmatpush1.bf16.msra.mxu0 0
    %2008 = vmatprep.subr.bf16.mxu0 0
    %2009 = vmatpush1.bf16.msra.mxu0 0
    %2010 = vmatprep.subr.bf16.mxu0 0
    %2011 = vmatpush1.bf16.msra.mxu0 0
    %2012 = vmatprep.subr.bf16.mxu0 0
    %2013 = vmatpush1.bf16.msra.mxu0 0
    %2014 = vmatprep.subr.bf16.mxu0 0
    %2015 = vmatpush1.bf16.msra.mxu0 0
    %2016 = vmatprep.subr.bf16.mxu0 0
    %2017 = vmatpush1.bf16.msra.mxu0 0
    %2018 = vmatprep.subr.bf16.mxu0 0
    %2019 = vmatpush1.bf16.msra.mxu0 %v2000
    %2020 = vmatprep.subr.bf16.mxu0 0
    %2021 = vmatpush2.bf16.msra.mxu0 0
    %2022 = vmatprep.subr.bf16.mxu0 0
    %2023 = vmatpush2.bf16.msra.mxu0 0
    %2024 = vmatprep.subr.bf16.mxu0 0
    %2025 = vmatpush2.bf16.msra.mxu0 0
    %2026 = vmatprep.subr.bf16.mxu0 0
    %2027 = vmatpush2.bf16.msra.mxu0 0
    %2028 = vmatprep.subr.bf16.mxu0 0
    %2029 = vmatpush2.bf16.msra.mxu0 0
    %2030 = vmatprep.subr.bf16.mxu0 0
    %2031 = vmatpush2.bf16.msra.mxu0 0
    %2032 = vmatprep.subr.bf16.mxu0 0
    %2033 = vmatpush2.bf16.msra.mxu0 0
    %2034 = vmatprep.subr.bf16.mxu0 0
    %2035 = vmatpush2.bf16.msra.mxu0 0
    %2036 = vmatprep.mubr.bf16.mxu0 0
    %2037 = vmatmul.mubr.bf16.gmra.mxu0 %v2002
    %v2038 = vpop.f32.mrf.mxu0
    %v2039 = vadd.f32 0.0, %v2038
    %v2040 = vpop.f32.mrf.mxu0
    %v2041 = vpop.f32.mrf.mxu0
    %v2042 = vadd.f32 0.0, %v2041
    %v2043 = vpop.f32.mrf.mxu0
    %2044 = vdwg.mxu0
    %s2045 = scalar_lea.vmem [#allocation7], 336
    %2046 = vst.msk [vmem:[%s2045] sm:$0xff] %vm113, %v2039
    %2047 = vst.msk [vmem:[%s2045 + $0x8] sm:$0xff] %vm113, %v2042
    %v2048 = vpack.c.bf16 %v1989, %v1986
    %2049 = vmatprep.subr.bf16.mxu0 0
    %2050 = vmatpush1.bf16.msra.mxu0 0
    %2051 = vmatprep.subr.bf16.mxu0 0
    %2052 = vmatpush1.bf16.msra.mxu0 0
    %2053 = vmatprep.subr.bf16.mxu0 0
    %2054 = vmatpush1.bf16.msra.mxu0 0
    %2055 = vmatprep.subr.bf16.mxu0 0
    %2056 = vmatpush1.bf16.msra.mxu0 0
    %2057 = vmatprep.subr.bf16.mxu0 0
    %2058 = vmatpush1.bf16.msra.mxu0 0
    %2059 = vmatprep.subr.bf16.mxu0 0
    %2060 = vmatpush1.bf16.msra.mxu0 0
    %2061 = vmatprep.subr.bf16.mxu0 0
    %2062 = vmatpush1.bf16.msra.mxu0 0
    %2063 = vmatprep.subr.bf16.mxu0 0
    %2064 = vmatpush1.bf16.msra.mxu0 %v2048
    %2065 = vmatprep.subr.bf16.mxu0 0
    %2066 = vmatpush2.bf16.msra.mxu0 0
    %2067 = vmatprep.subr.bf16.mxu0 0
    %2068 = vmatpush2.bf16.msra.mxu0 0
    %2069 = vmatprep.subr.bf16.mxu0 0
    %2070 = vmatpush2.bf16.msra.mxu0 0
    %2071 = vmatprep.subr.bf16.mxu0 0
    %2072 = vmatpush2.bf16.msra.mxu0 0
    %2073 = vmatprep.subr.bf16.mxu0 0
    %2074 = vmatpush2.bf16.msra.mxu0 0
    %2075 = vmatprep.subr.bf16.mxu0 0
    %2076 = vmatpush2.bf16.msra.mxu0 0
    %2077 = vmatprep.subr.bf16.mxu0 0
    %2078 = vmatpush2.bf16.msra.mxu0 0
    %2079 = vmatprep.subr.bf16.mxu0 0
    %2080 = vmatpush2.bf16.msra.mxu0 0
    %2081 = vmatprep.mubr.bf16.mxu0 0
    %2082 = vmatmul.mubr.bf16.gmra.mxu0 %v2002
    %v2083 = vpop.f32.mrf.mxu0
    %v2084 = vadd.f32 0.0, %v2083
    %v2085 = vpop.f32.mrf.mxu0
    %v2086 = vpop.f32.mrf.mxu0
    %v2087 = vadd.f32 0.0, %v2086
    %v2088 = vpop.f32.mrf.mxu0
    %2089 = vdwg.mxu0
    %s2090 = scalar_lea.vmem [#allocation7], 352
    %2091 = vst.msk [vmem:[%s2090] sm:$0xff] %vm113, %v2084
    %2092 = vst.msk [vmem:[%s2090 + $0x8] sm:$0xff] %vm113, %v2087
    %v2093 = vpack.c.bf16 %v1997, %v1994
    %2094 = vmatprep.subr.bf16.mxu0 0
    %2095 = vmatpush1.bf16.msra.mxu0 0
    %2096 = vmatprep.subr.bf16.mxu0 0
    %2097 = vmatpush1.bf16.msra.mxu0 0
    %2098 = vmatprep.subr.bf16.mxu0 0
    %2099 = vmatpush1.bf16.msra.mxu0 0
    %2100 = vmatprep.subr.bf16.mxu0 0
    %2101 = vmatpush1.bf16.msra.mxu0 0
    %2102 = vmatprep.subr.bf16.mxu0 0
    %2103 = vmatpush1.bf16.msra.mxu0 0
    %2104 = vmatprep.subr.bf16.mxu0 0
    %2105 = vmatpush1.bf16.msra.mxu0 0
    %2106 = vmatprep.subr.bf16.mxu0 0
    %2107 = vmatpush1.bf16.msra.mxu0 0
    %2108 = vmatprep.subr.bf16.mxu0 0
    %2109 = vmatpush1.bf16.msra.mxu0 %v2093
    %2110 = vmatprep.subr.bf16.mxu0 0
    %2111 = vmatpush2.bf16.msra.mxu0 0
    %2112 = vmatprep.subr.bf16.mxu0 0
    %2113 = vmatpush2.bf16.msra.mxu0 0
    %2114 = vmatprep.subr.bf16.mxu0 0
    %2115 = vmatpush2.bf16.msra.mxu0 0
    %2116 = vmatprep.subr.bf16.mxu0 0
    %2117 = vmatpush2.bf16.msra.mxu0 0
    %2118 = vmatprep.subr.bf16.mxu0 0
    %2119 = vmatpush2.bf16.msra.mxu0 0
    %2120 = vmatprep.subr.bf16.mxu0 0
    %2121 = vmatpush2.bf16.msra.mxu0 0
    %2122 = vmatprep.subr.bf16.mxu0 0
    %2123 = vmatpush2.bf16.msra.mxu0 0
    %2124 = vmatprep.subr.bf16.mxu0 0
    %2125 = vmatpush2.bf16.msra.mxu0 0
    %2126 = vmatprep.mubr.bf16.mxu0 0
    %2127 = vmatmul.mubr.bf16.gmra.mxu0 %v2002
    %v2128 = vpop.f32.mrf.mxu0
    %v2129 = vadd.f32 0.0, %v2128
    %v2130 = vpop.f32.mrf.mxu0
    %v2131 = vpop.f32.mrf.mxu0
    %v2132 = vadd.f32 0.0, %v2131
    %v2133 = vpop.f32.mrf.mxu0
    %2134 = vdwg.mxu0
    %s2135 = scalar_lea.vmem [#allocation7], 368
    %2136 = vst.msk [vmem:[%s2135] sm:$0xff] %vm113, %v2129
    %2137 = vst.msk [vmem:[%s2135 + $0x8] sm:$0xff] %vm113, %v2132
    // Predicated region
    $region18: #{tpu_custom_call.1} parent=1 // pred_check
      _
    $region19: #{tpu_custom_call.1} parent=1 // pred_check_branch
      %2139 = sbr.rel (0) target = $region21
    $region20: #{tpu_custom_call.1} parent=1 // pred_region
      %s2141 = ssub.s32 6144, 6144
      %2142 = vsyncadd [#allocation4], %s2141
      %s2143 = sshll.u32 [#allocation7], 4
      %s2144 = int_to_ptr.vmem [resolvable:$true] %s2143
      %2149 = dma.vmem_to_hbm [thread:$0]  %s2144, 6144, %s2, [#allocation4], 128, 128, 8
    $region21: #{tpu_custom_call.1} parent=1 // pred_fallthru
      _
    // Predicated region
    $region22: #{tpu_custom_call.1} parent=1 // pred_check
      _
    $region23: #{tpu_custom_call.1} parent=1 // pred_check_branch
      %2151 = sbr.rel (0) target = $region25
    $region24: #{tpu_custom_call.1} parent=1 // pred_region
      %2152 = dma.done [#allocation4], 6144
    $region25: #{tpu_custom_call.1} parent=1 // pred_fallthru
      _
    %2153 = vsyncpa [#allocation3], 1
    %2154 = vsyncpa [#allocation4], 1
    %2155 = vsyncpa [#allocation5], 1

</llo_original>
